<compile_context>
chip_gen: v7x
topology: tpu7x:2x2x1
jax: 0.10.0
libtpu: 0.0.40
codegen_flags: <defaults>
</compile_context>

<pallas_src>
import functools

import jax
import jax.numpy as jnp
from jax.experimental import pallas as pl
from jax.experimental.pallas import tpu as pltpu


def _round_up(x, m):
    return ((x + m - 1) // m) * m


# ----------------------------- Pallas kernel ------------------------------ #
def _fusion_kernel(img_ref, pt_ref, w_img_ref, w_pt_ref, w_fI_ref, aux_ref,
                   out_ref, *, pc, rc, outplanes, pc_p, rc_p):
    """One (batch, point-tile) step.  NCL layout: points live on the lane axis.

    img_ref: (ic, tn) bf16            pt_ref: (pc, tn) bf16
    w_img_ref: (pc_p + 2*rc_p, ic) bf16   rows = [conv1 | fc1 | conv2a] (8-aligned segs)
    w_pt_ref:  (rc_p + outplanes, pc) bf16 rows = [fc2 | fusion-conv point half]
    w_fI_ref:  (outplanes, pc) bf16        fusion-conv image half
    aux_ref:   (R, 8) f32 packed: col0=b_img, col1=b_pt, col2=fc3 w, col3=conv2b w,
               col4[0]=fc3 b, col5[0]=conv2b b
    """
    rows_img = pc_p + 2 * rc_p
    rows_pt = rc_p + outplanes

    img = img_ref[...]                                   # bf16 (ic, tn)
    pt = pt_ref[...]                                     # bf16 (pc, tn)
    aux = aux_ref[...]                                   # f32  (R, 8)

    b_img = aux[0:rows_img, 0:1]
    b_pt = aux[0:rows_pt, 1:2]
    w3 = aux[0:rc, 2:3]
    w2b = aux[0:rc, 3:4]
    bfc3 = aux[0:1, 4:5]
    bc2b = aux[0:1, 5:6]

    # Fused shared-LHS matmuls on the MXU (bf16 operands, f32 accumulation).
    y_img = jnp.dot(w_img_ref[...], img, preferred_element_type=jnp.float32) + b_img
    y_pt = jnp.dot(w_pt_ref[...], pt, preferred_element_type=jnp.float32) + b_pt

    h = jnp.maximum(y_img[0:pc, :], 0.0)                           # ReLU(BN(conv1(img)))
    ri = y_img[pc_p:pc_p + rc, :]                                  # fc1(img) + b
    g = jnp.maximum(y_img[pc_p + rc_p:pc_p + rc_p + rc, :], 0.0)   # ReLU(BN(conv2a(img)))

    rp = y_pt[0:rc, :]                                             # fc2(pt) + b
    fuse_p = y_pt[rc_p:rc_p + outplanes, :]                        # fusion-conv point half

    # Width-1 projections on VPU/XLU (broadcast mul + sublane reduce), all f32.
    t = jnp.tanh(ri + rp)
    att = jax.nn.sigmoid(jnp.sum(t * w3, axis=0, keepdims=True) + bfc3)   # (1, tn)
    G = jax.nn.sigmoid(jnp.sum(g * w2b, axis=0, keepdims=True) + bc2b)    # (1, tn)

    img_new = h * (att + G) * 0.5                                  # (pc, tn)

    fused = fuse_p + jnp.dot(w_fI_ref[...], img_new.astype(jnp.bfloat16),
                             preferred_element_type=jnp.float32)
    out_ref[...] = jnp.maximum(fused, 0.0).astype(out_ref.dtype)   # (outplanes, tn)


# ------------------------------- wrapper ---------------------------------- #
_MAX_TN = 4096                      # lane-axis point-tile cap
_VMEM_BUDGET = 20 * 1024 * 1024     # per-step VMEM budget used to derive the tile


def _fold_bn(w, b, gamma, beta, rmean, rvar, eps=1e-5):
    """Fold eval-mode BatchNorm1d into a preceding 1x1 conv (w: (Cin, Cout))."""
    scale = gamma / jnp.sqrt(rvar + eps)
    return w * scale[None, :], (b - rmean) * scale + beta


def _pad_rows(x, rows):
    if x.shape[0] == rows:
        return x
    pad = [(0, rows - x.shape[0])] + [(0, 0)] * (x.ndim - 1)
    return jnp.pad(x, pad)


def _choose_tn(N, B, per_lane_bytes):
    if N < 128:
        return N                    # full-extent lane block (equals the array dim)
    cap = max(128, (_VMEM_BUDGET // per_lane_bytes) // 128 * 128)
    tn = min(_MAX_TN, cap, (N // 128) * 128)
    # v7x megacore: with B == 1 keep >= 2 grid steps so both TensorCores get work.
    if B == 1 and N > 256:
        tn = min(tn, _round_up(pl.cdiv(N, 2), 128))
    return tn


def new_atten_fusion_conv(point_features, img_features, params,
                          out_dtype=jnp.bfloat16):
    """point_features: (B, pc, N), img_features: (B, ic, N) — NCL, like PyTorch.

    For best performance feed bf16 inputs (persisted upstream); other dtypes are
    cast here (one extra HBM round trip).  Output is bf16 by default.
    """
    B, pc, N = point_features.shape
    ic = img_features.shape[1]
    rc = params["wfc1"].shape[1]
    outplanes = params["wfuse"].shape[1]

    f32, bf16 = jnp.float32, jnp.bfloat16
    if img_features.dtype != bf16:
        img_features = img_features.astype(bf16)
    if point_features.dtype != bf16:
        point_features = point_features.astype(bf16)

    # ---- fold eval-mode BatchNorms into the 1x1 convs (plain-JAX glue) ----
    # TODO(synk): training-mode BatchNorm (batch statistics + running-stat update)
    # is not implemented; eval-mode BN is folded into the conv weights.
    wc1, bc1 = _fold_bn(params["wc1"], params["bc1"],
                        params["bn1_g"], params["bn1_b"],
                        params["bn1_m"], params["bn1_v"])
    wc2a, bc2a = _fold_bn(params["wc2a"], params["bc2a"],
                          params["bn2_g"], params["bn2_b"],
                          params["bn2_m"], params["bn2_v"])
    wfuse, bfuse = _fold_bn(params["wfuse"], params["bfuse"],
                            params["bnf_g"], params["bnf_b"],
                            params["bnf_m"], params["bnf_v"])

    # ---- pack shared-LHS matmuls into bf16 slabs with 8-row-aligned segments ----
    pc_p, rc_p = _round_up(pc, 8), _round_up(rc, 8)
    rows_img = pc_p + 2 * rc_p
    rows_pt = rc_p + outplanes

    w_img = jnp.concatenate([_pad_rows(wc1.T, pc_p),
                             _pad_rows(params["wfc1"].T, rc_p),
                             _pad_rows(wc2a.T, rc_p)], axis=0).astype(bf16)   # (rows_img, ic)
    w_pt = jnp.concatenate([_pad_rows(params["wfc2"].T, rc_p),
                            wfuse[:pc, :].T], axis=0).astype(bf16)            # (rows_pt, pc)
    w_fI = wfuse[pc:, :].T.astype(bf16)                                       # (outplanes, pc)

    b_img = jnp.concatenate([_pad_rows(bc1, pc_p),
                             _pad_rows(params["bfc1"], rc_p),
                             _pad_rows(bc2a, rc_p)]).astype(f32)              # (rows_img,)
    b_pt = jnp.concatenate([_pad_rows(params["bfc2"], rc_p), bfuse]).astype(f32)

    # One packed f32 side-array: biases, fc3 / conv2b weights and their scalars.
    R = _round_up(max(rows_img, rows_pt, rc, 1), 8)
    aux = jnp.zeros((R, 8), f32)
    aux = aux.at[0:rows_img, 0].set(b_img)
    aux = aux.at[0:rows_pt, 1].set(b_pt)
    aux = aux.at[0:rc, 2].set(params["wfc3"][:, 0].astype(f32))
    aux = aux.at[0:rc, 3].set(params["wc2b"][:, 0].astype(f32))
    aux = aux.at[0, 4].set(params["bfc3"][0].astype(f32))
    aux = aux.at[0, 5].set(params["bc2b"][0].astype(f32))

    weights = [w_img, w_pt, w_fI, aux]

    # ---- lane-axis point tiling; ragged N handled by Pallas partial tiles ----
    out_itemsize = jnp.dtype(out_dtype).itemsize
    per_lane = (2 * (2 * ic + 2 * pc + out_itemsize * outplanes)          # dbl-buffered I/O
                + 4 * (rows_img + rows_pt + 3 * pc + 3 * rc + 2 * outplanes))  # f32 temps
    tn = _choose_tn(N, B, per_lane)
    grid = (B, pl.cdiv(N, tn))

    kernel = functools.partial(_fusion_kernel, pc=pc, rc=rc, outplanes=outplanes,
                               pc_p=pc_p, rc_p=rc_p)

    in_specs = [
        pl.BlockSpec((None, ic, tn), lambda b, j: (b, 0, j)),
        pl.BlockSpec((None, pc, tn), lambda b, j: (b, 0, j)),
    ] + [pl.BlockSpec(w.shape, lambda b, j: (0, 0)) for w in weights]

    flops = 2 * B * N * (ic * rows_img + pc * rows_pt + pc * outplanes + 2 * rc)
    weight_bytes = int(sum(int(w.size) * w.dtype.itemsize for w in weights))
    cost = pl.CostEstimate(
        flops=flops,
        transcendentals=B * N * (rc + 2),
        bytes_accessed=2 * B * N * (ic + pc) + out_itemsize * B * N * outplanes
                       + weight_bytes,
    )

    out = pl.pallas_call(
        kernel,
        out_shape=jax.ShapeDtypeStruct((B, outplanes, N), out_dtype),
        grid_spec=pltpu.PrefetchScalarGridSpec(
            num_scalar_prefetch=0,
            grid=grid,
            in_specs=in_specs,
            out_specs=pl.BlockSpec((None, outplanes, tn), lambda b, j: (b, 0, j)),
        ),
        compiler_params=pltpu.CompilerParams(
            dimension_semantics=("parallel", "parallel"),
            vmem_limit_bytes=32 * 1024 * 1024,
        ),
        cost_estimate=cost,
    )(img_features, point_features, *weights)

    return out


# --------------------------- reference (plain JAX) ------------------------- #
def _reference(point_features, img_features, params):
    B, pc, N = point_features.shape
    ic = img_features.shape[1]
    M = B * N
    img_f = jnp.transpose(img_features, (0, 2, 1)).reshape(M, ic)
    pt_f = jnp.transpose(point_features, (0, 2, 1)).reshape(M, pc)

    wc1, bc1 = _fold_bn(params["wc1"], params["bc1"], params["bn1_g"],
                        params["bn1_b"], params["bn1_m"], params["bn1_v"])
    wc2a, bc2a = _fold_bn(params["wc2a"], params["bc2a"], params["bn2_g"],
                          params["bn2_b"], params["bn2_m"], params["bn2_v"])
    wfuse, bfuse = _fold_bn(params["wfuse"], params["bfuse"], params["bnf_g"],
                            params["bnf_b"], params["bnf_m"], params["bnf_v"])

    ri = img_f @ params["wfc1"] + params["bfc1"]
    rp = pt_f @ params["wfc2"] + params["bfc2"]
    att = jax.nn.sigmoid(jnp.tanh(ri + rp) @ params["wfc3"] + params["bfc3"])
    h = jnp.maximum(img_f @ wc1 + bc1, 0.0)
    g = jnp.maximum(img_f @ wc2a + bc2a, 0.0)
    G = jax.nn.sigmoid(g @ params["wc2b"] + params["bc2b"])
    img_new = h * (att + G) * 0.5
    fused = jnp.concatenate([pt_f, img_new], axis=1) @ wfuse + bfuse
    out = jnp.maximum(fused, 0.0)
    outplanes = wfuse.shape[1]
    return jnp.transpose(out.reshape(B, N, outplanes), (0, 2, 1))


# --------------------------------- main ------------------------------------ #
def _make_params(key, ic, pc, outplanes):
    rc = pc // 4
    keys = jax.random.split(key, 32)
    k = iter(keys)

    def w(shape, scale=0.1):
        return (scale * jax.random.normal(next(k), shape)).astype(jnp.float32)

    return dict(
        # IA_Layer fc1 / fc2 / fc3  (stored as (in, out))
        wfc1=w((ic, rc)), bfc1=w((rc,)),
        wfc2=w((pc, rc)), bfc2=w((rc,)),
        wfc3=w((rc, 1)), bfc3=w((1,)),
        # IA_Layer conv1 (ic->pc) + BN(pc)
        wc1=w((ic, pc)), bc1=w((pc,)),
        bn1_g=1.0 + w((pc,)), bn1_b=w((pc,)),
        bn1_m=w((pc,)), bn1_v=1.0 + jnp.abs(w((pc,))),
        # IA_Layer conv2: (ic->rc)+BN(rc)+ReLU, then (rc->1)
        wc2a=w((ic, rc)), bc2a=w((rc,)),
        bn2_g=1.0 + w((rc,)), bn2_b=w((rc,)),
        bn2_m=w((rc,)), bn2_v=1.0 + jnp.abs(w((rc,))),
        wc2b=w((rc, 1)), bc2b=w((1,)),
        # fusion conv (2*pc -> outplanes) + BN(outplanes)
        wfuse=w((2 * pc, outplanes)), bfuse=w((outplanes,)),
        bnf_g=1.0 + w((outplanes,)), bnf_b=w((outplanes,)),
        bnf_m=w((outplanes,)), bnf_v=1.0 + jnp.abs(w((outplanes,))),
    )


if __name__ == "__main__":
    key = jax.random.PRNGKey(0)
    B, ic, pc, outplanes, N = 2, 16, 32, 32, 2048   # rc = pc // 4 = 8

    kp, k1, k2, k3, k4, k5, k6 = jax.random.split(key, 7)
    params = _make_params(kp, ic, pc, outplanes)
    point_features = jax.random.normal(k1, (B, pc, N), dtype=jnp.float32)
    img_features = jax.random.normal(k2, (B, ic, N), dtype=jnp.float32)

    # Inputs "persisted upstream" as bf16 (halves the dominant HBM read traffic).
    out = new_atten_fusion_conv(point_features.astype(jnp.bfloat16),
                                img_features.astype(jnp.bfloat16), params)
    out = jax.block_until_ready(out)
    ref = _reference(point_features, img_features, params)
    assert out.shape == (B, outplanes, N), out.shape
    # bf16 matmul operands / I/O (f32 accumulation) -> relaxed tolerance vs f32 ref.
    err = float(jnp.max(jnp.abs(out.astype(jnp.float32) - ref)))
    assert jnp.allclose(out.astype(jnp.float32), ref, atol=3e-2, rtol=3e-2), err

    # Ragged N (not a multiple of 128): Pallas partial tiles, no HBM pad round trip.
    N2 = 200
    pt2 = jax.random.normal(k3, (B, pc, N2), dtype=jnp.float32)
    im2 = jax.random.normal(k4, (B, ic, N2), dtype=jnp.float32)
    out2 = jax.block_until_ready(
        new_atten_fusion_conv(pt2.astype(jnp.bfloat16), im2.astype(jnp.bfloat16), params))
    ref2 = _reference(pt2, im2, params)
    assert out2.shape == (B, outplanes, N2), out2.shape
    err2 = float(jnp.max(jnp.abs(out2.astype(jnp.float32) - ref2)))
    assert jnp.allclose(out2.astype(jnp.float32), ref2, atol=3e-2, rtol=3e-2), err2

    # B == 1 path: tile choice keeps >= 2 grid steps (v7x megacore split).
    N3 = 512
    pt3 = jax.random.normal(k5, (1, pc, N3), dtype=jnp.float32)
    im3 = jax.random.normal(k6, (1, ic, N3), dtype=jnp.float32)
    out3 = jax.block_until_ready(
        new_atten_fusion_conv(pt3.astype(jnp.bfloat16), im3.astype(jnp.bfloat16), params))
    ref3 = _reference(pt3, im3, params)
    assert out3.shape == (1, outplanes, N3), out3.shape
    err3 = float(jnp.max(jnp.abs(out3.astype(jnp.float32) - ref3)))
    assert jnp.allclose(out3.astype(jnp.float32), ref3, atol=3e-2, rtol=3e-2), err3

    print("KERNEL_OK")
</pallas_src>

<mosaic_0001>
module attributes {stable_mosaic.version = 11 : i64} {
  func.func @_fusion_kernel(%arg0: i32, %arg1: i32, %arg2: memref<1x16x2048xbf16, #tpu.memory_space<vmem>>, %arg3: memref<1x32x2048xbf16, #tpu.memory_space<vmem>>, %arg4: memref<48x16xbf16, #tpu.memory_space<vmem>>, %arg5: memref<40x32xbf16, #tpu.memory_space<vmem>>, %arg6: memref<32x32xbf16, #tpu.memory_space<vmem>>, %arg7: memref<48x8xf32, #tpu.memory_space<vmem>>, %arg8: memref<1x32x2048xbf16, #tpu.memory_space<vmem>>) attributes {dimension_semantics = [#tpu.dimension_semantics<parallel>, #tpu.dimension_semantics<parallel>], iteration_bounds = array<i64: 2, 1>, scalar_prefetch = 0 : i64, scratch_operands = 0 : i64, tpu.core_type = #tpu.core_type<tc>, window_params = [{transform_indices = @transform_0, window_bounds = array<i64: 1, 16, 2048>}, {transform_indices = @transform_1, window_bounds = array<i64: 1, 32, 2048>}, {pipeline_mode = #tpu.pipeline_mode<synchronous>, transform_indices = @transform_2, window_bounds = array<i64: 48, 16>}, {pipeline_mode = #tpu.pipeline_mode<synchronous>, transform_indices = @transform_3, window_bounds = array<i64: 40, 32>}, {pipeline_mode = #tpu.pipeline_mode<synchronous>, transform_indices = @transform_4, window_bounds = array<i64: 32, 32>}, {pipeline_mode = #tpu.pipeline_mode<synchronous>, transform_indices = @transform_5, window_bounds = array<i64: 48, 8>}, {transform_indices = @transform_6, window_bounds = array<i64: 1, 32, 2048>}]} {
    %c0 = arith.constant 0 : index
    %c0_0 = arith.constant 0 : index
    %c0_1 = arith.constant 0 : index
    %0 = vector.load %arg2[%c0, %c0_0, %c0_1] : memref<1x16x2048xbf16, #tpu.memory_space<vmem>>, vector<1x16x2048xbf16>
    %1 = vector.shape_cast %0 : vector<1x16x2048xbf16> to vector<16x2048xbf16>
    %c0_2 = arith.constant 0 : index
    %c0_3 = arith.constant 0 : index
    %c0_4 = arith.constant 0 : index
    %2 = vector.load %arg3[%c0_2, %c0_3, %c0_4] : memref<1x32x2048xbf16, #tpu.memory_space<vmem>>, vector<1x32x2048xbf16>
    %3 = vector.shape_cast %2 : vector<1x32x2048xbf16> to vector<32x2048xbf16>
    %c0_5 = arith.constant 0 : index
    %c0_6 = arith.constant 0 : index
    %4 = vector.load %arg7[%c0_5, %c0_6] : memref<48x8xf32, #tpu.memory_space<vmem>>, vector<48x8xf32>
    %5 = vector.extract_strided_slice %4 {offsets = [0, 0], sizes = [48, 1], strides = [1, 1]} : vector<48x8xf32> to vector<48x1xf32>
    %6 = vector.extract_strided_slice %4 {offsets = [0, 1], sizes = [40, 1], strides = [1, 1]} : vector<48x8xf32> to vector<40x1xf32>
    %7 = vector.extract_strided_slice %4 {offsets = [0, 2], sizes = [8, 1], strides = [1, 1]} : vector<48x8xf32> to vector<8x1xf32>
    %8 = vector.extract_strided_slice %4 {offsets = [0, 3], sizes = [8, 1], strides = [1, 1]} : vector<48x8xf32> to vector<8x1xf32>
    %9 = vector.extract_strided_slice %4 {offsets = [0, 4], sizes = [1, 1], strides = [1, 1]} : vector<48x8xf32> to vector<1x1xf32>
    %10 = vector.extract_strided_slice %4 {offsets = [0, 5], sizes = [1, 1], strides = [1, 1]} : vector<48x8xf32> to vector<1x1xf32>
    %c0_7 = arith.constant 0 : index
    %c0_8 = arith.constant 0 : index
    %11 = vector.load %arg4[%c0_7, %c0_8] : memref<48x16xbf16, #tpu.memory_space<vmem>>, vector<48x16xbf16>
    %cst = arith.constant dense<0.000000e+00> : vector<48x2048xf32>
    %12 = tpu.matmul %11, %1, %cst {dimension_numbers = #tpu.dot_dimension_numbers<[1], [0], [0], [1], [0, 0, 1, 1], [], []>} : vector<48x16xbf16>, vector<16x2048xbf16>, vector<48x2048xf32> -> vector<48x2048xf32>
    %13 = vector.broadcast %5 : vector<48x1xf32> to vector<48x2048xf32>
    %14 = arith.addf %12, %13 : vector<48x2048xf32>
    %c0_9 = arith.constant 0 : index
    %c0_10 = arith.constant 0 : index
    %15 = vector.load %arg5[%c0_9, %c0_10] : memref<40x32xbf16, #tpu.memory_space<vmem>>, vector<40x32xbf16>
    %cst_11 = arith.constant dense<0.000000e+00> : vector<40x2048xf32>
    %16 = tpu.matmul %15, %3, %cst_11 {dimension_numbers = #tpu.dot_dimension_numbers<[1], [0], [0], [1], [0, 0, 1, 1], [], []>} : vector<40x32xbf16>, vector<32x2048xbf16>, vector<40x2048xf32> -> vector<40x2048xf32>
    %17 = vector.broadcast %6 : vector<40x1xf32> to vector<40x2048xf32>
    %18 = arith.addf %16, %17 : vector<40x2048xf32>
    %19 = vector.extract_strided_slice %14 {offsets = [0, 0], sizes = [32, 2048], strides = [1, 1]} : vector<48x2048xf32> to vector<32x2048xf32>
    %cst_12 = arith.constant 0.000000e+00 : f32
    %20 = vector.broadcast %cst_12 : f32 to vector<32x2048xf32>
    %21 = arith.maximumf %19, %20 : vector<32x2048xf32>
    %22 = vector.extract_strided_slice %14 {offsets = [32, 0], sizes = [8, 2048], strides = [1, 1]} : vector<48x2048xf32> to vector<8x2048xf32>
    %23 = vector.extract_strided_slice %14 {offsets = [40, 0], sizes = [8, 2048], strides = [1, 1]} : vector<48x2048xf32> to vector<8x2048xf32>
    %cst_13 = arith.constant 0.000000e+00 : f32
    %24 = vector.broadcast %cst_13 : f32 to vector<8x2048xf32>
    %25 = arith.maximumf %23, %24 : vector<8x2048xf32>
    %26 = vector.extract_strided_slice %18 {offsets = [0, 0], sizes = [8, 2048], strides = [1, 1]} : vector<40x2048xf32> to vector<8x2048xf32>
    %27 = vector.extract_strided_slice %18 {offsets = [8, 0], sizes = [32, 2048], strides = [1, 1]} : vector<40x2048xf32> to vector<32x2048xf32>
    %28 = arith.addf %22, %26 : vector<8x2048xf32>
    %29 = math.tanh %28 : vector<8x2048xf32>
    %30 = vector.broadcast %7 : vector<8x1xf32> to vector<8x2048xf32>
    %31 = arith.mulf %29, %30 : vector<8x2048xf32>
    %cst_14 = arith.constant dense<0.000000e+00> : vector<2048xf32>
    %32 = vector.multi_reduction <add>, %31, %cst_14 [0] : vector<8x2048xf32> to vector<2048xf32>
    %33 = vector.shape_cast %32 : vector<2048xf32> to vector<1x2048xf32>
    %34 = vector.broadcast %9 : vector<1x1xf32> to vector<1x2048xf32>
    %35 = arith.addf %33, %34 : vector<1x2048xf32>
    %36 = arith.negf %35 : vector<1x2048xf32>
    %37 = math.exp %36 : vector<1x2048xf32>
    %cst_15 = arith.constant 1.000000e+00 : f32
    %38 = vector.broadcast %cst_15 : f32 to vector<1x2048xf32>
    %39 = arith.addf %38, %37 : vector<1x2048xf32>
    %40 = arith.divf %38, %39 : vector<1x2048xf32>
    %41 = vector.broadcast %8 : vector<8x1xf32> to vector<8x2048xf32>
    %42 = arith.mulf %25, %41 : vector<8x2048xf32>
    %cst_16 = arith.constant dense<0.000000e+00> : vector<2048xf32>
    %43 = vector.multi_reduction <add>, %42, %cst_16 [0] : vector<8x2048xf32> to vector<2048xf32>
    %44 = vector.shape_cast %43 : vector<2048xf32> to vector<1x2048xf32>
    %45 = vector.broadcast %10 : vector<1x1xf32> to vector<1x2048xf32>
    %46 = arith.addf %44, %45 : vector<1x2048xf32>
    %47 = arith.negf %46 : vector<1x2048xf32>
    %48 = math.exp %47 : vector<1x2048xf32>
    %cst_17 = arith.constant 1.000000e+00 : f32
    %49 = vector.broadcast %cst_17 : f32 to vector<1x2048xf32>
    %50 = arith.addf %49, %48 : vector<1x2048xf32>
    %51 = arith.divf %49, %50 : vector<1x2048xf32>
    %52 = arith.addf %40, %51 : vector<1x2048xf32>
    %53 = vector.broadcast %52 : vector<1x2048xf32> to vector<32x2048xf32>
    %54 = arith.mulf %21, %53 : vector<32x2048xf32>
    %cst_18 = arith.constant 5.000000e-01 : f32
    %55 = vector.broadcast %cst_18 : f32 to vector<32x2048xf32>
    %56 = arith.mulf %54, %55 : vector<32x2048xf32>
    %c0_19 = arith.constant 0 : index
    %c0_20 = arith.constant 0 : index
    %57 = vector.load %arg6[%c0_19, %c0_20] : memref<32x32xbf16, #tpu.memory_space<vmem>>, vector<32x32xbf16>
    %58 = arith.truncf %56 : vector<32x2048xf32> to vector<32x2048xbf16>
    %cst_21 = arith.constant dense<0.000000e+00> : vector<32x2048xf32>
    %59 = tpu.matmul %57, %58, %cst_21 {dimension_numbers = #tpu.dot_dimension_numbers<[1], [0], [0], [1], [0, 0, 1, 1], [], []>} : vector<32x32xbf16>, vector<32x2048xbf16>, vector<32x2048xf32> -> vector<32x2048xf32>
    %60 = arith.addf %27, %59 : vector<32x2048xf32>
    %cst_22 = arith.constant 0.000000e+00 : f32
    %61 = vector.broadcast %cst_22 : f32 to vector<32x2048xf32>
    %62 = arith.maximumf %60, %61 : vector<32x2048xf32>
    %63 = arith.truncf %62 : vector<32x2048xf32> to vector<32x2048xbf16>
    %c0_23 = arith.constant 0 : index
    %c0_24 = arith.constant 0 : index
    %c0_25 = arith.constant 0 : index
    %64 = vector.load %arg8[%c0_23, %c0_24, %c0_25] : memref<1x32x2048xbf16, #tpu.memory_space<vmem>>, vector<1x32x2048xbf16>
    %65 = vector.shape_cast %64 : vector<1x32x2048xbf16> to vector<32x2048xbf16>
    %66 = vector.shape_cast %63 : vector<32x2048xbf16> to vector<1x32x2048xbf16>
    tpu.vector_store %arg8[%c0_23, %c0_24, %c0_25], %66 {strides = array<i32>} : memref<1x32x2048xbf16, #tpu.memory_space<vmem>>, vector<1x32x2048xbf16>,
    return
  }
  func.func @transform_0(%arg0: i32, %arg1: i32) -> (i32, i32, i32) {
    %c0_i32 = arith.constant 0 : i32
    %c0_i32_0 = arith.constant 0 : i32
    return %arg0, %c0_i32, %arg1 : i32, i32, i32
  }
  func.func @transform_1(%arg0: i32, %arg1: i32) -> (i32, i32, i32) {
    %c0_i32 = arith.constant 0 : i32
    %c0_i32_0 = arith.constant 0 : i32
    return %arg0, %c0_i32, %arg1 : i32, i32, i32
  }
  func.func @transform_2(%arg0: i32, %arg1: i32) -> (i32, i32) {
    %c0_i32 = arith.constant 0 : i32
    %c0_i32_0 = arith.constant 0 : i32
    %c0_i32_1 = arith.constant 0 : i32
    return %c0_i32, %c0_i32_0 : i32, i32
  }
  func.func @transform_3(%arg0: i32, %arg1: i32) -> (i32, i32) {
    %c0_i32 = arith.constant 0 : i32
    %c0_i32_0 = arith.constant 0 : i32
    %c0_i32_1 = arith.constant 0 : i32
    return %c0_i32, %c0_i32_0 : i32, i32
  }
  func.func @transform_4(%arg0: i32, %arg1: i32) -> (i32, i32) {
    %c0_i32 = arith.constant 0 : i32
    %c0_i32_0 = arith.constant 0 : i32
    %c0_i32_1 = arith.constant 0 : i32
    return %c0_i32, %c0_i32_0 : i32, i32
  }
  func.func @transform_5(%arg0: i32, %arg1: i32) -> (i32, i32) {
    %c0_i32 = arith.constant 0 : i32
    %c0_i32_0 = arith.constant 0 : i32
    %c0_i32_1 = arith.constant 0 : i32
    return %c0_i32, %c0_i32_0 : i32, i32
  }
  func.func @transform_6(%arg0: i32, %arg1: i32) -> (i32, i32, i32) {
    %c0_i32 = arith.constant 0 : i32
    %c0_i32_0 = arith.constant 0 : i32
    return %arg0, %c0_i32, %arg1 : i32, i32, i32
  }
}

</mosaic_0001>

<llo_original>
// kernel: tpu_custom_call.1
$region0: #{tpu_custom_call.1}
  #allocation0 [shape = 'u32[]', space=smem, size = 0x4, offset = 0x4, fixed_abs, tag = 'smem constant byte address 0x4 - core index']
  #allocation1 [shape = 'u32[144,128]{1,0:T(1,128)}', space=vmem, size = 0x12000, scoped, tag = 'internal scratch']
  %s0 = inlined_call_operand.hbm [shape: bf16[2,16,2048], index: 0, kind: input, shape index: {}]
  %s1 = inlined_call_operand.hbm [shape: bf16[2,32,2048], index: 1, kind: input, shape index: {}]
  %s2 = inlined_call_operand.vmem [shape: bf16[48,16], index: 2, kind: input, shape index: {}]
  %s3 = inlined_call_operand.vmem [shape: bf16[40,32], index: 3, kind: input, shape index: {}]
  %s4 = inlined_call_operand.vmem [shape: bf16[32,32], index: 4, kind: input, shape index: {}]
  %s5 = inlined_call_operand.vmem [shape: f32[48,8], index: 5, kind: input, shape index: {}]
  %s6 = inlined_call_operand.hbm [shape: bf16[2,32,2048], index: 6, kind: output, shape index: {}]
  %s7 = sld [smem:[#allocation0]]
  $region65: #{tpu_custom_call.1} parent=0
    _
  %s9 = ssub.s32 1, %s7
  %s10 = scalar_select 0, %s9, %s7
  $region1: #{tpu_custom_call.1} parent=0
    #allocation2 [shape = 'u8[131072]{0}', space=vmem, size = 0x20000, scoped, tag = 'input window, operand 0']
    #allocation3 [shape = 's32[2]{0}', space=sflag, size = 0x8, scoped, tag = 'scoped memory for tpu_custom_call.1']
    #allocation4 [shape = 's32[2]{0}', space=sflag, size = 0x8, scoped, tag = 'scoped memory for tpu_custom_call.1']
    #allocation5 [shape = 'u8[262144]{0}', space=vmem, size = 0x40000, scoped, tag = 'input window, operand 1']
    #allocation6 [shape = 's32[2]{0}', space=sflag, size = 0x8, scoped, tag = 'scoped memory for tpu_custom_call.1']
    #allocation7 [shape = 'u8[262144]{0}', space=vmem, size = 0x40000, scoped, tag = 'output window, operand 0']
    %11 = vsyncpa [#allocation3], 0
    %s12 = scalar_lea.sflag [#allocation3], 1
    %13 = vsyncpa %s12, 0
    %14 = vsyncpa [#allocation6], 0
    %s15 = scalar_lea.sflag [#allocation6], 1
    %16 = vsyncpa %s15, 0
    %17 = vsyncpa [#allocation4], 0
    %s18 = scalar_lea.sflag [#allocation4], 1
    %19 = vsyncpa %s18, 0
    loop: start=0, step=1, limit=4
    $region2: #{tpu_custom_call.1} parent=1 // loop_pre_header
      _
    $region3: #{tpu_custom_call.1} parent=1 // loop_header
      %s21 = sphi 0, %s25
      %p22 = scmp.ge.s32.totalorder %s21, 4
      %s28 = sphi 0, %s40
      %s29 = sphi 0, %s36
      %s30 = sphi 0, %s28
      %s31 = sphi 0, %s29
      %s32 = sphi 0, %s30
      %s33 = sphi 0, %s31
      %s45 = sphi 0, %s47
      %s48 = sphi 0, %s45
      %s49 = sphi 0, %s48
      %s65 = sphi 0, %s49
      %s73 = sphi 0, %s75
      %s76 = sphi 0, %s73
      %s77 = sphi 0, %s76
      %s93 = sphi 0, %s77
      %s97 = sphi 0, %s97
      %s99 = sphi 0, %s97
      %s100 = sphi 0, %s99
      %s114 = sphi 0, %s100
      %s118 = sphi 0, %s118
      %s120 = sphi 0, %s118
      %s121 = sphi 0, %s120
      %s135 = sphi 0, %s121
      %s139 = sphi 0, %s139
      %s141 = sphi 0, %s139
      %s142 = sphi 0, %s141
      %s156 = sphi 0, %s142
      %s160 = sphi 0, %s160
      %s162 = sphi 0, %s160
      %s163 = sphi 0, %s162
      %s177 = sphi 0, %s163
      %s185 = sphi 0, %s187
      %s188 = sphi 0, %s185
      %s189 = sphi 0, %s188
      %s205 = sphi 0, %s189
    $region4: #{tpu_custom_call.1} parent=1 // loop_header_branch
      %24 = sbr.rel (%p22) target = $region8
    $region5: #{tpu_custom_call.1} parent=1 // loop_body
      %s26 = ssub.s32 %s21, 1
      %s27 = ssub.s32 %s21, 2
      %s34 = sadd.s32 1, %s29
      %p35 = scmp.ge.s32.totalorder %s34, 1
      %s36 = scalar_select %p35, 0, %s34
      %s37 = sadd.s32 1, %s28
      %s38 = scalar_select %p35, %s37, %s28
      %p39 = scmp.ge.s32.totalorder %s38, 2
      %s40 = scalar_select %p39, 0, %s38
      %s41 = ssub.s32 %s28, %s40
      %s42 = ssub.s32 %s29, %s36
      %s43 = sor.u32 %s41, %s42
      %p44 = scmp.eq.s32.totalorder %s43, 0
      %s46 = sadd.s32 %s45, 1
      %s47 = scalar_select %p44, %s45, %s46
      %p50 = pneg %p44
      %p51 = scmp.eq.s32.totalorder %s21, 1
      %p52 = por %p50, %p51
      %p53 = scmp.ne.s32.totalorder %s45, %s48
      %p54 = scmp.eq.s32.totalorder %s21, 0
      %p55 = por %p53, %p54
      %p56 = scmp.ne.s32.totalorder %s45, %s48
      %p57 = scmp.eq.s32.totalorder %s26, 1
      %p58 = por %p56, %p57
      %p59 = scmp.ne.s32.totalorder %s48, %s49
      %p60 = scmp.eq.s32.totalorder %s26, 0
      %p61 = por %p59, %p60
      %p62 = scmp.ne.s32.totalorder %s48, %s49
      %p63 = scmp.eq.s32.totalorder %s27, 1
      %p64 = por %p62, %p63
      %p66 = scmp.ne.s32.totalorder %s49, %s65
      %p67 = scmp.eq.s32.totalorder %s27, 0
      %p68 = por %p66, %p67
      %s69 = ssub.s32 %s28, %s40
      %s70 = ssub.s32 %s29, %s36
      %s71 = sor.u32 %s69, %s70
      %p72 = scmp.eq.s32.totalorder %s71, 0
      %s74 = sadd.s32 %s73, 1
      %s75 = scalar_select %p72, %s73, %s74
      %p78 = pneg %p72
      %p79 = scmp.eq.s32.totalorder %s21, 1
      %p80 = por %p78, %p79
      %p81 = scmp.ne.s32.totalorder %s73, %s76
      %p82 = scmp.eq.s32.totalorder %s21, 0
      %p83 = por %p81, %p82
      %p84 = scmp.ne.s32.totalorder %s73, %s76
      %p85 = scmp.eq.s32.totalorder %s26, 1
      %p86 = por %p84, %p85
      %p87 = scmp.ne.s32.totalorder %s76, %s77
      %p88 = scmp.eq.s32.totalorder %s26, 0
      %p89 = por %p87, %p88
      %p90 = scmp.ne.s32.totalorder %s76, %s77
      %p91 = scmp.eq.s32.totalorder %s27, 1
      %p92 = por %p90, %p91
      %p94 = scmp.ne.s32.totalorder %s77, %s93
      %p95 = scmp.eq.s32.totalorder %s27, 0
      %p96 = por %p94, %p95
      %s98 = sadd.s32 %s97, 1
      %p101 = scmp.eq.s32.totalorder %s21, 1
      %p102 = scmp.ne.s32.totalorder %s97, %s99
      %p103 = scmp.eq.s32.totalorder %s21, 0
      %p104 = por %p102, %p103
      %p105 = scmp.ne.s32.totalorder %s97, %s99
      %p106 = scmp.eq.s32.totalorder %s26, 1
      %p107 = por %p105, %p106
      %p108 = scmp.ne.s32.totalorder %s99, %s100
      %p109 = scmp.eq.s32.totalorder %s26, 0
      %p110 = por %p108, %p109
      %p111 = scmp.ne.s32.totalorder %s99, %s100
      %p112 = scmp.eq.s32.totalorder %s27, 1
      %p113 = por %p111, %p112
      %p115 = scmp.ne.s32.totalorder %s100, %s114
      %p116 = scmp.eq.s32.totalorder %s27, 0
      %p117 = por %p115, %p116
      %s119 = sadd.s32 %s118, 1
      %p122 = scmp.eq.s32.totalorder %s21, 1
      %p123 = scmp.ne.s32.totalorder %s118, %s120
      %p124 = scmp.eq.s32.totalorder %s21, 0
      %p125 = por %p123, %p124
      %p126 = scmp.ne.s32.totalorder %s118, %s120
      %p127 = scmp.eq.s32.totalorder %s26, 1
      %p128 = por %p126, %p127
      %p129 = scmp.ne.s32.totalorder %s120, %s121
      %p130 = scmp.eq.s32.totalorder %s26, 0
      %p131 = por %p129, %p130
      %p132 = scmp.ne.s32.totalorder %s120, %s121
      %p133 = scmp.eq.s32.totalorder %s27, 1
      %p134 = por %p132, %p133
      %p136 = scmp.ne.s32.totalorder %s121, %s135
      %p137 = scmp.eq.s32.totalorder %s27, 0
      %p138 = por %p136, %p137
      %s140 = sadd.s32 %s139, 1
      %p143 = scmp.eq.s32.totalorder %s21, 1
      %p144 = scmp.ne.s32.totalorder %s139, %s141
      %p145 = scmp.eq.s32.totalorder %s21, 0
      %p146 = por %p144, %p145
      %p147 = scmp.ne.s32.totalorder %s139, %s141
      %p148 = scmp.eq.s32.totalorder %s26, 1
      %p149 = por %p147, %p148
      %p150 = scmp.ne.s32.totalorder %s141, %s142
      %p151 = scmp.eq.s32.totalorder %s26, 0
      %p152 = por %p150, %p151
      %p153 = scmp.ne.s32.totalorder %s141, %s142
      %p154 = scmp.eq.s32.totalorder %s27, 1
      %p155 = por %p153, %p154
      %p157 = scmp.ne.s32.totalorder %s142, %s156
      %p158 = scmp.eq.s32.totalorder %s27, 0
      %p159 = por %p157, %p158
      %s161 = sadd.s32 %s160, 1
      %p164 = scmp.eq.s32.totalorder %s21, 1
      %p165 = scmp.ne.s32.totalorder %s160, %s162
      %p166 = scmp.eq.s32.totalorder %s21, 0
      %p167 = por %p165, %p166
      %p168 = scmp.ne.s32.totalorder %s160, %s162
      %p169 = scmp.eq.s32.totalorder %s26, 1
      %p170 = por %p168, %p169
      %p171 = scmp.ne.s32.totalorder %s162, %s163
      %p172 = scmp.eq.s32.totalorder %s26, 0
      %p173 = por %p171, %p172
      %p174 = scmp.ne.s32.totalorder %s162, %s163
      %p175 = scmp.eq.s32.totalorder %s27, 1
      %p176 = por %p174, %p175
      %p178 = scmp.ne.s32.totalorder %s163, %s177
      %p179 = scmp.eq.s32.totalorder %s27, 0
      %p180 = por %p178, %p179
      %s181 = ssub.s32 %s28, %s40
      %s182 = ssub.s32 %s29, %s36
      %s183 = sor.u32 %s181, %s182
      %p184 = scmp.eq.s32.totalorder %s183, 0
      %s186 = sadd.s32 %s185, 1
      %s187 = scalar_select %p184, %s185, %s186
      %p190 = pneg %p184
      %p191 = scmp.eq.s32.totalorder %s21, 1
      %p192 = por %p190, %p191
      %p193 = scmp.ne.s32.totalorder %s185, %s188
      %p194 = scmp.eq.s32.totalorder %s21, 0
      %p195 = por %p193, %p194
      %p196 = scmp.ne.s32.totalorder %s185, %s188
      %p197 = scmp.eq.s32.totalorder %s26, 1
      %p198 = por %p196, %p197
      %p199 = scmp.ne.s32.totalorder %s188, %s189
      %p200 = scmp.eq.s32.totalorder %s26, 0
      %p201 = por %p199, %p200
      %p202 = scmp.ne.s32.totalorder %s188, %s189
      %p203 = scmp.eq.s32.totalorder %s27, 1
      %p204 = por %p202, %p203
      %p206 = scmp.ne.s32.totalorder %s189, %s205
      %p207 = scmp.eq.s32.totalorder %s27, 0
      %p208 = por %p206, %p207
      %p209 = scmp.le.s32.totalorder 1, %s21
      %p210 = scmp.lt.s32.totalorder %s21, 3
      %p211 = pnand %p209, %p210
      %p212 = pneg %p211
      // Predicated region
      $region9: #{tpu_custom_call.1} parent=5 // pred_check
        _
      $region10: #{tpu_custom_call.1} parent=5 // pred_check_branch
        %214 = sbr.rel (%p211) target = $region12
      $region11: #{tpu_custom_call.1} parent=5 // pred_region
        %s215 = ssub.s32 %s21, 1
        // Predicated region
        $region13: #{tpu_custom_call.1} parent=11 // pred_check
          %p216 = pneg %p110
        $region14: #{tpu_custom_call.1} parent=11 // pred_check_branch
          %218 = sbr.rel (%p216) target = $region16
        $region15: #{tpu_custom_call.1} parent=11 // pred_region
          _
        $region16: #{tpu_custom_call.1} parent=11 // pred_fallthru
          _
        // Predicated region
        $region17: #{tpu_custom_call.1} parent=11 // pred_check
          %p219 = pneg %p131
        $region18: #{tpu_custom_call.1} parent=11 // pred_check_branch
          %221 = sbr.rel (%p219) target = $region20
        $region19: #{tpu_custom_call.1} parent=11 // pred_region
          _
        $region20: #{tpu_custom_call.1} parent=11 // pred_fallthru
          _
        // Predicated region
        $region21: #{tpu_custom_call.1} parent=11 // pred_check
          %p222 = pneg %p152
        $region22: #{tpu_custom_call.1} parent=11 // pred_check_branch
          %224 = sbr.rel (%p222) target = $region24
        $region23: #{tpu_custom_call.1} parent=11 // pred_region
          _
        $region24: #{tpu_custom_call.1} parent=11 // pred_fallthru
          _
        // Predicated region
        $region25: #{tpu_custom_call.1} parent=11 // pred_check
          %p225 = pneg %p173
        $region26: #{tpu_custom_call.1} parent=11 // pred_check_branch
          %227 = sbr.rel (%p225) target = $region28
        $region27: #{tpu_custom_call.1} parent=11 // pred_region
          _
        $region28: #{tpu_custom_call.1} parent=11 // pred_fallthru
          _
      $region12: #{tpu_custom_call.1} parent=5 // pred_fallthru
        _
      %p228 = scmp.lt.s32.totalorder %s21, 2
      // Predicated region
      $region29: #{tpu_custom_call.1} parent=5 // pred_check
        %p229 = pneg %p228
      $region30: #{tpu_custom_call.1} parent=5 // pred_check_branch
        %231 = sbr.rel (%p229) target = $region32
      $region31: #{tpu_custom_call.1} parent=5 // pred_region
        // Predicated region
        $region33: #{tpu_custom_call.1} parent=31 // pred_check
          %p232 = pneg %p55
        $region34: #{tpu_custom_call.1} parent=31 // pred_check_branch
          %234 = sbr.rel (%p232) target = $region36
        $region35: #{tpu_custom_call.1} parent=31 // pred_region
          %s235 = sand.u32 %s45, 1
          %s236 = scalar_lea.sflag [#allocation3], %s235
          %s237 = sand.u32 %s45, 1
          %s238 = smul.addr %s237, 128
          %s239 = scalar_lea.vmem [#allocation2], %s238
          %s240 = smul.u32 16, %s29
          %s242 = ssub.s32 2048, 2048
          %243 = vsyncadd %s236, %s242
          %s244 = smul.addr %s28, 32
          %s245 = sadd.s32 %s240, %s244
          %s246 = smul.addr %s245, 64
          %s247 = scalar_lea.hbm %s0, %s246
          %s248 = sshll.u32 %s239, 4
          %s249 = int_to_ptr.vmem [resolvable:$true] %s248
          %254 = dma.hbm_to_vmem [thread:$0]  %s247, 2048, %s249, %s236, 1024, 1024, 64
        $region36: #{tpu_custom_call.1} parent=31 // pred_fallthru
          _
        // Predicated region
        $region37: #{tpu_custom_call.1} parent=31 // pred_check
          %p255 = pneg %p83
        $region38: #{tpu_custom_call.1} parent=31 // pred_check_branch
          %257 = sbr.rel (%p255) target = $region40
        $region39: #{tpu_custom_call.1} parent=31 // pred_region
          %s258 = sand.u32 %s73, 1
          %s259 = scalar_lea.sflag [#allocation6], %s258
          %s260 = sand.u32 %s73, 1
          %s261 = smul.addr %s260, 256
          %s262 = scalar_lea.vmem [#allocation5], %s261
          %s263 = smul.u32 16, %s29
          %s265 = ssub.s32 4096, 4096
          %266 = vsyncadd %s259, %s265
          %s267 = smul.addr %s28, 64
          %s268 = sadd.s32 %s263, %s267
          %s269 = smul.addr %s268, 64
          %s270 = scalar_lea.hbm %s1, %s269
          %s271 = sshll.u32 %s262, 4
          %s272 = int_to_ptr.vmem [resolvable:$true] %s271
          %277 = dma.hbm_to_vmem [thread:$0]  %s270, 4096, %s272, %s259, 1024, 1024, 64
        $region40: #{tpu_custom_call.1} parent=31 // pred_fallthru
          _
      $region32: #{tpu_custom_call.1} parent=5 // pred_fallthru
        _
      %p278 = scmp.le.s32.totalorder 1, %s21
      %p279 = scmp.lt.s32.totalorder %s21, 3
      %p280 = pnand %p278, %p279
      %p281 = pneg %p280
      // Predicated region
      $region41: #{tpu_custom_call.1} parent=5 // pred_check
        _
      $region42: #{tpu_custom_call.1} parent=5 // pred_check_branch
        %283 = sbr.rel (%p280) target = $region44
      $region43: #{tpu_custom_call.1} parent=5 // pred_region
        %s284 = ssub.s32 %s21, 1
        %s285 = sand.u32 %s48, 1
        %s286 = scalar_lea.sflag [#allocation3], %s285
        %s287 = sand.u32 %s48, 1
        %s288 = smul.addr %s287, 128
        %s289 = scalar_lea.vmem [#allocation2], %s288
        // Predicated region
        $region45: #{tpu_custom_call.1} parent=43 // pred_check
          %p290 = pneg %p61
        $region46: #{tpu_custom_call.1} parent=43 // pred_check_branch
          %292 = sbr.rel (%p290) target = $region48
        $region47: #{tpu_custom_call.1} parent=43 // pred_region
          %293 = dma.done %s286, 2048
        $region48: #{tpu_custom_call.1} parent=43 // pred_fallthru
          _
        %s294 = sand.u32 %s76, 1
        %s295 = scalar_lea.sflag [#allocation6], %s294
        %s296 = sand.u32 %s76, 1
        %s297 = smul.addr %s296, 256
        %s298 = scalar_lea.vmem [#allocation5], %s297
        // Predicated region
        $region49: #{tpu_custom_call.1} parent=43 // pred_check
          %p299 = pneg %p89
        $region50: #{tpu_custom_call.1} parent=43 // pred_check_branch
          %301 = sbr.rel (%p299) target = $region52
        $region51: #{tpu_custom_call.1} parent=43 // pred_region
          %302 = dma.done %s295, 4096
        $region52: #{tpu_custom_call.1} parent=43 // pred_fallthru
          _
        %s303 = sand.u32 %s48, 1
        %s304 = scalar_lea.sflag [#allocation3], %s303
        %s305 = sand.u32 %s48, 1
        %s306 = smul.addr %s305, 128
        %s307 = scalar_lea.vmem [#allocation2], %s306
        %p308 = pneg %p61
        %p309 = pneg %p58
        %s310 = sand.u32 %s76, 1
        %s311 = scalar_lea.sflag [#allocation6], %s310
        %s312 = sand.u32 %s76, 1
        %s313 = smul.addr %s312, 256
        %s314 = scalar_lea.vmem [#allocation5], %s313
        %p315 = pneg %p89
        %p316 = pneg %p86
        %p317 = pneg %p110
        %p318 = pneg %p107
        %p319 = pneg %p131
        %p320 = pneg %p128
        %p321 = pneg %p152
        %p322 = pneg %p149
        %p323 = pneg %p173
        %p324 = pneg %p170
        %p325 = pneg %p201
        %p326 = pneg %p198
        %s327 = sand.u32 %s188, 1
        %s328 = scalar_lea.sflag [#allocation4], %s327
        %s329 = sand.u32 %s188, 1
        %s330 = smul.addr %s329, 256
        %s331 = scalar_lea.vmem [#allocation7], %s330
        %s332 = smul.u32 16, %s31
        %s333 = smul.u32 16, %s31
        %s334 = smul.u32 16, %s31
        %v336 = vld [vmem:[%s289] sm:$0xff]
        %v337 = vld [vmem:[%s289 + $0x8] sm:$0xff]
        %v338 = vld [vmem:[%s289 + $0x10] sm:$0xff]
        %v339 = vld [vmem:[%s289 + $0x18] sm:$0xff]
        %v340 = vld [vmem:[%s289 + $0x20] sm:$0xff]
        %v341 = vld [vmem:[%s289 + $0x28] sm:$0xff]
        %v342 = vld [vmem:[%s289 + $0x30] sm:$0xff]
        %v343 = vld [vmem:[%s289 + $0x38] sm:$0xff]
        %v344 = vld [vmem:[%s289 + $0x40] sm:$0xff]
        %v345 = vld [vmem:[%s289 + $0x48] sm:$0xff]
        %v346 = vld [vmem:[%s289 + $0x50] sm:$0xff]
        %v347 = vld [vmem:[%s289 + $0x58] sm:$0xff]
        %v348 = vld [vmem:[%s289 + $0x60] sm:$0xff]
        %v349 = vld [vmem:[%s289 + $0x68] sm:$0xff]
        %v350 = vld [vmem:[%s289 + $0x70] sm:$0xff]
        %v351 = vld [vmem:[%s289 + $0x78] sm:$0xff]
        %v352 = vld [vmem:[%s298] sm:$0xff]
        %v353 = vld [vmem:[%s298 + $0x8] sm:$0xff]
        %v354 = vld [vmem:[%s298 + $0x10] sm:$0xff]
        %v355 = vld [vmem:[%s298 + $0x18] sm:$0xff]
        %v356 = vld [vmem:[%s298 + $0x20] sm:$0xff]
        %v357 = vld [vmem:[%s298 + $0x28] sm:$0xff]
        %v358 = vld [vmem:[%s298 + $0x30] sm:$0xff]
        %v359 = vld [vmem:[%s298 + $0x38] sm:$0xff]
        %v360 = vld [vmem:[%s298 + $0x40] sm:$0xff]
        %v361 = vld [vmem:[%s298 + $0x48] sm:$0xff]
        %v362 = vld [vmem:[%s298 + $0x50] sm:$0xff]
        %v363 = vld [vmem:[%s298 + $0x58] sm:$0xff]
        %v364 = vld [vmem:[%s298 + $0x60] sm:$0xff]
        %v365 = vld [vmem:[%s298 + $0x68] sm:$0xff]
        %v366 = vld [vmem:[%s298 + $0x70] sm:$0xff]
        %v367 = vld [vmem:[%s298 + $0x78] sm:$0xff]
        %v368 = vld [vmem:[%s298 + $0x80] sm:$0xff]
        %v369 = vld [vmem:[%s298 + $0x88] sm:$0xff]
        %v370 = vld [vmem:[%s298 + $0x90] sm:$0xff]
        %v371 = vld [vmem:[%s298 + $0x98] sm:$0xff]
        %v372 = vld [vmem:[%s298 + $0xa0] sm:$0xff]
        %v373 = vld [vmem:[%s298 + $0xa8] sm:$0xff]
        %v374 = vld [vmem:[%s298 + $0xb0] sm:$0xff]
        %v375 = vld [vmem:[%s298 + $0xb8] sm:$0xff]
        %v376 = vld [vmem:[%s298 + $0xc0] sm:$0xff]
        %v377 = vld [vmem:[%s298 + $0xc8] sm:$0xff]
        %v378 = vld [vmem:[%s298 + $0xd0] sm:$0xff]
        %v379 = vld [vmem:[%s298 + $0xd8] sm:$0xff]
        %v380 = vld [vmem:[%s298 + $0xe0] sm:$0xff]
        %v381 = vld [vmem:[%s298 + $0xe8] sm:$0xff]
        %v382 = vld [vmem:[%s298 + $0xf0] sm:$0xff]
        %v383 = vld [vmem:[%s298 + $0xf8] sm:$0xff]
        %v384 = vld [vmem:[%s5] sm:$0xff]
        %v385 = vld [vmem:[%s5 + $0x8] sm:$0xff]
        %v386 = vld [vmem:[%s5 + $0x10] sm:$0xff]
        %v387 = vld [vmem:[%s5 + $0x18] sm:$0xff]
        %v388 = vld [vmem:[%s5 + $0x20] sm:$0xff]
        %v389 = vld [vmem:[%s5 + $0x28] sm:$0xff]
        %v390 = vld [vmem:[%s2] sm:$0xf]
        %v391 = vld [vmem:[%s2 + $0x4] sm:$0xf]
        %v392 = vld [vmem:[%s2 + $0x8] sm:$0xf]
        %v393 = vld [vmem:[%s2 + $0xc] sm:$0xf]
        %v394 = vld [vmem:[%s2 + $0x10] sm:$0xf]
        %v395 = vld [vmem:[%s2 + $0x14] sm:$0xf]
        %397 = vset.pattern.permute.xlu0 0
        %398 = vperm.xlu0 %397, %v384
        %v399 = vpop.permute.xlu0 %398
        %402 = vset.pattern.permute.xlu0 0
        %403 = vperm.xlu0 %402, %v385
        %v404 = vpop.permute.xlu0 %403
        %407 = vset.pattern.permute.xlu0 0
        %408 = vperm.xlu0 %407, %v386
        %v409 = vpop.permute.xlu0 %408
        %412 = vset.pattern.permute.xlu0 0
        %413 = vperm.xlu0 %412, %v387
        %v414 = vpop.permute.xlu0 %413
        %417 = vset.pattern.permute.xlu0 0
        %418 = vperm.xlu0 %417, %v388
        %v419 = vpop.permute.xlu0 %418
        %422 = vset.pattern.permute.xlu0 0
        %423 = vperm.xlu0 %422, %v389
        %v424 = vpop.permute.xlu0 %423
        %v432 = vunpack.c.l.b16 %v390
        %v433 = vunpack.c.l.b16 %v391
        %v434 = vunpack.c.l.b16 %v392
        %v435 = vunpack.c.l.b16 %v393
        %v436 = vunpack.c.l.b16 %v394
        %v437 = vunpack.c.l.b16 %v395
        %v438 = vpack.c.b16 %v433, %v432
        %v439 = vpack.c.b16 %v435, %v434
        %v440 = vpack.c.b16 %v437, %v436
        %v457 = vunpack.c.l.b16 %v336
        %v458 = vunpack.c.h.b16 %v336
        %v459 = vunpack.c.l.b16 %v337
        %v460 = vunpack.c.h.b16 %v337
        %v461 = vunpack.c.l.b16 %v338
        %v462 = vunpack.c.h.b16 %v338
        %v463 = vunpack.c.l.b16 %v339
        %v464 = vunpack.c.h.b16 %v339
        %v465 = vunpack.c.l.b16 %v340
        %v466 = vunpack.c.h.b16 %v340
        %v467 = vunpack.c.l.b16 %v341
        %v468 = vunpack.c.h.b16 %v341
        %v469 = vunpack.c.l.b16 %v342
        %v470 = vunpack.c.h.b16 %v342
        %v471 = vunpack.c.l.b16 %v343
        %v472 = vunpack.c.h.b16 %v343
        %v473 = vunpack.c.l.b16 %v344
        %v474 = vunpack.c.h.b16 %v344
        %v475 = vunpack.c.l.b16 %v345
        %v476 = vunpack.c.h.b16 %v345
        %v477 = vunpack.c.l.b16 %v346
        %v478 = vunpack.c.h.b16 %v346
        %v479 = vunpack.c.l.b16 %v347
        %v480 = vunpack.c.h.b16 %v347
        %v481 = vunpack.c.l.b16 %v348
        %v482 = vunpack.c.h.b16 %v348
        %v483 = vunpack.c.l.b16 %v349
        %v484 = vunpack.c.h.b16 %v349
        %v485 = vunpack.c.l.b16 %v350
        %v486 = vunpack.c.h.b16 %v350
        %v487 = vunpack.c.l.b16 %v351
        %v488 = vunpack.c.h.b16 %v351
        %v489 = vpack.c.b16 %v473, %v457
        %v490 = vpack.c.b16 %v474, %v458
        %v491 = vpack.c.b16 %v475, %v459
        %v492 = vpack.c.b16 %v476, %v460
        %v493 = vpack.c.b16 %v477, %v461
        %v494 = vpack.c.b16 %v478, %v462
        %v495 = vpack.c.b16 %v479, %v463
        %v496 = vpack.c.b16 %v480, %v464
        %v497 = vpack.c.b16 %v481, %v465
        %v498 = vpack.c.b16 %v482, %v466
        %v499 = vpack.c.b16 %v483, %v467
        %v500 = vpack.c.b16 %v484, %v468
        %v501 = vpack.c.b16 %v485, %v469
        %v502 = vpack.c.b16 %v486, %v470
        %v503 = vpack.c.b16 %v487, %v471
        %v504 = vpack.c.b16 %v488, %v472
        %vm521 = vcmask 130048
        %v523 = vsel %vm521, %v438, 0
        %v526 = vsel %vm521, %v439, 0
        %v529 = vsel %vm521, %v440, 0
        %531 = vmatprep.subr.bf16.mxu0 %v490
        %532 = vmatpush1.bf16.msra.mxu0 %v489
        %533 = vmatprep.subr.bf16.mxu0 0
        %534 = vmatpush1.bf16.msra.mxu0 0
        %535 = vmatprep.subr.bf16.mxu0 0
        %536 = vmatpush1.bf16.msra.mxu0 0
        %537 = vmatprep.subr.bf16.mxu0 0
        %538 = vmatpush1.bf16.msra.mxu0 0
        %539 = vmatprep.subr.bf16.mxu0 0
        %540 = vmatpush1.bf16.msra.mxu0 0
        %541 = vmatprep.subr.bf16.mxu0 0
        %542 = vmatpush1.bf16.msra.mxu0 0
        %543 = vmatprep.subr.bf16.mxu0 0
        %544 = vmatpush1.bf16.msra.mxu0 0
        %545 = vmatprep.subr.bf16.mxu0 0
        %546 = vmatpush1.bf16.msra.mxu0 0
        %547 = vmatprep.subr.bf16.mxu0 0
        %548 = vmatpush1.bf16.msra.mxu0 0
        %549 = vmatprep.subr.bf16.mxu0 0
        %550 = vmatpush1.bf16.msra.mxu0 0
        %551 = vmatprep.subr.bf16.mxu0 0
        %552 = vmatpush1.bf16.msra.mxu0 0
        %553 = vmatprep.subr.bf16.mxu0 0
        %554 = vmatpush1.bf16.msra.mxu0 0
        %555 = vmatprep.subr.bf16.mxu0 0
        %556 = vmatpush1.bf16.msra.mxu0 0
        %557 = vmatprep.subr.bf16.mxu0 0
        %558 = vmatpush1.bf16.msra.mxu0 0
        %559 = vmatprep.subr.bf16.mxu0 0
        %560 = vmatpush1.bf16.msra.mxu0 0
        %561 = vmatprep.subr.bf16.mxu0 0
        %562 = vmatpush1.bf16.msra.mxu0 0
        %563 = vmatprep.mubr.bf16.mxu0 0
        %564 = vmatmul.mubr.bf16.gmra.mrb[0].mxu0 %v523
        %v565 = vpop.f32.mrb[0].mxu0
        %v566 = vadd.f32 %v399, %v565
        %v567 = vpop.f32.mrb[0].mxu0
        %v568 = vadd.f32 %v399, %v567
        %v569 = vpop.f32.mrb[0].mxu0
        %v570 = vadd.f32 %v404, %v569
        %v571 = vpop.f32.mrb[0].mxu0
        %v572 = vadd.f32 %v404, %v571
        %573 = vmatprep.mubr.bf16.mxu0 0
        %574 = vmatmul.mubr.bf16.gmra.mrb[0].mxu0 %v526
        %v575 = vpop.f32.mrb[0].mxu0
        %v576 = vadd.f32 %v409, %v575
        %v577 = vpop.f32.mrb[0].mxu0
        %v578 = vadd.f32 %v409, %v577
        %v579 = vpop.f32.mrb[0].mxu0
        %v580 = vadd.f32 %v414, %v579
        %v581 = vpop.f32.mrb[0].mxu0
        %v582 = vadd.f32 %v414, %v581
        %583 = vmatprep.mubr.bf16.mxu0 0
        %584 = vmatmul.mubr.bf16.gmra.mrb[0].mxu0 %v529
        %v585 = vpop.f32.mrb[0].mxu0
        %v586 = vadd.f32 %v419, %v585
        %v587 = vpop.f32.mrb[0].mxu0
        %v588 = vadd.f32 %v419, %v587
        %v589 = vpop.f32.mrb[0].mxu0
        %v590 = vadd.f32 %v424, %v589
        %v591 = vpop.f32.mrb[0].mxu0
        %v592 = vadd.f32 %v424, %v591
        %593 = vdwg.mxu0
        %594 = vmatprep.subr.bf16.mxu0 %v492
        %595 = vmatpush1.bf16.msra.mxu0 %v491
        %596 = vmatprep.subr.bf16.mxu0 0
        %597 = vmatpush1.bf16.msra.mxu0 0
        %598 = vmatprep.subr.bf16.mxu0 0
        %599 = vmatpush1.bf16.msra.mxu0 0
        %600 = vmatprep.subr.bf16.mxu0 0
        %601 = vmatpush1.bf16.msra.mxu0 0
        %602 = vmatprep.subr.bf16.mxu0 0
        %603 = vmatpush1.bf16.msra.mxu0 0
        %604 = vmatprep.subr.bf16.mxu0 0
        %605 = vmatpush1.bf16.msra.mxu0 0
        %606 = vmatprep.subr.bf16.mxu0 0
        %607 = vmatpush1.bf16.msra.mxu0 0
        %608 = vmatprep.subr.bf16.mxu0 0
        %609 = vmatpush1.bf16.msra.mxu0 0
        %610 = vmatprep.subr.bf16.mxu0 0
        %611 = vmatpush1.bf16.msra.mxu0 0
        %612 = vmatprep.subr.bf16.mxu0 0
        %613 = vmatpush1.bf16.msra.mxu0 0
        %614 = vmatprep.subr.bf16.mxu0 0
        %615 = vmatpush1.bf16.msra.mxu0 0
        %616 = vmatprep.subr.bf16.mxu0 0
        %617 = vmatpush1.bf16.msra.mxu0 0
        %618 = vmatprep.subr.bf16.mxu0 0
        %619 = vmatpush1.bf16.msra.mxu0 0
        %620 = vmatprep.subr.bf16.mxu0 0
        %621 = vmatpush1.bf16.msra.mxu0 0
        %622 = vmatprep.subr.bf16.mxu0 0
        %623 = vmatpush1.bf16.msra.mxu0 0
        %624 = vmatprep.subr.bf16.mxu0 0
        %625 = vmatpush1.bf16.msra.mxu0 0
        %626 = vmatprep.mubr.bf16.mxu0 0
        %627 = vmatmul.mubr.bf16.gmra.mrb[0].mxu0 %v523
        %v628 = vpop.f32.mrb[0].mxu0
        %v629 = vadd.f32 %v399, %v628
        %v630 = vpop.f32.mrb[0].mxu0
        %v631 = vadd.f32 %v399, %v630
        %v632 = vpop.f32.mrb[0].mxu0
        %v633 = vadd.f32 %v404, %v632
        %v634 = vpop.f32.mrb[0].mxu0
        %v635 = vadd.f32 %v404, %v634
        %636 = vmatprep.mubr.bf16.mxu0 0
        %637 = vmatmul.mubr.bf16.gmra.mrb[0].mxu0 %v526
        %v638 = vpop.f32.mrb[0].mxu0
        %v639 = vadd.f32 %v409, %v638
        %v640 = vpop.f32.mrb[0].mxu0
        %v641 = vadd.f32 %v409, %v640
        %v642 = vpop.f32.mrb[0].mxu0
        %v643 = vadd.f32 %v414, %v642
        %v644 = vpop.f32.mrb[0].mxu0
        %v645 = vadd.f32 %v414, %v644
        %646 = vmatprep.mubr.bf16.mxu0 0
        %647 = vmatmul.mubr.bf16.gmra.mrb[0].mxu0 %v529
        %v648 = vpop.f32.mrb[0].mxu0
        %v649 = vadd.f32 %v419, %v648
        %v650 = vpop.f32.mrb[0].mxu0
        %v651 = vadd.f32 %v419, %v650
        %v652 = vpop.f32.mrb[0].mxu0
        %v653 = vadd.f32 %v424, %v652
        %v654 = vpop.f32.mrb[0].mxu0
        %v655 = vadd.f32 %v424, %v654
        %656 = vdwg.mxu0
        %657 = vmatprep.subr.bf16.mxu0 %v494
        %658 = vmatpush1.bf16.msra.mxu0 %v493
        %659 = vmatprep.subr.bf16.mxu0 0
        %660 = vmatpush1.bf16.msra.mxu0 0
        %661 = vmatprep.subr.bf16.mxu0 0
        %662 = vmatpush1.bf16.msra.mxu0 0
        %663 = vmatprep.subr.bf16.mxu0 0
        %664 = vmatpush1.bf16.msra.mxu0 0
        %665 = vmatprep.subr.bf16.mxu0 0
        %666 = vmatpush1.bf16.msra.mxu0 0
        %667 = vmatprep.subr.bf16.mxu0 0
        %668 = vmatpush1.bf16.msra.mxu0 0
        %669 = vmatprep.subr.bf16.mxu0 0
        %670 = vmatpush1.bf16.msra.mxu0 0
        %671 = vmatprep.subr.bf16.mxu0 0
        %672 = vmatpush1.bf16.msra.mxu0 0
        %673 = vmatprep.subr.bf16.mxu0 0
        %674 = vmatpush1.bf16.msra.mxu0 0
        %675 = vmatprep.subr.bf16.mxu0 0
        %676 = vmatpush1.bf16.msra.mxu0 0
        %677 = vmatprep.subr.bf16.mxu0 0
        %678 = vmatpush1.bf16.msra.mxu0 0
        %679 = vmatprep.subr.bf16.mxu0 0
        %680 = vmatpush1.bf16.msra.mxu0 0
        %681 = vmatprep.subr.bf16.mxu0 0
        %682 = vmatpush1.bf16.msra.mxu0 0
        %683 = vmatprep.subr.bf16.mxu0 0
        %684 = vmatpush1.bf16.msra.mxu0 0
        %685 = vmatprep.subr.bf16.mxu0 0
        %686 = vmatpush1.bf16.msra.mxu0 0
        %687 = vmatprep.subr.bf16.mxu0 0
        %688 = vmatpush1.bf16.msra.mxu0 0
        %689 = vmatprep.mubr.bf16.mxu0 0
        %690 = vmatmul.mubr.bf16.gmra.mrb[0].mxu0 %v523
        %v691 = vpop.f32.mrb[0].mxu0
        %v692 = vadd.f32 %v399, %v691
        %v693 = vpop.f32.mrb[0].mxu0
        %v694 = vadd.f32 %v399, %v693
        %v695 = vpop.f32.mrb[0].mxu0
        %v696 = vadd.f32 %v404, %v695
        %v697 = vpop.f32.mrb[0].mxu0
        %v698 = vadd.f32 %v404, %v697
        %699 = vmatprep.mubr.bf16.mxu0 0
        %700 = vmatmul.mubr.bf16.gmra.mrb[0].mxu0 %v526
        %v701 = vpop.f32.mrb[0].mxu0
        %v702 = vadd.f32 %v409, %v701
        %v703 = vpop.f32.mrb[0].mxu0
        %v704 = vadd.f32 %v409, %v703
        %v705 = vpop.f32.mrb[0].mxu0
        %v706 = vadd.f32 %v414, %v705
        %v707 = vpop.f32.mrb[0].mxu0
        %v708 = vadd.f32 %v414, %v707
        %709 = vmatprep.mubr.bf16.mxu0 0
        %710 = vmatmul.mubr.bf16.gmra.mrb[0].mxu0 %v529
        %v711 = vpop.f32.mrb[0].mxu0
        %v712 = vadd.f32 %v419, %v711
        %v713 = vpop.f32.mrb[0].mxu0
        %v714 = vadd.f32 %v419, %v713
        %v715 = vpop.f32.mrb[0].mxu0
        %v716 = vadd.f32 %v424, %v715
        %v717 = vpop.f32.mrb[0].mxu0
        %v718 = vadd.f32 %v424, %v717
        %719 = vdwg.mxu0
        %720 = vmatprep.subr.bf16.mxu0 %v496
        %721 = vmatpush1.bf16.msra.mxu0 %v495
        %722 = vmatprep.subr.bf16.mxu0 0
        %723 = vmatpush1.bf16.msra.mxu0 0
        %724 = vmatprep.subr.bf16.mxu0 0
        %725 = vmatpush1.bf16.msra.mxu0 0
        %726 = vmatprep.subr.bf16.mxu0 0
        %727 = vmatpush1.bf16.msra.mxu0 0
        %728 = vmatprep.subr.bf16.mxu0 0
        %729 = vmatpush1.bf16.msra.mxu0 0
        %730 = vmatprep.subr.bf16.mxu0 0
        %731 = vmatpush1.bf16.msra.mxu0 0
        %732 = vmatprep.subr.bf16.mxu0 0
        %733 = vmatpush1.bf16.msra.mxu0 0
        %734 = vmatprep.subr.bf16.mxu0 0
        %735 = vmatpush1.bf16.msra.mxu0 0
        %736 = vmatprep.subr.bf16.mxu0 0
        %737 = vmatpush1.bf16.msra.mxu0 0
        %738 = vmatprep.subr.bf16.mxu0 0
        %739 = vmatpush1.bf16.msra.mxu0 0
        %740 = vmatprep.subr.bf16.mxu0 0
        %741 = vmatpush1.bf16.msra.mxu0 0
        %742 = vmatprep.subr.bf16.mxu0 0
        %743 = vmatpush1.bf16.msra.mxu0 0
        %744 = vmatprep.subr.bf16.mxu0 0
        %745 = vmatpush1.bf16.msra.mxu0 0
        %746 = vmatprep.subr.bf16.mxu0 0
        %747 = vmatpush1.bf16.msra.mxu0 0
        %748 = vmatprep.subr.bf16.mxu0 0
        %749 = vmatpush1.bf16.msra.mxu0 0
        %750 = vmatprep.subr.bf16.mxu0 0
        %751 = vmatpush1.bf16.msra.mxu0 0
        %752 = vmatprep.mubr.bf16.mxu0 0
        %753 = vmatmul.mubr.bf16.gmra.mrb[0].mxu0 %v523
        %v754 = vpop.f32.mrb[0].mxu0
        %v755 = vadd.f32 %v399, %v754
        %v756 = vpop.f32.mrb[0].mxu0
        %v757 = vadd.f32 %v399, %v756
        %v758 = vpop.f32.mrb[0].mxu0
        %v759 = vadd.f32 %v404, %v758
        %v760 = vpop.f32.mrb[0].mxu0
        %v761 = vadd.f32 %v404, %v760
        %762 = vmatprep.mubr.bf16.mxu0 0
        %763 = vmatmul.mubr.bf16.gmra.mrb[0].mxu0 %v526
        %v764 = vpop.f32.mrb[0].mxu0
        %v765 = vadd.f32 %v409, %v764
        %v766 = vpop.f32.mrb[0].mxu0
        %v767 = vadd.f32 %v409, %v766
        %v768 = vpop.f32.mrb[0].mxu0
        %v769 = vadd.f32 %v414, %v768
        %v770 = vpop.f32.mrb[0].mxu0
        %v771 = vadd.f32 %v414, %v770
        %772 = vmatprep.mubr.bf16.mxu0 0
        %773 = vmatmul.mubr.bf16.gmra.mrb[0].mxu0 %v529
        %v774 = vpop.f32.mrb[0].mxu0
        %v775 = vadd.f32 %v419, %v774
        %v776 = vpop.f32.mrb[0].mxu0
        %v777 = vadd.f32 %v419, %v776
        %v778 = vpop.f32.mrb[0].mxu0
        %v779 = vadd.f32 %v424, %v778
        %v780 = vpop.f32.mrb[0].mxu0
        %v781 = vadd.f32 %v424, %v780
        %782 = vdwg.mxu0
        %783 = vmatprep.subr.bf16.mxu0 %v498
        %784 = vmatpush1.bf16.msra.mxu0 %v497
        %785 = vmatprep.subr.bf16.mxu0 0
        %786 = vmatpush1.bf16.msra.mxu0 0
        %787 = vmatprep.subr.bf16.mxu0 0
        %788 = vmatpush1.bf16.msra.mxu0 0
        %789 = vmatprep.subr.bf16.mxu0 0
        %790 = vmatpush1.bf16.msra.mxu0 0
        %791 = vmatprep.subr.bf16.mxu0 0
        %792 = vmatpush1.bf16.msra.mxu0 0
        %793 = vmatprep.subr.bf16.mxu0 0
        %794 = vmatpush1.bf16.msra.mxu0 0
        %795 = vmatprep.subr.bf16.mxu0 0
        %796 = vmatpush1.bf16.msra.mxu0 0
        %797 = vmatprep.subr.bf16.mxu0 0
        %798 = vmatpush1.bf16.msra.mxu0 0
        %799 = vmatprep.subr.bf16.mxu0 0
        %800 = vmatpush1.bf16.msra.mxu0 0
        %801 = vmatprep.subr.bf16.mxu0 0
        %802 = vmatpush1.bf16.msra.mxu0 0
        %803 = vmatprep.subr.bf16.mxu0 0
        %804 = vmatpush1.bf16.msra.mxu0 0
        %805 = vmatprep.subr.bf16.mxu0 0
        %806 = vmatpush1.bf16.msra.mxu0 0
        %807 = vmatprep.subr.bf16.mxu0 0
        %808 = vmatpush1.bf16.msra.mxu0 0
        %809 = vmatprep.subr.bf16.mxu0 0
        %810 = vmatpush1.bf16.msra.mxu0 0
        %811 = vmatprep.subr.bf16.mxu0 0
        %812 = vmatpush1.bf16.msra.mxu0 0
        %813 = vmatprep.subr.bf16.mxu0 0
        %814 = vmatpush1.bf16.msra.mxu0 0
        %815 = vmatprep.mubr.bf16.mxu0 0
        %816 = vmatmul.mubr.bf16.gmra.mrb[0].mxu0 %v523
        %v817 = vpop.f32.mrb[0].mxu0
        %v818 = vadd.f32 %v399, %v817
        %v819 = vpop.f32.mrb[0].mxu0
        %v820 = vadd.f32 %v399, %v819
        %v821 = vpop.f32.mrb[0].mxu0
        %v822 = vadd.f32 %v404, %v821
        %v823 = vpop.f32.mrb[0].mxu0
        %v824 = vadd.f32 %v404, %v823
        %825 = vmatprep.mubr.bf16.mxu0 0
        %826 = vmatmul.mubr.bf16.gmra.mrb[0].mxu0 %v526
        %v827 = vpop.f32.mrb[0].mxu0
        %v828 = vadd.f32 %v409, %v827
        %v829 = vpop.f32.mrb[0].mxu0
        %v830 = vadd.f32 %v409, %v829
        %v831 = vpop.f32.mrb[0].mxu0
        %v832 = vadd.f32 %v414, %v831
        %v833 = vpop.f32.mrb[0].mxu0
        %v834 = vadd.f32 %v414, %v833
        %835 = vmatprep.mubr.bf16.mxu0 0
        %836 = vmatmul.mubr.bf16.gmra.mrb[0].mxu0 %v529
        %v837 = vpop.f32.mrb[0].mxu0
        %v838 = vadd.f32 %v419, %v837
        %v839 = vpop.f32.mrb[0].mxu0
        %v840 = vadd.f32 %v419, %v839
        %v841 = vpop.f32.mrb[0].mxu0
        %v842 = vadd.f32 %v424, %v841
        %v843 = vpop.f32.mrb[0].mxu0
        %v844 = vadd.f32 %v424, %v843
        %845 = vdwg.mxu0
        %846 = vmatprep.subr.bf16.mxu0 %v500
        %847 = vmatpush1.bf16.msra.mxu0 %v499
        %848 = vmatprep.subr.bf16.mxu0 0
        %849 = vmatpush1.bf16.msra.mxu0 0
        %850 = vmatprep.subr.bf16.mxu0 0
        %851 = vmatpush1.bf16.msra.mxu0 0
        %852 = vmatprep.subr.bf16.mxu0 0
        %853 = vmatpush1.bf16.msra.mxu0 0
        %854 = vmatprep.subr.bf16.mxu0 0
        %855 = vmatpush1.bf16.msra.mxu0 0
        %856 = vmatprep.subr.bf16.mxu0 0
        %857 = vmatpush1.bf16.msra.mxu0 0
        %858 = vmatprep.subr.bf16.mxu0 0
        %859 = vmatpush1.bf16.msra.mxu0 0
        %860 = vmatprep.subr.bf16.mxu0 0
        %861 = vmatpush1.bf16.msra.mxu0 0
        %862 = vmatprep.subr.bf16.mxu0 0
        %863 = vmatpush1.bf16.msra.mxu0 0
        %864 = vmatprep.subr.bf16.mxu0 0
        %865 = vmatpush1.bf16.msra.mxu0 0
        %866 = vmatprep.subr.bf16.mxu0 0
        %867 = vmatpush1.bf16.msra.mxu0 0
        %868 = vmatprep.subr.bf16.mxu0 0
        %869 = vmatpush1.bf16.msra.mxu0 0
        %870 = vmatprep.subr.bf16.mxu0 0
        %871 = vmatpush1.bf16.msra.mxu0 0
        %872 = vmatprep.subr.bf16.mxu0 0
        %873 = vmatpush1.bf16.msra.mxu0 0
        %874 = vmatprep.subr.bf16.mxu0 0
        %875 = vmatpush1.bf16.msra.mxu0 0
        %876 = vmatprep.subr.bf16.mxu0 0
        %877 = vmatpush1.bf16.msra.mxu0 0
        %878 = vmatprep.mubr.bf16.mxu0 0
        %879 = vmatmul.mubr.bf16.gmra.mrb[0].mxu0 %v523
        %v880 = vpop.f32.mrb[0].mxu0
        %v881 = vadd.f32 %v399, %v880
        %v882 = vpop.f32.mrb[0].mxu0
        %v883 = vadd.f32 %v399, %v882
        %v884 = vpop.f32.mrb[0].mxu0
        %v885 = vadd.f32 %v404, %v884
        %v886 = vpop.f32.mrb[0].mxu0
        %v887 = vadd.f32 %v404, %v886
        %888 = vmatprep.mubr.bf16.mxu0 0
        %889 = vmatmul.mubr.bf16.gmra.mrb[0].mxu0 %v526
        %v890 = vpop.f32.mrb[0].mxu0
        %v891 = vadd.f32 %v409, %v890
        %v892 = vpop.f32.mrb[0].mxu0
        %v893 = vadd.f32 %v409, %v892
        %v894 = vpop.f32.mrb[0].mxu0
        %v895 = vadd.f32 %v414, %v894
        %v896 = vpop.f32.mrb[0].mxu0
        %v897 = vadd.f32 %v414, %v896
        %898 = vmatprep.mubr.bf16.mxu0 0
        %899 = vmatmul.mubr.bf16.gmra.mrb[0].mxu0 %v529
        %v900 = vpop.f32.mrb[0].mxu0
        %v901 = vadd.f32 %v419, %v900
        %v902 = vpop.f32.mrb[0].mxu0
        %v903 = vadd.f32 %v419, %v902
        %v904 = vpop.f32.mrb[0].mxu0
        %v905 = vadd.f32 %v424, %v904
        %v906 = vpop.f32.mrb[0].mxu0
        %v907 = vadd.f32 %v424, %v906
        %908 = vdwg.mxu0
        %909 = vmatprep.subr.bf16.mxu0 %v502
        %910 = vmatpush1.bf16.msra.mxu0 %v501
        %911 = vmatprep.subr.bf16.mxu0 0
        %912 = vmatpush1.bf16.msra.mxu0 0
        %913 = vmatprep.subr.bf16.mxu0 0
        %914 = vmatpush1.bf16.msra.mxu0 0
        %915 = vmatprep.subr.bf16.mxu0 0
        %916 = vmatpush1.bf16.msra.mxu0 0
        %917 = vmatprep.subr.bf16.mxu0 0
        %918 = vmatpush1.bf16.msra.mxu0 0
        %919 = vmatprep.subr.bf16.mxu0 0
        %920 = vmatpush1.bf16.msra.mxu0 0
        %921 = vmatprep.subr.bf16.mxu0 0
        %922 = vmatpush1.bf16.msra.mxu0 0
        %923 = vmatprep.subr.bf16.mxu0 0
        %924 = vmatpush1.bf16.msra.mxu0 0
        %925 = vmatprep.subr.bf16.mxu0 0
        %926 = vmatpush1.bf16.msra.mxu0 0
        %927 = vmatprep.subr.bf16.mxu0 0
        %928 = vmatpush1.bf16.msra.mxu0 0
        %929 = vmatprep.subr.bf16.mxu0 0
        %930 = vmatpush1.bf16.msra.mxu0 0
        %931 = vmatprep.subr.bf16.mxu0 0
        %932 = vmatpush1.bf16.msra.mxu0 0
        %933 = vmatprep.subr.bf16.mxu0 0
        %934 = vmatpush1.bf16.msra.mxu0 0
        %935 = vmatprep.subr.bf16.mxu0 0
        %936 = vmatpush1.bf16.msra.mxu0 0
        %937 = vmatprep.subr.bf16.mxu0 0
        %938 = vmatpush1.bf16.msra.mxu0 0
        %939 = vmatprep.subr.bf16.mxu0 0
        %940 = vmatpush1.bf16.msra.mxu0 0
        %941 = vmatprep.mubr.bf16.mxu0 0
        %942 = vmatmul.mubr.bf16.gmra.mrb[0].mxu0 %v523
        %v943 = vpop.f32.mrb[0].mxu0
        %v944 = vadd.f32 %v399, %v943
        %v945 = vpop.f32.mrb[0].mxu0
        %v946 = vadd.f32 %v399, %v945
        %v947 = vpop.f32.mrb[0].mxu0
        %v948 = vadd.f32 %v404, %v947
        %v949 = vpop.f32.mrb[0].mxu0
        %v950 = vadd.f32 %v404, %v949
        %951 = vmatprep.mubr.bf16.mxu0 0
        %952 = vmatmul.mubr.bf16.gmra.mrb[0].mxu0 %v526
        %v953 = vpop.f32.mrb[0].mxu0
        %v954 = vadd.f32 %v409, %v953
        %v955 = vpop.f32.mrb[0].mxu0
        %v956 = vadd.f32 %v409, %v955
        %v957 = vpop.f32.mrb[0].mxu0
        %v958 = vadd.f32 %v414, %v957
        %v959 = vpop.f32.mrb[0].mxu0
        %v960 = vadd.f32 %v414, %v959
        %961 = vmatprep.mubr.bf16.mxu0 0
        %962 = vmatmul.mubr.bf16.gmra.mrb[0].mxu0 %v529
        %v963 = vpop.f32.mrb[0].mxu0
        %v964 = vadd.f32 %v419, %v963
        %v965 = vpop.f32.mrb[0].mxu0
        %v966 = vadd.f32 %v419, %v965
        %v967 = vpop.f32.mrb[0].mxu0
        %v968 = vadd.f32 %v424, %v967
        %v969 = vpop.f32.mrb[0].mxu0
        %v970 = vadd.f32 %v424, %v969
        %971 = vdwg.mxu0
        %972 = vmatprep.subr.bf16.mxu0 %v504
        %973 = vmatpush1.bf16.msra.mxu0 %v503
        %974 = vmatprep.subr.bf16.mxu0 0
        %975 = vmatpush1.bf16.msra.mxu0 0
        %976 = vmatprep.subr.bf16.mxu0 0
        %977 = vmatpush1.bf16.msra.mxu0 0
        %978 = vmatprep.subr.bf16.mxu0 0
        %979 = vmatpush1.bf16.msra.mxu0 0
        %980 = vmatprep.subr.bf16.mxu0 0
        %981 = vmatpush1.bf16.msra.mxu0 0
        %982 = vmatprep.subr.bf16.mxu0 0
        %983 = vmatpush1.bf16.msra.mxu0 0
        %984 = vmatprep.subr.bf16.mxu0 0
        %985 = vmatpush1.bf16.msra.mxu0 0
        %986 = vmatprep.subr.bf16.mxu0 0
        %987 = vmatpush1.bf16.msra.mxu0 0
        %988 = vmatprep.subr.bf16.mxu0 0
        %989 = vmatpush1.bf16.msra.mxu0 0
        %990 = vmatprep.subr.bf16.mxu0 0
        %991 = vmatpush1.bf16.msra.mxu0 0
        %992 = vmatprep.subr.bf16.mxu0 0
        %993 = vmatpush1.bf16.msra.mxu0 0
        %994 = vmatprep.subr.bf16.mxu0 0
        %995 = vmatpush1.bf16.msra.mxu0 0
        %996 = vmatprep.subr.bf16.mxu0 0
        %997 = vmatpush1.bf16.msra.mxu0 0
        %998 = vmatprep.subr.bf16.mxu0 0
        %999 = vmatpush1.bf16.msra.mxu0 0
        %1000 = vmatprep.subr.bf16.mxu0 0
        %1001 = vmatpush1.bf16.msra.mxu0 0
        %1002 = vmatprep.subr.bf16.mxu0 0
        %1003 = vmatpush1.bf16.msra.mxu0 0
        %1004 = vmatprep.mubr.bf16.mxu0 0
        %1005 = vmatmul.mubr.bf16.gmra.mrb[0].mxu0 %v523
        %v1006 = vpop.f32.mrb[0].mxu0
        %v1007 = vadd.f32 %v399, %v1006
        %v1008 = vpop.f32.mrb[0].mxu0
        %v1009 = vadd.f32 %v399, %v1008
        %v1010 = vpop.f32.mrb[0].mxu0
        %v1011 = vadd.f32 %v404, %v1010
        %v1012 = vpop.f32.mrb[0].mxu0
        %v1013 = vadd.f32 %v404, %v1012
        %1014 = vmatprep.mubr.bf16.mxu0 0
        %1015 = vmatmul.mubr.bf16.gmra.mrb[0].mxu0 %v526
        %v1016 = vpop.f32.mrb[0].mxu0
        %v1017 = vadd.f32 %v409, %v1016
        %v1018 = vpop.f32.mrb[0].mxu0
        %v1019 = vadd.f32 %v409, %v1018
        %v1020 = vpop.f32.mrb[0].mxu0
        %v1021 = vadd.f32 %v414, %v1020
        %v1022 = vpop.f32.mrb[0].mxu0
        %v1023 = vadd.f32 %v414, %v1022
        %1024 = vmatprep.mubr.bf16.mxu0 0
        %1025 = vmatmul.mubr.bf16.gmra.mrb[0].mxu0 %v529
        %v1026 = vpop.f32.mrb[0].mxu0
        %v1027 = vadd.f32 %v419, %v1026
        %v1028 = vpop.f32.mrb[0].mxu0
        %v1029 = vadd.f32 %v419, %v1028
        %v1030 = vpop.f32.mrb[0].mxu0
        %v1031 = vadd.f32 %v424, %v1030
        %v1032 = vpop.f32.mrb[0].mxu0
        %v1033 = vadd.f32 %v424, %v1032
        %1034 = vdwg.mxu0
        %v1035 = vld [vmem:[%s3] sm:$0xf]
        %v1036 = vld [vmem:[%s3 + $0x4] sm:$0xf]
        %v1037 = vld [vmem:[%s3 + $0x8] sm:$0xf]
        %v1038 = vld [vmem:[%s3 + $0xc] sm:$0xf]
        %v1039 = vld [vmem:[%s3 + $0x10] sm:$0xf]
        %1040 = vset.pattern.permute.xlu0 1
        %1041 = vperm.xlu0 %1040, %v384
        %v1042 = vpop.permute.xlu0 %1041
        %1044 = vset.pattern.permute.xlu0 1
        %1045 = vperm.xlu0 %1044, %v385
        %v1046 = vpop.permute.xlu0 %1045
        %1048 = vset.pattern.permute.xlu0 1
        %1049 = vperm.xlu0 %1048, %v386
        %v1050 = vpop.permute.xlu0 %1049
        %1052 = vset.pattern.permute.xlu0 1
        %1053 = vperm.xlu0 %1052, %v387
        %v1054 = vpop.permute.xlu0 %1053
        %1056 = vset.pattern.permute.xlu0 1
        %1057 = vperm.xlu0 %1056, %v388
        %v1058 = vpop.permute.xlu0 %1057
        %v1065 = vunpack.c.l.b16 %v1035
        %v1066 = vunpack.c.l.b16 %v1036
        %v1067 = vunpack.c.l.b16 %v1037
        %v1068 = vunpack.c.l.b16 %v1038
        %v1069 = vunpack.c.l.b16 %v1039
        %v1070 = vpack.c.b16 %v1066, %v1065
        %v1071 = vpack.c.b16 %v1068, %v1067
        %v1072 = vpack.c.b16 %v1069, %v1069
        %v1105 = vunpack.c.l.b16 %v352
        %v1106 = vunpack.c.h.b16 %v352
        %v1107 = vunpack.c.l.b16 %v353
        %v1108 = vunpack.c.h.b16 %v353
        %v1109 = vunpack.c.l.b16 %v354
        %v1110 = vunpack.c.h.b16 %v354
        %v1111 = vunpack.c.l.b16 %v355
        %v1112 = vunpack.c.h.b16 %v355
        %v1113 = vunpack.c.l.b16 %v356
        %v1114 = vunpack.c.h.b16 %v356
        %v1115 = vunpack.c.l.b16 %v357
        %v1116 = vunpack.c.h.b16 %v357
        %v1117 = vunpack.c.l.b16 %v358
        %v1118 = vunpack.c.h.b16 %v358
        %v1119 = vunpack.c.l.b16 %v359
        %v1120 = vunpack.c.h.b16 %v359
        %v1121 = vunpack.c.l.b16 %v360
        %v1122 = vunpack.c.h.b16 %v360
        %v1123 = vunpack.c.l.b16 %v361
        %v1124 = vunpack.c.h.b16 %v361
        %v1125 = vunpack.c.l.b16 %v362
        %v1126 = vunpack.c.h.b16 %v362
        %v1127 = vunpack.c.l.b16 %v363
        %v1128 = vunpack.c.h.b16 %v363
        %v1129 = vunpack.c.l.b16 %v364
        %v1130 = vunpack.c.h.b16 %v364
        %v1131 = vunpack.c.l.b16 %v365
        %v1132 = vunpack.c.h.b16 %v365
        %v1133 = vunpack.c.l.b16 %v366
        %v1134 = vunpack.c.h.b16 %v366
        %v1135 = vunpack.c.l.b16 %v367
        %v1136 = vunpack.c.h.b16 %v367
        %v1137 = vunpack.c.l.b16 %v368
        %v1138 = vunpack.c.h.b16 %v368
        %v1139 = vunpack.c.l.b16 %v369
        %v1140 = vunpack.c.h.b16 %v369
        %v1141 = vunpack.c.l.b16 %v370
        %v1142 = vunpack.c.h.b16 %v370
        %v1143 = vunpack.c.l.b16 %v371
        %v1144 = vunpack.c.h.b16 %v371
        %v1145 = vunpack.c.l.b16 %v372
        %v1146 = vunpack.c.h.b16 %v372
        %v1147 = vunpack.c.l.b16 %v373
        %v1148 = vunpack.c.h.b16 %v373
        %v1149 = vunpack.c.l.b16 %v374
        %v1150 = vunpack.c.h.b16 %v374
        %v1151 = vunpack.c.l.b16 %v375
        %v1152 = vunpack.c.h.b16 %v375
        %v1153 = vunpack.c.l.b16 %v376
        %v1154 = vunpack.c.h.b16 %v376
        %v1155 = vunpack.c.l.b16 %v377
        %v1156 = vunpack.c.h.b16 %v377
        %v1157 = vunpack.c.l.b16 %v378
        %v1158 = vunpack.c.h.b16 %v378
        %v1159 = vunpack.c.l.b16 %v379
        %v1160 = vunpack.c.h.b16 %v379
        %v1161 = vunpack.c.l.b16 %v380
        %v1162 = vunpack.c.h.b16 %v380
        %v1163 = vunpack.c.l.b16 %v381
        %v1164 = vunpack.c.h.b16 %v381
        %v1165 = vunpack.c.l.b16 %v382
        %v1166 = vunpack.c.h.b16 %v382
        %v1167 = vunpack.c.l.b16 %v383
        %v1168 = vunpack.c.h.b16 %v383
        %v1169 = vpack.c.b16 %v1121, %v1105
        %v1170 = vpack.c.b16 %v1122, %v1106
        %v1171 = vpack.c.b16 %v1123, %v1107
        %v1172 = vpack.c.b16 %v1124, %v1108
        %v1173 = vpack.c.b16 %v1125, %v1109
        %v1174 = vpack.c.b16 %v1126, %v1110
        %v1175 = vpack.c.b16 %v1127, %v1111
        %v1176 = vpack.c.b16 %v1128, %v1112
        %v1177 = vpack.c.b16 %v1129, %v1113
        %v1178 = vpack.c.b16 %v1130, %v1114
        %v1179 = vpack.c.b16 %v1131, %v1115
        %v1180 = vpack.c.b16 %v1132, %v1116
        %v1181 = vpack.c.b16 %v1133, %v1117
        %v1182 = vpack.c.b16 %v1134, %v1118
        %v1183 = vpack.c.b16 %v1135, %v1119
        %v1184 = vpack.c.b16 %v1136, %v1120
        %v1185 = vpack.c.b16 %v1153, %v1137
        %v1186 = vpack.c.b16 %v1154, %v1138
        %v1187 = vpack.c.b16 %v1155, %v1139
        %v1188 = vpack.c.b16 %v1156, %v1140
        %v1189 = vpack.c.b16 %v1157, %v1141
        %v1190 = vpack.c.b16 %v1158, %v1142
        %v1191 = vpack.c.b16 %v1159, %v1143
        %v1192 = vpack.c.b16 %v1160, %v1144
        %v1193 = vpack.c.b16 %v1161, %v1145
        %v1194 = vpack.c.b16 %v1162, %v1146
        %v1195 = vpack.c.b16 %v1163, %v1147
        %v1196 = vpack.c.b16 %v1164, %v1148
        %v1197 = vpack.c.b16 %v1165, %v1149
        %v1198 = vpack.c.b16 %v1166, %v1150
        %v1199 = vpack.c.b16 %v1167, %v1151
        %v1200 = vpack.c.b16 %v1168, %v1152
        %vm1233 = vcmask 261120
        %v1235 = vsel %vm1233, %v1070, 0
        %v1238 = vsel %vm1233, %v1071, 0
        %v1241 = vsel %vm1233, %v1072, 0
        %1243 = vmatprep.subr.bf16.mxu0 %v1170
        %1244 = vmatpush1.bf16.msra.mxu0 %v1169
        %1245 = vmatprep.subr.bf16.mxu0 %v1186
        %1246 = vmatpush1.bf16.msra.mxu0 %v1185
        %1247 = vmatprep.subr.bf16.mxu0 0
        %1248 = vmatpush1.bf16.msra.mxu0 0
        %1249 = vmatprep.subr.bf16.mxu0 0
        %1250 = vmatpush1.bf16.msra.mxu0 0
        %1251 = vmatprep.subr.bf16.mxu0 0
        %1252 = vmatpush1.bf16.msra.mxu0 0
        %1253 = vmatprep.subr.bf16.mxu0 0
        %1254 = vmatpush1.bf16.msra.mxu0 0
        %1255 = vmatprep.subr.bf16.mxu0 0
        %1256 = vmatpush1.bf16.msra.mxu0 0
        %1257 = vmatprep.subr.bf16.mxu0 0
        %1258 = vmatpush1.bf16.msra.mxu0 0
        %1259 = vmatprep.subr.bf16.mxu0 0
        %1260 = vmatpush1.bf16.msra.mxu0 0
        %1261 = vmatprep.subr.bf16.mxu0 0
        %1262 = vmatpush1.bf16.msra.mxu0 0
        %1263 = vmatprep.subr.bf16.mxu0 0
        %1264 = vmatpush1.bf16.msra.mxu0 0
        %1265 = vmatprep.subr.bf16.mxu0 0
        %1266 = vmatpush1.bf16.msra.mxu0 0
        %1267 = vmatprep.subr.bf16.mxu0 0
        %1268 = vmatpush1.bf16.msra.mxu0 0
        %1269 = vmatprep.subr.bf16.mxu0 0
        %1270 = vmatpush1.bf16.msra.mxu0 0
        %1271 = vmatprep.subr.bf16.mxu0 0
        %1272 = vmatpush1.bf16.msra.mxu0 0
        %1273 = vmatprep.subr.bf16.mxu0 0
        %1274 = vmatpush1.bf16.msra.mxu0 0
        %1275 = vmatprep.mubr.bf16.mxu0 0
        %1276 = vmatmul.mubr.bf16.gmra.mrb[0].mxu0 %v1235
        %v1277 = vpop.f32.mrb[0].mxu0
        %v1278 = vadd.f32 %v1042, %v1277
        %v1279 = vpop.f32.mrb[0].mxu0
        %v1280 = vadd.f32 %v1042, %v1279
        %v1281 = vpop.f32.mrb[0].mxu0
        %v1282 = vadd.f32 %v1046, %v1281
        %v1283 = vpop.f32.mrb[0].mxu0
        %v1284 = vadd.f32 %v1046, %v1283
        %1285 = vmatprep.mubr.bf16.mxu0 0
        %1286 = vmatmul.mubr.bf16.gmra.mrb[0].mxu0 %v1238
        %v1287 = vpop.f32.mrb[0].mxu0
        %v1288 = vadd.f32 %v1050, %v1287
        %v1289 = vpop.f32.mrb[0].mxu0
        %v1290 = vadd.f32 %v1050, %v1289
        %v1291 = vpop.f32.mrb[0].mxu0
        %v1292 = vadd.f32 %v1054, %v1291
        %v1293 = vpop.f32.mrb[0].mxu0
        %v1294 = vadd.f32 %v1054, %v1293
        %1295 = vmatprep.mubr.bf16.mxu0 0
        %1296 = vmatmul.mubr.bf16.gmra.mrb[0].mxu0 %v1241
        %v1297 = vpop.f32.mrb[0].mxu0
        %v1298 = vadd.f32 %v1058, %v1297
        %v1299 = vpop.f32.mrb[0].mxu0
        %v1300 = vadd.f32 %v1058, %v1299
        %v1301 = vpop.f32.mrb[0].mxu0
        %v1302 = vpop.f32.mrb[0].mxu0
        %1303 = vdwg.mxu0
        %1304 = vmatprep.subr.bf16.mxu0 %v1172
        %1305 = vmatpush1.bf16.msra.mxu0 %v1171
        %1306 = vmatprep.subr.bf16.mxu0 %v1188
        %1307 = vmatpush1.bf16.msra.mxu0 %v1187
        %1308 = vmatprep.subr.bf16.mxu0 0
        %1309 = vmatpush1.bf16.msra.mxu0 0
        %1310 = vmatprep.subr.bf16.mxu0 0
        %1311 = vmatpush1.bf16.msra.mxu0 0
        %1312 = vmatprep.subr.bf16.mxu0 0
        %1313 = vmatpush1.bf16.msra.mxu0 0
        %1314 = vmatprep.subr.bf16.mxu0 0
        %1315 = vmatpush1.bf16.msra.mxu0 0
        %1316 = vmatprep.subr.bf16.mxu0 0
        %1317 = vmatpush1.bf16.msra.mxu0 0
        %1318 = vmatprep.subr.bf16.mxu0 0
        %1319 = vmatpush1.bf16.msra.mxu0 0
        %1320 = vmatprep.subr.bf16.mxu0 0
        %1321 = vmatpush1.bf16.msra.mxu0 0
        %1322 = vmatprep.subr.bf16.mxu0 0
        %1323 = vmatpush1.bf16.msra.mxu0 0
        %1324 = vmatprep.subr.bf16.mxu0 0
        %1325 = vmatpush1.bf16.msra.mxu0 0
        %1326 = vmatprep.subr.bf16.mxu0 0
        %1327 = vmatpush1.bf16.msra.mxu0 0
        %1328 = vmatprep.subr.bf16.mxu0 0
        %1329 = vmatpush1.bf16.msra.mxu0 0
        %1330 = vmatprep.subr.bf16.mxu0 0
        %1331 = vmatpush1.bf16.msra.mxu0 0
        %1332 = vmatprep.subr.bf16.mxu0 0
        %1333 = vmatpush1.bf16.msra.mxu0 0
        %1334 = vmatprep.subr.bf16.mxu0 0
        %1335 = vmatpush1.bf16.msra.mxu0 0
        %1336 = vmatprep.mubr.bf16.mxu0 0
        %1337 = vmatmul.mubr.bf16.gmra.mrb[0].mxu0 %v1235
        %v1338 = vpop.f32.mrb[0].mxu0
        %v1339 = vadd.f32 %v1042, %v1338
        %v1340 = vpop.f32.mrb[0].mxu0
        %v1341 = vadd.f32 %v1042, %v1340
        %v1342 = vpop.f32.mrb[0].mxu0
        %v1343 = vadd.f32 %v1046, %v1342
        %v1344 = vpop.f32.mrb[0].mxu0
        %v1345 = vadd.f32 %v1046, %v1344
        %1346 = vmatprep.mubr.bf16.mxu0 0
        %1347 = vmatmul.mubr.bf16.gmra.mrb[0].mxu0 %v1238
        %v1348 = vpop.f32.mrb[0].mxu0
        %v1349 = vadd.f32 %v1050, %v1348
        %v1350 = vpop.f32.mrb[0].mxu0
        %v1351 = vadd.f32 %v1050, %v1350
        %v1352 = vpop.f32.mrb[0].mxu0
        %v1353 = vadd.f32 %v1054, %v1352
        %v1354 = vpop.f32.mrb[0].mxu0
        %v1355 = vadd.f32 %v1054, %v1354
        %1356 = vmatprep.mubr.bf16.mxu0 0
        %1357 = vmatmul.mubr.bf16.gmra.mrb[0].mxu0 %v1241
        %v1358 = vpop.f32.mrb[0].mxu0
        %v1359 = vadd.f32 %v1058, %v1358
        %v1360 = vpop.f32.mrb[0].mxu0
        %v1361 = vadd.f32 %v1058, %v1360
        %v1362 = vpop.f32.mrb[0].mxu0
        %v1363 = vpop.f32.mrb[0].mxu0
        %1364 = vdwg.mxu0
        %1365 = vmatprep.subr.bf16.mxu0 %v1174
        %1366 = vmatpush1.bf16.msra.mxu0 %v1173
        %1367 = vmatprep.subr.bf16.mxu0 %v1190
        %1368 = vmatpush1.bf16.msra.mxu0 %v1189
        %1369 = vmatprep.subr.bf16.mxu0 0
        %1370 = vmatpush1.bf16.msra.mxu0 0
        %1371 = vmatprep.subr.bf16.mxu0 0
        %1372 = vmatpush1.bf16.msra.mxu0 0
        %1373 = vmatprep.subr.bf16.mxu0 0
        %1374 = vmatpush1.bf16.msra.mxu0 0
        %1375 = vmatprep.subr.bf16.mxu0 0
        %1376 = vmatpush1.bf16.msra.mxu0 0
        %1377 = vmatprep.subr.bf16.mxu0 0
        %1378 = vmatpush1.bf16.msra.mxu0 0
        %1379 = vmatprep.subr.bf16.mxu0 0
        %1380 = vmatpush1.bf16.msra.mxu0 0
        %1381 = vmatprep.subr.bf16.mxu0 0
        %1382 = vmatpush1.bf16.msra.mxu0 0
        %1383 = vmatprep.subr.bf16.mxu0 0
        %1384 = vmatpush1.bf16.msra.mxu0 0
        %1385 = vmatprep.subr.bf16.mxu0 0
        %1386 = vmatpush1.bf16.msra.mxu0 0
        %1387 = vmatprep.subr.bf16.mxu0 0
        %1388 = vmatpush1.bf16.msra.mxu0 0
        %1389 = vmatprep.subr.bf16.mxu0 0
        %1390 = vmatpush1.bf16.msra.mxu0 0
        %1391 = vmatprep.subr.bf16.mxu0 0
        %1392 = vmatpush1.bf16.msra.mxu0 0
        %1393 = vmatprep.subr.bf16.mxu0 0
        %1394 = vmatpush1.bf16.msra.mxu0 0
        %1395 = vmatprep.subr.bf16.mxu0 0
        %1396 = vmatpush1.bf16.msra.mxu0 0
        %1397 = vmatprep.mubr.bf16.mxu0 0
        %1398 = vmatmul.mubr.bf16.gmra.mrb[0].mxu0 %v1235
        %v1399 = vpop.f32.mrb[0].mxu0
        %v1400 = vadd.f32 %v1042, %v1399
        %v1401 = vpop.f32.mrb[0].mxu0
        %v1402 = vadd.f32 %v1042, %v1401
        %v1403 = vpop.f32.mrb[0].mxu0
        %v1404 = vadd.f32 %v1046, %v1403
        %v1405 = vpop.f32.mrb[0].mxu0
        %v1406 = vadd.f32 %v1046, %v1405
        %1407 = vmatprep.mubr.bf16.mxu0 0
        %1408 = vmatmul.mubr.bf16.gmra.mrb[0].mxu0 %v1238
        %v1409 = vpop.f32.mrb[0].mxu0
        %v1410 = vadd.f32 %v1050, %v1409
        %v1411 = vpop.f32.mrb[0].mxu0
        %v1412 = vadd.f32 %v1050, %v1411
        %v1413 = vpop.f32.mrb[0].mxu0
        %v1414 = vadd.f32 %v1054, %v1413
        %v1415 = vpop.f32.mrb[0].mxu0
        %v1416 = vadd.f32 %v1054, %v1415
        %1417 = vmatprep.mubr.bf16.mxu0 0
        %1418 = vmatmul.mubr.bf16.gmra.mrb[0].mxu0 %v1241
        %v1419 = vpop.f32.mrb[0].mxu0
        %v1420 = vadd.f32 %v1058, %v1419
        %v1421 = vpop.f32.mrb[0].mxu0
        %v1422 = vadd.f32 %v1058, %v1421
        %v1423 = vpop.f32.mrb[0].mxu0
        %v1424 = vpop.f32.mrb[0].mxu0
        %1425 = vdwg.mxu0
        %1426 = vmatprep.subr.bf16.mxu0 %v1176
        %1427 = vmatpush1.bf16.msra.mxu0 %v1175
        %1428 = vmatprep.subr.bf16.mxu0 %v1192
        %1429 = vmatpush1.bf16.msra.mxu0 %v1191
        %1430 = vmatprep.subr.bf16.mxu0 0
        %1431 = vmatpush1.bf16.msra.mxu0 0
        %1432 = vmatprep.subr.bf16.mxu0 0
        %1433 = vmatpush1.bf16.msra.mxu0 0
        %1434 = vmatprep.subr.bf16.mxu0 0
        %1435 = vmatpush1.bf16.msra.mxu0 0
        %1436 = vmatprep.subr.bf16.mxu0 0
        %1437 = vmatpush1.bf16.msra.mxu0 0
        %1438 = vmatprep.subr.bf16.mxu0 0
        %1439 = vmatpush1.bf16.msra.mxu0 0
        %1440 = vmatprep.subr.bf16.mxu0 0
        %1441 = vmatpush1.bf16.msra.mxu0 0
        %1442 = vmatprep.subr.bf16.mxu0 0
        %1443 = vmatpush1.bf16.msra.mxu0 0
        %1444 = vmatprep.subr.bf16.mxu0 0
        %1445 = vmatpush1.bf16.msra.mxu0 0
        %1446 = vmatprep.subr.bf16.mxu0 0
        %1447 = vmatpush1.bf16.msra.mxu0 0
        %1448 = vmatprep.subr.bf16.mxu0 0
        %1449 = vmatpush1.bf16.msra.mxu0 0
        %1450 = vmatprep.subr.bf16.mxu0 0
        %1451 = vmatpush1.bf16.msra.mxu0 0
        %1452 = vmatprep.subr.bf16.mxu0 0
        %1453 = vmatpush1.bf16.msra.mxu0 0
        %1454 = vmatprep.subr.bf16.mxu0 0
        %1455 = vmatpush1.bf16.msra.mxu0 0
        %1456 = vmatprep.subr.bf16.mxu0 0
        %1457 = vmatpush1.bf16.msra.mxu0 0
        %1458 = vmatprep.mubr.bf16.mxu0 0
        %1459 = vmatmul.mubr.bf16.gmra.mrb[0].mxu0 %v1235
        %v1460 = vpop.f32.mrb[0].mxu0
        %v1461 = vadd.f32 %v1042, %v1460
        %v1462 = vpop.f32.mrb[0].mxu0
        %v1463 = vadd.f32 %v1042, %v1462
        %v1464 = vpop.f32.mrb[0].mxu0
        %v1465 = vadd.f32 %v1046, %v1464
        %v1466 = vpop.f32.mrb[0].mxu0
        %v1467 = vadd.f32 %v1046, %v1466
        %1468 = vmatprep.mubr.bf16.mxu0 0
        %1469 = vmatmul.mubr.bf16.gmra.mrb[0].mxu0 %v1238
        %v1470 = vpop.f32.mrb[0].mxu0
        %v1471 = vadd.f32 %v1050, %v1470
        %v1472 = vpop.f32.mrb[0].mxu0
        %v1473 = vadd.f32 %v1050, %v1472
        %v1474 = vpop.f32.mrb[0].mxu0
        %v1475 = vadd.f32 %v1054, %v1474
        %v1476 = vpop.f32.mrb[0].mxu0
        %v1477 = vadd.f32 %v1054, %v1476
        %1478 = vmatprep.mubr.bf16.mxu0 0
        %1479 = vmatmul.mubr.bf16.gmra.mrb[0].mxu0 %v1241
        %v1480 = vpop.f32.mrb[0].mxu0
        %v1481 = vadd.f32 %v1058, %v1480
        %v1482 = vpop.f32.mrb[0].mxu0
        %v1483 = vadd.f32 %v1058, %v1482
        %v1484 = vpop.f32.mrb[0].mxu0
        %v1485 = vpop.f32.mrb[0].mxu0
        %1486 = vdwg.mxu0
        %1487 = vmatprep.subr.bf16.mxu0 %v1178
        %1488 = vmatpush1.bf16.msra.mxu0 %v1177
        %1489 = vmatprep.subr.bf16.mxu0 %v1194
        %1490 = vmatpush1.bf16.msra.mxu0 %v1193
        %1491 = vmatprep.subr.bf16.mxu0 0
        %1492 = vmatpush1.bf16.msra.mxu0 0
        %1493 = vmatprep.subr.bf16.mxu0 0
        %1494 = vmatpush1.bf16.msra.mxu0 0
        %1495 = vmatprep.subr.bf16.mxu0 0
        %1496 = vmatpush1.bf16.msra.mxu0 0
        %1497 = vmatprep.subr.bf16.mxu0 0
        %1498 = vmatpush1.bf16.msra.mxu0 0
        %1499 = vmatprep.subr.bf16.mxu0 0
        %1500 = vmatpush1.bf16.msra.mxu0 0
        %1501 = vmatprep.subr.bf16.mxu0 0
        %1502 = vmatpush1.bf16.msra.mxu0 0
        %1503 = vmatprep.subr.bf16.mxu0 0
        %1504 = vmatpush1.bf16.msra.mxu0 0
        %1505 = vmatprep.subr.bf16.mxu0 0
        %1506 = vmatpush1.bf16.msra.mxu0 0
        %1507 = vmatprep.subr.bf16.mxu0 0
        %1508 = vmatpush1.bf16.msra.mxu0 0
        %1509 = vmatprep.subr.bf16.mxu0 0
        %1510 = vmatpush1.bf16.msra.mxu0 0
        %1511 = vmatprep.subr.bf16.mxu0 0
        %1512 = vmatpush1.bf16.msra.mxu0 0
        %1513 = vmatprep.subr.bf16.mxu0 0
        %1514 = vmatpush1.bf16.msra.mxu0 0
        %1515 = vmatprep.subr.bf16.mxu0 0
        %1516 = vmatpush1.bf16.msra.mxu0 0
        %1517 = vmatprep.subr.bf16.mxu0 0
        %1518 = vmatpush1.bf16.msra.mxu0 0
        %1519 = vmatprep.mubr.bf16.mxu0 0
        %1520 = vmatmul.mubr.bf16.gmra.mrb[0].mxu0 %v1235
        %v1521 = vpop.f32.mrb[0].mxu0
        %v1522 = vadd.f32 %v1042, %v1521
        %v1523 = vpop.f32.mrb[0].mxu0
        %v1524 = vadd.f32 %v1042, %v1523
        %v1525 = vpop.f32.mrb[0].mxu0
        %v1526 = vadd.f32 %v1046, %v1525
        %v1527 = vpop.f32.mrb[0].mxu0
        %v1528 = vadd.f32 %v1046, %v1527
        %1529 = vmatprep.mubr.bf16.mxu0 0
        %1530 = vmatmul.mubr.bf16.gmra.mrb[0].mxu0 %v1238
        %v1531 = vpop.f32.mrb[0].mxu0
        %v1532 = vadd.f32 %v1050, %v1531
        %v1533 = vpop.f32.mrb[0].mxu0
        %v1534 = vadd.f32 %v1050, %v1533
        %v1535 = vpop.f32.mrb[0].mxu0
        %v1536 = vadd.f32 %v1054, %v1535
        %v1537 = vpop.f32.mrb[0].mxu0
        %v1538 = vadd.f32 %v1054, %v1537
        %1539 = vmatprep.mubr.bf16.mxu0 0
        %1540 = vmatmul.mubr.bf16.gmra.mrb[0].mxu0 %v1241
        %v1541 = vpop.f32.mrb[0].mxu0
        %v1542 = vadd.f32 %v1058, %v1541
        %v1543 = vpop.f32.mrb[0].mxu0
        %v1544 = vadd.f32 %v1058, %v1543
        %v1545 = vpop.f32.mrb[0].mxu0
        %v1546 = vpop.f32.mrb[0].mxu0
        %1547 = vdwg.mxu0
        %1548 = vmatprep.subr.bf16.mxu0 %v1180
        %1549 = vmatpush1.bf16.msra.mxu0 %v1179
        %1550 = vmatprep.subr.bf16.mxu0 %v1196
        %1551 = vmatpush1.bf16.msra.mxu0 %v1195
        %1552 = vmatprep.subr.bf16.mxu0 0
        %1553 = vmatpush1.bf16.msra.mxu0 0
        %1554 = vmatprep.subr.bf16.mxu0 0
        %1555 = vmatpush1.bf16.msra.mxu0 0
        %1556 = vmatprep.subr.bf16.mxu0 0
        %1557 = vmatpush1.bf16.msra.mxu0 0
        %1558 = vmatprep.subr.bf16.mxu0 0
        %1559 = vmatpush1.bf16.msra.mxu0 0
        %1560 = vmatprep.subr.bf16.mxu0 0
        %1561 = vmatpush1.bf16.msra.mxu0 0
        %1562 = vmatprep.subr.bf16.mxu0 0
        %1563 = vmatpush1.bf16.msra.mxu0 0
        %1564 = vmatprep.subr.bf16.mxu0 0
        %1565 = vmatpush1.bf16.msra.mxu0 0
        %1566 = vmatprep.subr.bf16.mxu0 0
        %1567 = vmatpush1.bf16.msra.mxu0 0
        %1568 = vmatprep.subr.bf16.mxu0 0
        %1569 = vmatpush1.bf16.msra.mxu0 0
        %1570 = vmatprep.subr.bf16.mxu0 0
        %1571 = vmatpush1.bf16.msra.mxu0 0
        %1572 = vmatprep.subr.bf16.mxu0 0
        %1573 = vmatpush1.bf16.msra.mxu0 0
        %1574 = vmatprep.subr.bf16.mxu0 0
        %1575 = vmatpush1.bf16.msra.mxu0 0
        %1576 = vmatprep.subr.bf16.mxu0 0
        %1577 = vmatpush1.bf16.msra.mxu0 0
        %1578 = vmatprep.subr.bf16.mxu0 0
        %1579 = vmatpush1.bf16.msra.mxu0 0
        %1580 = vmatprep.mubr.bf16.mxu0 0
        %1581 = vmatmul.mubr.bf16.gmra.mrb[0].mxu0 %v1235
        %v1582 = vpop.f32.mrb[0].mxu0
        %v1583 = vadd.f32 %v1042, %v1582
        %v1584 = vpop.f32.mrb[0].mxu0
        %v1585 = vadd.f32 %v1042, %v1584
        %v1586 = vpop.f32.mrb[0].mxu0
        %v1587 = vadd.f32 %v1046, %v1586
        %v1588 = vpop.f32.mrb[0].mxu0
        %v1589 = vadd.f32 %v1046, %v1588
        %1590 = vmatprep.mubr.bf16.mxu0 0
        %1591 = vmatmul.mubr.bf16.gmra.mrb[0].mxu0 %v1238
        %v1592 = vpop.f32.mrb[0].mxu0
        %v1593 = vadd.f32 %v1050, %v1592
        %v1594 = vpop.f32.mrb[0].mxu0
        %v1595 = vadd.f32 %v1050, %v1594
        %v1596 = vpop.f32.mrb[0].mxu0
        %v1597 = vadd.f32 %v1054, %v1596
        %v1598 = vpop.f32.mrb[0].mxu0
        %v1599 = vadd.f32 %v1054, %v1598
        %1600 = vmatprep.mubr.bf16.mxu0 0
        %1601 = vmatmul.mubr.bf16.gmra.mrb[0].mxu0 %v1241
        %v1602 = vpop.f32.mrb[0].mxu0
        %v1603 = vadd.f32 %v1058, %v1602
        %v1604 = vpop.f32.mrb[0].mxu0
        %v1605 = vadd.f32 %v1058, %v1604
        %v1606 = vpop.f32.mrb[0].mxu0
        %v1607 = vpop.f32.mrb[0].mxu0
        %1608 = vdwg.mxu0
        %1609 = vmatprep.subr.bf16.mxu0 %v1182
        %1610 = vmatpush1.bf16.msra.mxu0 %v1181
        %1611 = vmatprep.subr.bf16.mxu0 %v1198
        %1612 = vmatpush1.bf16.msra.mxu0 %v1197
        %1613 = vmatprep.subr.bf16.mxu0 0
        %1614 = vmatpush1.bf16.msra.mxu0 0
        %1615 = vmatprep.subr.bf16.mxu0 0
        %1616 = vmatpush1.bf16.msra.mxu0 0
        %1617 = vmatprep.subr.bf16.mxu0 0
        %1618 = vmatpush1.bf16.msra.mxu0 0
        %1619 = vmatprep.subr.bf16.mxu0 0
        %1620 = vmatpush1.bf16.msra.mxu0 0
        %1621 = vmatprep.subr.bf16.mxu0 0
        %1622 = vmatpush1.bf16.msra.mxu0 0
        %1623 = vmatprep.subr.bf16.mxu0 0
        %1624 = vmatpush1.bf16.msra.mxu0 0
        %1625 = vmatprep.subr.bf16.mxu0 0
        %1626 = vmatpush1.bf16.msra.mxu0 0
        %1627 = vmatprep.subr.bf16.mxu0 0
        %1628 = vmatpush1.bf16.msra.mxu0 0
        %1629 = vmatprep.subr.bf16.mxu0 0
        %1630 = vmatpush1.bf16.msra.mxu0 0
        %1631 = vmatprep.subr.bf16.mxu0 0
        %1632 = vmatpush1.bf16.msra.mxu0 0
        %1633 = vmatprep.subr.bf16.mxu0 0
        %1634 = vmatpush1.bf16.msra.mxu0 0
        %1635 = vmatprep.subr.bf16.mxu0 0
        %1636 = vmatpush1.bf16.msra.mxu0 0
        %1637 = vmatprep.subr.bf16.mxu0 0
        %1638 = vmatpush1.bf16.msra.mxu0 0
        %1639 = vmatprep.subr.bf16.mxu0 0
        %1640 = vmatpush1.bf16.msra.mxu0 0
        %1641 = vmatprep.mubr.bf16.mxu0 0
        %1642 = vmatmul.mubr.bf16.gmra.mrb[0].mxu0 %v1235
        %v1643 = vpop.f32.mrb[0].mxu0
        %v1644 = vadd.f32 %v1042, %v1643
        %v1645 = vpop.f32.mrb[0].mxu0
        %v1646 = vadd.f32 %v1042, %v1645
        %v1647 = vpop.f32.mrb[0].mxu0
        %v1648 = vadd.f32 %v1046, %v1647
        %v1649 = vpop.f32.mrb[0].mxu0
        %v1650 = vadd.f32 %v1046, %v1649
        %1651 = vmatprep.mubr.bf16.mxu0 0
        %1652 = vmatmul.mubr.bf16.gmra.mrb[0].mxu0 %v1238
        %v1653 = vpop.f32.mrb[0].mxu0
        %v1654 = vadd.f32 %v1050, %v1653
        %v1655 = vpop.f32.mrb[0].mxu0
        %v1656 = vadd.f32 %v1050, %v1655
        %v1657 = vpop.f32.mrb[0].mxu0
        %v1658 = vadd.f32 %v1054, %v1657
        %v1659 = vpop.f32.mrb[0].mxu0
        %v1660 = vadd.f32 %v1054, %v1659
        %1661 = vmatprep.mubr.bf16.mxu0 0
        %1662 = vmatmul.mubr.bf16.gmra.mrb[0].mxu0 %v1241
        %v1663 = vpop.f32.mrb[0].mxu0
        %v1664 = vadd.f32 %v1058, %v1663
        %v1665 = vpop.f32.mrb[0].mxu0
        %v1666 = vadd.f32 %v1058, %v1665
        %v1667 = vpop.f32.mrb[0].mxu0
        %v1668 = vpop.f32.mrb[0].mxu0
        %1669 = vdwg.mxu0
        %1670 = vmatprep.subr.bf16.mxu0 %v1184
        %1671 = vmatpush1.bf16.msra.mxu0 %v1183
        %1672 = vmatprep.subr.bf16.mxu0 %v1200
        %1673 = vmatpush1.bf16.msra.mxu0 %v1199
        %1674 = vmatprep.subr.bf16.mxu0 0
        %1675 = vmatpush1.bf16.msra.mxu0 0
        %1676 = vmatprep.subr.bf16.mxu0 0
        %1677 = vmatpush1.bf16.msra.mxu0 0
        %1678 = vmatprep.subr.bf16.mxu0 0
        %1679 = vmatpush1.bf16.msra.mxu0 0
        %1680 = vmatprep.subr.bf16.mxu0 0
        %1681 = vmatpush1.bf16.msra.mxu0 0
        %1682 = vmatprep.subr.bf16.mxu0 0
        %1683 = vmatpush1.bf16.msra.mxu0 0
        %1684 = vmatprep.subr.bf16.mxu0 0
        %1685 = vmatpush1.bf16.msra.mxu0 0
        %1686 = vmatprep.subr.bf16.mxu0 0
        %1687 = vmatpush1.bf16.msra.mxu0 0
        %1688 = vmatprep.subr.bf16.mxu0 0
        %1689 = vmatpush1.bf16.msra.mxu0 0
        %1690 = vmatprep.subr.bf16.mxu0 0
        %1691 = vmatpush1.bf16.msra.mxu0 0
        %1692 = vmatprep.subr.bf16.mxu0 0
        %1693 = vmatpush1.bf16.msra.mxu0 0
        %1694 = vmatprep.subr.bf16.mxu0 0
        %1695 = vmatpush1.bf16.msra.mxu0 0
        %1696 = vmatprep.subr.bf16.mxu0 0
        %1697 = vmatpush1.bf16.msra.mxu0 0
        %1698 = vmatprep.subr.bf16.mxu0 0
        %1699 = vmatpush1.bf16.msra.mxu0 0
        %1700 = vmatprep.subr.bf16.mxu0 0
        %1701 = vmatpush1.bf16.msra.mxu0 0
        %1702 = vmatprep.mubr.bf16.mxu0 0
        %1703 = vmatmul.mubr.bf16.gmra.mrb[0].mxu0 %v1235
        %v1704 = vpop.f32.mrb[0].mxu0
        %v1705 = vadd.f32 %v1042, %v1704
        %v1706 = vpop.f32.mrb[0].mxu0
        %v1707 = vadd.f32 %v1042, %v1706
        %v1708 = vpop.f32.mrb[0].mxu0
        %v1709 = vadd.f32 %v1046, %v1708
        %v1710 = vpop.f32.mrb[0].mxu0
        %v1711 = vadd.f32 %v1046, %v1710
        %1712 = vmatprep.mubr.bf16.mxu0 0
        %1713 = vmatmul.mubr.bf16.gmra.mrb[0].mxu0 %v1238
        %v1714 = vpop.f32.mrb[0].mxu0
        %v1715 = vadd.f32 %v1050, %v1714
        %v1716 = vpop.f32.mrb[0].mxu0
        %v1717 = vadd.f32 %v1050, %v1716
        %v1718 = vpop.f32.mrb[0].mxu0
        %v1719 = vadd.f32 %v1054, %v1718
        %v1720 = vpop.f32.mrb[0].mxu0
        %v1721 = vadd.f32 %v1054, %v1720
        %1722 = vmatprep.mubr.bf16.mxu0 0
        %1723 = vmatmul.mubr.bf16.gmra.mrb[0].mxu0 %v1241
        %v1724 = vpop.f32.mrb[0].mxu0
        %v1725 = vadd.f32 %v1058, %v1724
        %v1726 = vpop.f32.mrb[0].mxu0
        %v1727 = vadd.f32 %v1058, %v1726
        %v1728 = vpop.f32.mrb[0].mxu0
        %v1729 = vpop.f32.mrb[0].mxu0
        %1730 = vdwg.mxu0
        %v1731 = vmax.f32 %v566, 0.0
        %v1732 = vmax.f32 %v568, 0.0
        %v1733 = vmax.f32 %v629, 0.0
        %v1734 = vmax.f32 %v631, 0.0
        %v1735 = vmax.f32 %v692, 0.0
        %v1736 = vmax.f32 %v694, 0.0
        %v1737 = vmax.f32 %v755, 0.0
        %v1738 = vmax.f32 %v757, 0.0
        %v1739 = vmax.f32 %v818, 0.0
        %v1740 = vmax.f32 %v820, 0.0
        %v1741 = vmax.f32 %v881, 0.0
        %v1742 = vmax.f32 %v883, 0.0
        %v1743 = vmax.f32 %v944, 0.0
        %v1744 = vmax.f32 %v946, 0.0
        %v1745 = vmax.f32 %v1007, 0.0
        %v1746 = vmax.f32 %v1009, 0.0
        %v1747 = vmax.f32 %v570, 0.0
        %v1748 = vmax.f32 %v572, 0.0
        %v1749 = vmax.f32 %v633, 0.0
        %v1750 = vmax.f32 %v635, 0.0
        %v1751 = vmax.f32 %v696, 0.0
        %v1752 = vmax.f32 %v698, 0.0
        %v1753 = vmax.f32 %v759, 0.0
        %v1754 = vmax.f32 %v761, 0.0
        %v1755 = vmax.f32 %v822, 0.0
        %v1756 = vmax.f32 %v824, 0.0
        %v1757 = vmax.f32 %v885, 0.0
        %v1758 = vmax.f32 %v887, 0.0
        %v1759 = vmax.f32 %v948, 0.0
        %v1760 = vmax.f32 %v950, 0.0
        %v1761 = vmax.f32 %v1011, 0.0
        %v1762 = vmax.f32 %v1013, 0.0
        %v1763 = vmax.f32 %v576, 0.0
        %v1764 = vmax.f32 %v578, 0.0
        %v1765 = vmax.f32 %v639, 0.0
        %v1766 = vmax.f32 %v641, 0.0
        %v1767 = vmax.f32 %v702, 0.0
        %v1768 = vmax.f32 %v704, 0.0
        %v1769 = vmax.f32 %v765, 0.0
        %v1770 = vmax.f32 %v767, 0.0
        %v1771 = vmax.f32 %v828, 0.0
        %v1772 = vmax.f32 %v830, 0.0
        %v1773 = vmax.f32 %v891, 0.0
        %v1774 = vmax.f32 %v893, 0.0
        %v1775 = vmax.f32 %v954, 0.0
        %v1776 = vmax.f32 %v956, 0.0
        %v1777 = vmax.f32 %v1017, 0.0
        %v1778 = vmax.f32 %v1019, 0.0
        %v1779 = vmax.f32 %v580, 0.0
        %v1780 = vmax.f32 %v582, 0.0
        %v1781 = vmax.f32 %v643, 0.0
        %v1782 = vmax.f32 %v645, 0.0
        %v1783 = vmax.f32 %v706, 0.0
        %v1784 = vmax.f32 %v708, 0.0
        %v1785 = vmax.f32 %v769, 0.0
        %v1786 = vmax.f32 %v771, 0.0
        %v1787 = vmax.f32 %v832, 0.0
        %v1788 = vmax.f32 %v834, 0.0
        %v1789 = vmax.f32 %v895, 0.0
        %v1790 = vmax.f32 %v897, 0.0
        %v1791 = vmax.f32 %v958, 0.0
        %v1792 = vmax.f32 %v960, 0.0
        %v1793 = vmax.f32 %v1021, 0.0
        %v1794 = vmax.f32 %v1023, 0.0
        %v1795 = vmax.f32 %v590, 0.0
        %v1796 = vmax.f32 %v592, 0.0
        %v1797 = vmax.f32 %v653, 0.0
        %v1798 = vmax.f32 %v655, 0.0
        %v1799 = vmax.f32 %v716, 0.0
        %v1800 = vmax.f32 %v718, 0.0
        %v1801 = vmax.f32 %v779, 0.0
        %v1802 = vmax.f32 %v781, 0.0
        %v1803 = vmax.f32 %v842, 0.0
        %v1804 = vmax.f32 %v844, 0.0
        %v1805 = vmax.f32 %v905, 0.0
        %v1806 = vmax.f32 %v907, 0.0
        %v1807 = vmax.f32 %v968, 0.0
        %v1808 = vmax.f32 %v970, 0.0
        %v1809 = vmax.f32 %v1031, 0.0
        %v1810 = vmax.f32 %v1033, 0.0
        %v1811 = vadd.f32 %v586, %v1278
        %v1812 = vadd.f32 %v588, %v1280
        %v1813 = vadd.f32 %v649, %v1339
        %v1814 = vadd.f32 %v651, %v1341
        %v1815 = vadd.f32 %v712, %v1400
        %v1816 = vadd.f32 %v714, %v1402
        %v1817 = vadd.f32 %v775, %v1461
        %v1818 = vadd.f32 %v777, %v1463
        %v1819 = vadd.f32 %v838, %v1522
        %v1820 = vadd.f32 %v840, %v1524
        %v1821 = vadd.f32 %v901, %v1583
        %v1822 = vadd.f32 %v903, %v1585
        %v1823 = vadd.f32 %v964, %v1644
        %v1824 = vadd.f32 %v966, %v1646
        %v1825 = vadd.f32 %v1027, %v1705
        %v1826 = vadd.f32 %v1029, %v1707
        %v1827 = vtanh.pop %v1811
        %v1828 = vtanh.pop %v1812
        %v1829 = vtanh.pop %v1813
        %v1830 = vtanh.pop %v1814
        %v1831 = vtanh.pop %v1815
        %v1832 = vtanh.pop %v1816
        %v1833 = vtanh.pop %v1817
        %v1834 = vtanh.pop %v1818
        %v1835 = vtanh.pop %v1819
        %v1836 = vtanh.pop %v1820
        %v1837 = vtanh.pop %v1821
        %v1838 = vtanh.pop %v1822
        %v1839 = vtanh.pop %v1823
        %v1840 = vtanh.pop %v1824
        %v1841 = vtanh.pop %v1825
        %v1842 = vtanh.pop %v1826
        %1843 = vset.pattern.permute.xlu0 2
        %1844 = vperm.xlu0 %1843, %v384
        %v1845 = vpop.permute.xlu0 %1844
        %v1847 = vmul.f32 %v1827, %v1845
        %v1848 = vmul.f32 %v1828, %v1845
        %v1849 = vmul.f32 %v1829, %v1845
        %v1850 = vmul.f32 %v1830, %v1845
        %v1851 = vmul.f32 %v1831, %v1845
        %v1852 = vmul.f32 %v1832, %v1845
        %v1853 = vmul.f32 %v1833, %v1845
        %v1854 = vmul.f32 %v1834, %v1845
        %v1855 = vmul.f32 %v1835, %v1845
        %v1856 = vmul.f32 %v1836, %v1845
        %v1857 = vmul.f32 %v1837, %v1845
        %v1858 = vmul.f32 %v1838, %v1845
        %v1859 = vmul.f32 %v1839, %v1845
        %v1860 = vmul.f32 %v1840, %v1845
        %v1861 = vmul.f32 %v1841, %v1845
        %v1862 = vmul.f32 %v1842, %v1845
        %v1863 = vrot.slane %v1847, 4
        %v1864 = vadd.f32 %v1847, %v1863
        %v1865 = vrot.slane %v1864, 2
        %v1866 = vadd.f32 %v1864, %v1865
        %v1867 = vrot.slane %v1866, 1
        %v1868 = vadd.f32 %v1866, %v1867
        %v1869 = vrot.slane %v1848, 4
        %v1870 = vadd.f32 %v1848, %v1869
        %v1871 = vrot.slane %v1870, 2
        %v1872 = vadd.f32 %v1870, %v1871
        %v1873 = vrot.slane %v1872, 1
        %v1874 = vadd.f32 %v1872, %v1873
        %v1875 = vrot.slane %v1849, 4
        %v1876 = vadd.f32 %v1849, %v1875
        %v1877 = vrot.slane %v1876, 2
        %v1878 = vadd.f32 %v1876, %v1877
        %v1879 = vrot.slane %v1878, 1
        %v1880 = vadd.f32 %v1878, %v1879
        %v1881 = vrot.slane %v1850, 4
        %v1882 = vadd.f32 %v1850, %v1881
        %v1883 = vrot.slane %v1882, 2
        %v1884 = vadd.f32 %v1882, %v1883
        %v1885 = vrot.slane %v1884, 1
        %v1886 = vadd.f32 %v1884, %v1885
        %v1887 = vrot.slane %v1851, 4
        %v1888 = vadd.f32 %v1851, %v1887
        %v1889 = vrot.slane %v1888, 2
        %v1890 = vadd.f32 %v1888, %v1889
        %v1891 = vrot.slane %v1890, 1
        %v1892 = vadd.f32 %v1890, %v1891
        %v1893 = vrot.slane %v1852, 4
        %v1894 = vadd.f32 %v1852, %v1893
        %v1895 = vrot.slane %v1894, 2
        %v1896 = vadd.f32 %v1894, %v1895
        %v1897 = vrot.slane %v1896, 1
        %v1898 = vadd.f32 %v1896, %v1897
        %v1899 = vrot.slane %v1853, 4
        %v1900 = vadd.f32 %v1853, %v1899
        %v1901 = vrot.slane %v1900, 2
        %v1902 = vadd.f32 %v1900, %v1901
        %v1903 = vrot.slane %v1902, 1
        %v1904 = vadd.f32 %v1902, %v1903
        %v1905 = vrot.slane %v1854, 4
        %v1906 = vadd.f32 %v1854, %v1905
        %v1907 = vrot.slane %v1906, 2
        %v1908 = vadd.f32 %v1906, %v1907
        %v1909 = vrot.slane %v1908, 1
        %v1910 = vadd.f32 %v1908, %v1909
        %v1911 = vrot.slane %v1855, 4
        %v1912 = vadd.f32 %v1855, %v1911
        %v1913 = vrot.slane %v1912, 2
        %v1914 = vadd.f32 %v1912, %v1913
        %v1915 = vrot.slane %v1914, 1
        %v1916 = vadd.f32 %v1914, %v1915
        %v1917 = vrot.slane %v1856, 4
        %v1918 = vadd.f32 %v1856, %v1917
        %v1919 = vrot.slane %v1918, 2
        %v1920 = vadd.f32 %v1918, %v1919
        %v1921 = vrot.slane %v1920, 1
        %v1922 = vadd.f32 %v1920, %v1921
        %v1923 = vrot.slane %v1857, 4
        %v1924 = vadd.f32 %v1857, %v1923
        %v1925 = vrot.slane %v1924, 2
        %v1926 = vadd.f32 %v1924, %v1925
        %v1927 = vrot.slane %v1926, 1
        %v1928 = vadd.f32 %v1926, %v1927
        %v1929 = vrot.slane %v1858, 4
        %v1930 = vadd.f32 %v1858, %v1929
        %v1931 = vrot.slane %v1930, 2
        %v1932 = vadd.f32 %v1930, %v1931
        %v1933 = vrot.slane %v1932, 1
        %v1934 = vadd.f32 %v1932, %v1933
        %v1935 = vrot.slane %v1859, 4
        %v1936 = vadd.f32 %v1859, %v1935
        %v1937 = vrot.slane %v1936, 2
        %v1938 = vadd.f32 %v1936, %v1937
        %v1939 = vrot.slane %v1938, 1
        %v1940 = vadd.f32 %v1938, %v1939
        %v1941 = vrot.slane %v1860, 4
        %v1942 = vadd.f32 %v1860, %v1941
        %v1943 = vrot.slane %v1942, 2
        %v1944 = vadd.f32 %v1942, %v1943
        %v1945 = vrot.slane %v1944, 1
        %v1946 = vadd.f32 %v1944, %v1945
        %v1947 = vrot.slane %v1861, 4
        %v1948 = vadd.f32 %v1861, %v1947
        %v1949 = vrot.slane %v1948, 2
        %v1950 = vadd.f32 %v1948, %v1949
        %v1951 = vrot.slane %v1950, 1
        %v1952 = vadd.f32 %v1950, %v1951
        %v1953 = vrot.slane %v1862, 4
        %v1954 = vadd.f32 %v1862, %v1953
        %v1955 = vrot.slane %v1954, 2
        %v1956 = vadd.f32 %v1954, %v1955
        %v1957 = vrot.slane %v1956, 1
        %v1958 = vadd.f32 %v1956, %v1957
        %1959 = vset.pattern.permute.xlu0 4
        %1960 = vperm.xlu0 %1959, %v384
        %v1961 = vpop.permute.xlu0 %1960
        %v1963 = vadd.f32 %v1868, %v1961
        %v1964 = vadd.f32 %v1874, %v1961
        %v1965 = vadd.f32 %v1880, %v1961
        %v1966 = vadd.f32 %v1886, %v1961
        %v1967 = vadd.f32 %v1892, %v1961
        %v1968 = vadd.f32 %v1898, %v1961
        %v1969 = vadd.f32 %v1904, %v1961
        %v1970 = vadd.f32 %v1910, %v1961
        %v1971 = vadd.f32 %v1916, %v1961
        %v1972 = vadd.f32 %v1922, %v1961
        %v1973 = vadd.f32 %v1928, %v1961
        %v1974 = vadd.f32 %v1934, %v1961
        %v1975 = vadd.f32 %v1940, %v1961
        %v1976 = vadd.f32 %v1946, %v1961
        %v1977 = vadd.f32 %v1952, %v1961
        %v1978 = vadd.f32 %v1958, %v1961
        %v1979 = vxor.u32 %v1963, 2147483648
        %v1980 = vxor.u32 %v1964, 2147483648
        %v1981 = vxor.u32 %v1965, 2147483648
        %v1982 = vxor.u32 %v1966, 2147483648
        %v1983 = vxor.u32 %v1967, 2147483648
        %v1984 = vxor.u32 %v1968, 2147483648
        %v1985 = vxor.u32 %v1969, 2147483648
        %v1986 = vxor.u32 %v1970, 2147483648
        %v1987 = vxor.u32 %v1971, 2147483648
        %v1988 = vxor.u32 %v1972, 2147483648
        %v1989 = vxor.u32 %v1973, 2147483648
        %v1990 = vxor.u32 %v1974, 2147483648
        %v1991 = vxor.u32 %v1975, 2147483648
        %v1992 = vxor.u32 %v1976, 2147483648
        %v1993 = vxor.u32 %v1977, 2147483648
        %v1994 = vxor.u32 %v1978, 2147483648
        %v1995 = vmul.f32 %v1979, 1.442695
        %v1996 = vpow.pop %v1995
        %v1997 = vmul.f32 %v1980, 1.442695
        %v1998 = vpow.pop %v1997
        %v1999 = vmul.f32 %v1981, 1.442695
        %v2000 = vpow.pop %v1999
        %v2001 = vmul.f32 %v1982, 1.442695
        %v2002 = vpow.pop %v2001
        %v2003 = vmul.f32 %v1983, 1.442695
        %v2004 = vpow.pop %v2003
        %v2005 = vmul.f32 %v1984, 1.442695
        %v2006 = vpow.pop %v2005
        %v2007 = vmul.f32 %v1985, 1.442695
        %v2008 = vpow.pop %v2007
        %v2009 = vmul.f32 %v1986, 1.442695
        %v2010 = vpow.pop %v2009
        %v2011 = vmul.f32 %v1987, 1.442695
        %v2012 = vpow.pop %v2011
        %v2013 = vmul.f32 %v1988, 1.442695
        %v2014 = vpow.pop %v2013
        %v2015 = vmul.f32 %v1989, 1.442695
        %v2016 = vpow.pop %v2015
        %v2017 = vmul.f32 %v1990, 1.442695
        %v2018 = vpow.pop %v2017
        %v2019 = vmul.f32 %v1991, 1.442695
        %v2020 = vpow.pop %v2019
        %v2021 = vmul.f32 %v1992, 1.442695
        %v2022 = vpow.pop %v2021
        %v2023 = vmul.f32 %v1993, 1.442695
        %v2024 = vpow.pop %v2023
        %v2025 = vmul.f32 %v1994, 1.442695
        %v2026 = vpow.pop %v2025
        %v2027 = vadd.f32 %v1996, 1.0
        %v2028 = vadd.f32 %v1998, 1.0
        %v2029 = vadd.f32 %v2000, 1.0
        %v2030 = vadd.f32 %v2002, 1.0
        %v2031 = vadd.f32 %v2004, 1.0
        %v2032 = vadd.f32 %v2006, 1.0
        %v2033 = vadd.f32 %v2008, 1.0
        %v2034 = vadd.f32 %v2010, 1.0
        %v2035 = vadd.f32 %v2012, 1.0
        %v2036 = vadd.f32 %v2014, 1.0
        %v2037 = vadd.f32 %v2016, 1.0
        %v2038 = vadd.f32 %v2018, 1.0
        %v2039 = vadd.f32 %v2020, 1.0
        %v2040 = vadd.f32 %v2022, 1.0
        %v2041 = vadd.f32 %v2024, 1.0
        %v2042 = vadd.f32 %v2026, 1.0
        %v2043 = vrcp.pop %v2027
        %v2044 = vmul.f32 1.0, %v2043
        %v2045 = vrcp.pop %v2028
        %v2046 = vmul.f32 1.0, %v2045
        %v2047 = vrcp.pop %v2029
        %v2048 = vmul.f32 1.0, %v2047
        %v2049 = vrcp.pop %v2030
        %v2050 = vmul.f32 1.0, %v2049
        %v2051 = vrcp.pop %v2031
        %v2052 = vmul.f32 1.0, %v2051
        %v2053 = vrcp.pop %v2032
        %v2054 = vmul.f32 1.0, %v2053
        %v2055 = vrcp.pop %v2033
        %v2056 = vmul.f32 1.0, %v2055
        %v2057 = vrcp.pop %v2034
        %v2058 = vmul.f32 1.0, %v2057
        %v2059 = vrcp.pop %v2035
        %v2060 = vmul.f32 1.0, %v2059
        %v2061 = vrcp.pop %v2036
        %v2062 = vmul.f32 1.0, %v2061
        %v2063 = vrcp.pop %v2037
        %v2064 = vmul.f32 1.0, %v2063
        %v2065 = vrcp.pop %v2038
        %v2066 = vmul.f32 1.0, %v2065
        %v2067 = vrcp.pop %v2039
        %v2068 = vmul.f32 1.0, %v2067
        %v2069 = vrcp.pop %v2040
        %v2070 = vmul.f32 1.0, %v2069
        %v2071 = vrcp.pop %v2041
        %v2072 = vmul.f32 1.0, %v2071
        %v2073 = vrcp.pop %v2042
        %v2074 = vmul.f32 1.0, %v2073
        %2075 = vset.pattern.permute.xlu0 3
        %2076 = vperm.xlu0 %2075, %v384
        %v2077 = vpop.permute.xlu0 %2076
        %v2079 = vmul.f32 %v1795, %v2077
        %v2080 = vmul.f32 %v1796, %v2077
        %v2081 = vmul.f32 %v1797, %v2077
        %v2082 = vmul.f32 %v1798, %v2077
        %v2083 = vmul.f32 %v1799, %v2077
        %v2084 = vmul.f32 %v1800, %v2077
        %v2085 = vmul.f32 %v1801, %v2077
        %v2086 = vmul.f32 %v1802, %v2077
        %v2087 = vmul.f32 %v1803, %v2077
        %v2088 = vmul.f32 %v1804, %v2077
        %v2089 = vmul.f32 %v1805, %v2077
        %v2090 = vmul.f32 %v1806, %v2077
        %v2091 = vmul.f32 %v1807, %v2077
        %v2092 = vmul.f32 %v1808, %v2077
        %v2093 = vmul.f32 %v1809, %v2077
        %v2094 = vmul.f32 %v1810, %v2077
        %v2095 = vrot.slane %v2079, 4
        %v2096 = vadd.f32 %v2079, %v2095
        %v2097 = vrot.slane %v2096, 2
        %v2098 = vadd.f32 %v2096, %v2097
        %v2099 = vrot.slane %v2098, 1
        %v2100 = vadd.f32 %v2098, %v2099
        %v2101 = vrot.slane %v2080, 4
        %v2102 = vadd.f32 %v2080, %v2101
        %v2103 = vrot.slane %v2102, 2
        %v2104 = vadd.f32 %v2102, %v2103
        %v2105 = vrot.slane %v2104, 1
        %v2106 = vadd.f32 %v2104, %v2105
        %v2107 = vrot.slane %v2081, 4
        %v2108 = vadd.f32 %v2081, %v2107
        %v2109 = vrot.slane %v2108, 2
        %v2110 = vadd.f32 %v2108, %v2109
        %v2111 = vrot.slane %v2110, 1
        %v2112 = vadd.f32 %v2110, %v2111
        %v2113 = vrot.slane %v2082, 4
        %v2114 = vadd.f32 %v2082, %v2113
        %v2115 = vrot.slane %v2114, 2
        %v2116 = vadd.f32 %v2114, %v2115
        %v2117 = vrot.slane %v2116, 1
        %v2118 = vadd.f32 %v2116, %v2117
        %v2119 = vrot.slane %v2083, 4
        %v2120 = vadd.f32 %v2083, %v2119
        %v2121 = vrot.slane %v2120, 2
        %v2122 = vadd.f32 %v2120, %v2121
        %v2123 = vrot.slane %v2122, 1
        %v2124 = vadd.f32 %v2122, %v2123
        %v2125 = vrot.slane %v2084, 4
        %v2126 = vadd.f32 %v2084, %v2125
        %v2127 = vrot.slane %v2126, 2
        %v2128 = vadd.f32 %v2126, %v2127
        %v2129 = vrot.slane %v2128, 1
        %v2130 = vadd.f32 %v2128, %v2129
        %v2131 = vrot.slane %v2085, 4
        %v2132 = vadd.f32 %v2085, %v2131
        %v2133 = vrot.slane %v2132, 2
        %v2134 = vadd.f32 %v2132, %v2133
        %v2135 = vrot.slane %v2134, 1
        %v2136 = vadd.f32 %v2134, %v2135
        %v2137 = vrot.slane %v2086, 4
        %v2138 = vadd.f32 %v2086, %v2137
        %v2139 = vrot.slane %v2138, 2
        %v2140 = vadd.f32 %v2138, %v2139
        %v2141 = vrot.slane %v2140, 1
        %v2142 = vadd.f32 %v2140, %v2141
        %v2143 = vrot.slane %v2087, 4
        %v2144 = vadd.f32 %v2087, %v2143
        %v2145 = vrot.slane %v2144, 2
        %v2146 = vadd.f32 %v2144, %v2145
        %v2147 = vrot.slane %v2146, 1
        %v2148 = vadd.f32 %v2146, %v2147
        %v2149 = vrot.slane %v2088, 4
        %v2150 = vadd.f32 %v2088, %v2149
        %v2151 = vrot.slane %v2150, 2
        %v2152 = vadd.f32 %v2150, %v2151
        %v2153 = vrot.slane %v2152, 1
        %v2154 = vadd.f32 %v2152, %v2153
        %v2155 = vrot.slane %v2089, 4
        %v2156 = vadd.f32 %v2089, %v2155
        %v2157 = vrot.slane %v2156, 2
        %v2158 = vadd.f32 %v2156, %v2157
        %v2159 = vrot.slane %v2158, 1
        %v2160 = vadd.f32 %v2158, %v2159
        %v2161 = vrot.slane %v2090, 4
        %v2162 = vadd.f32 %v2090, %v2161
        %v2163 = vrot.slane %v2162, 2
        %v2164 = vadd.f32 %v2162, %v2163
        %v2165 = vrot.slane %v2164, 1
        %v2166 = vadd.f32 %v2164, %v2165
        %v2167 = vrot.slane %v2091, 4
        %v2168 = vadd.f32 %v2091, %v2167
        %v2169 = vrot.slane %v2168, 2
        %v2170 = vadd.f32 %v2168, %v2169
        %v2171 = vrot.slane %v2170, 1
        %v2172 = vadd.f32 %v2170, %v2171
        %v2173 = vrot.slane %v2092, 4
        %v2174 = vadd.f32 %v2092, %v2173
        %v2175 = vrot.slane %v2174, 2
        %v2176 = vadd.f32 %v2174, %v2175
        %v2177 = vrot.slane %v2176, 1
        %v2178 = vadd.f32 %v2176, %v2177
        %v2179 = vrot.slane %v2093, 4
        %v2180 = vadd.f32 %v2093, %v2179
        %v2181 = vrot.slane %v2180, 2
        %v2182 = vadd.f32 %v2180, %v2181
        %v2183 = vrot.slane %v2182, 1
        %v2184 = vadd.f32 %v2182, %v2183
        %v2185 = vrot.slane %v2094, 4
        %v2186 = vadd.f32 %v2094, %v2185
        %v2187 = vrot.slane %v2186, 2
        %v2188 = vadd.f32 %v2186, %v2187
        %v2189 = vrot.slane %v2188, 1
        %v2190 = vadd.f32 %v2188, %v2189
        %2191 = vset.pattern.permute.xlu0 5
        %2192 = vperm.xlu0 %2191, %v384
        %v2193 = vpop.permute.xlu0 %2192
        %v2195 = vadd.f32 %v2100, %v2193
        %v2196 = vadd.f32 %v2106, %v2193
        %v2197 = vadd.f32 %v2112, %v2193
        %v2198 = vadd.f32 %v2118, %v2193
        %v2199 = vadd.f32 %v2124, %v2193
        %v2200 = vadd.f32 %v2130, %v2193
        %v2201 = vadd.f32 %v2136, %v2193
        %v2202 = vadd.f32 %v2142, %v2193
        %v2203 = vadd.f32 %v2148, %v2193
        %v2204 = vadd.f32 %v2154, %v2193
        %v2205 = vadd.f32 %v2160, %v2193
        %v2206 = vadd.f32 %v2166, %v2193
        %v2207 = vadd.f32 %v2172, %v2193
        %v2208 = vadd.f32 %v2178, %v2193
        %v2209 = vadd.f32 %v2184, %v2193
        %v2210 = vadd.f32 %v2190, %v2193
        %v2211 = vxor.u32 %v2195, 2147483648
        %v2212 = vxor.u32 %v2196, 2147483648
        %v2213 = vxor.u32 %v2197, 2147483648
        %v2214 = vxor.u32 %v2198, 2147483648
        %v2215 = vxor.u32 %v2199, 2147483648
        %v2216 = vxor.u32 %v2200, 2147483648
        %v2217 = vxor.u32 %v2201, 2147483648
        %v2218 = vxor.u32 %v2202, 2147483648
        %v2219 = vxor.u32 %v2203, 2147483648
        %v2220 = vxor.u32 %v2204, 2147483648
        %v2221 = vxor.u32 %v2205, 2147483648
        %v2222 = vxor.u32 %v2206, 2147483648
        %v2223 = vxor.u32 %v2207, 2147483648
        %v2224 = vxor.u32 %v2208, 2147483648
        %v2225 = vxor.u32 %v2209, 2147483648
        %v2226 = vxor.u32 %v2210, 2147483648
        %v2227 = vmul.f32 %v2211, 1.442695
        %v2228 = vpow.pop %v2227
        %v2229 = vmul.f32 %v2212, 1.442695
        %v2230 = vpow.pop %v2229
        %v2231 = vmul.f32 %v2213, 1.442695
        %v2232 = vpow.pop %v2231
        %v2233 = vmul.f32 %v2214, 1.442695
        %v2234 = vpow.pop %v2233
        %v2235 = vmul.f32 %v2215, 1.442695
        %v2236 = vpow.pop %v2235
        %v2237 = vmul.f32 %v2216, 1.442695
        %v2238 = vpow.pop %v2237
        %v2239 = vmul.f32 %v2217, 1.442695
        %v2240 = vpow.pop %v2239
        %v2241 = vmul.f32 %v2218, 1.442695
        %v2242 = vpow.pop %v2241
        %v2243 = vmul.f32 %v2219, 1.442695
        %v2244 = vpow.pop %v2243
        %v2245 = vmul.f32 %v2220, 1.442695
        %v2246 = vpow.pop %v2245
        %v2247 = vmul.f32 %v2221, 1.442695
        %v2248 = vpow.pop %v2247
        %v2249 = vmul.f32 %v2222, 1.442695
        %v2250 = vpow.pop %v2249
        %v2251 = vmul.f32 %v2223, 1.442695
        %v2252 = vpow.pop %v2251
        %v2253 = vmul.f32 %v2224, 1.442695
        %v2254 = vpow.pop %v2253
        %v2255 = vmul.f32 %v2225, 1.442695
        %v2256 = vpow.pop %v2255
        %v2257 = vmul.f32 %v2226, 1.442695
        %v2258 = vpow.pop %v2257
        %v2259 = vadd.f32 %v2228, 1.0
        %v2260 = vadd.f32 %v2230, 1.0
        %v2261 = vadd.f32 %v2232, 1.0
        %v2262 = vadd.f32 %v2234, 1.0
        %v2263 = vadd.f32 %v2236, 1.0
        %v2264 = vadd.f32 %v2238, 1.0
        %v2265 = vadd.f32 %v2240, 1.0
        %v2266 = vadd.f32 %v2242, 1.0
        %v2267 = vadd.f32 %v2244, 1.0
        %v2268 = vadd.f32 %v2246, 1.0
        %v2269 = vadd.f32 %v2248, 1.0
        %v2270 = vadd.f32 %v2250, 1.0
        %v2271 = vadd.f32 %v2252, 1.0
        %v2272 = vadd.f32 %v2254, 1.0
        %v2273 = vadd.f32 %v2256, 1.0
        %v2274 = vadd.f32 %v2258, 1.0
        %v2275 = vrcp.pop %v2259
        %v2276 = vmul.f32 1.0, %v2275
        %v2277 = vrcp.pop %v2260
        %v2278 = vmul.f32 1.0, %v2277
        %v2279 = vrcp.pop %v2261
        %v2280 = vmul.f32 1.0, %v2279
        %v2281 = vrcp.pop %v2262
        %v2282 = vmul.f32 1.0, %v2281
        %v2283 = vrcp.pop %v2263
        %v2284 = vmul.f32 1.0, %v2283
        %v2285 = vrcp.pop %v2264
        %v2286 = vmul.f32 1.0, %v2285
        %v2287 = vrcp.pop %v2265
        %v2288 = vmul.f32 1.0, %v2287
        %v2289 = vrcp.pop %v2266
        %v2290 = vmul.f32 1.0, %v2289
        %v2291 = vrcp.pop %v2267
        %v2292 = vmul.f32 1.0, %v2291
        %v2293 = vrcp.pop %v2268
        %v2294 = vmul.f32 1.0, %v2293
        %v2295 = vrcp.pop %v2269
        %v2296 = vmul.f32 1.0, %v2295
        %v2297 = vrcp.pop %v2270
        %v2298 = vmul.f32 1.0, %v2297
        %v2299 = vrcp.pop %v2271
        %v2300 = vmul.f32 1.0, %v2299
        %v2301 = vrcp.pop %v2272
        %v2302 = vmul.f32 1.0, %v2301
        %v2303 = vrcp.pop %v2273
        %v2304 = vmul.f32 1.0, %v2303
        %v2305 = vrcp.pop %v2274
        %v2306 = vmul.f32 1.0, %v2305
        %v2307 = vadd.f32 %v2044, %v2276
        %v2308 = vadd.f32 %v2046, %v2278
        %v2309 = vadd.f32 %v2048, %v2280
        %v2310 = vadd.f32 %v2050, %v2282
        %v2311 = vadd.f32 %v2052, %v2284
        %v2312 = vadd.f32 %v2054, %v2286
        %v2313 = vadd.f32 %v2056, %v2288
        %v2314 = vadd.f32 %v2058, %v2290
        %v2315 = vadd.f32 %v2060, %v2292
        %v2316 = vadd.f32 %v2062, %v2294
        %v2317 = vadd.f32 %v2064, %v2296
        %v2318 = vadd.f32 %v2066, %v2298
        %v2319 = vadd.f32 %v2068, %v2300
        %v2320 = vadd.f32 %v2070, %v2302
        %v2321 = vadd.f32 %v2072, %v2304
        %v2322 = vadd.f32 %v2074, %v2306
        %v2323 = vlaneseq
        %v2324 = vshrl.u32 %v2323, 7
        %v2325 = vsub.s32 0, %v2324
        %v2326 = vrot.slane %v2307, %v2325
        %v2327 = vlaneseq
        %v2328 = vshrl.u32 %v2327, 7
        %v2329 = vsub.s32 0, %v2328
        %v2330 = vrot.slane %v2308, %v2329
        %v2331 = vlaneseq
        %v2332 = vshrl.u32 %v2331, 7
        %v2333 = vsub.s32 0, %v2332
        %v2334 = vrot.slane %v2309, %v2333
        %v2335 = vlaneseq
        %v2336 = vshrl.u32 %v2335, 7
        %v2337 = vsub.s32 0, %v2336
        %v2338 = vrot.slane %v2310, %v2337
        %v2339 = vlaneseq
        %v2340 = vshrl.u32 %v2339, 7
        %v2341 = vsub.s32 0, %v2340
        %v2342 = vrot.slane %v2311, %v2341
        %v2343 = vlaneseq
        %v2344 = vshrl.u32 %v2343, 7
        %v2345 = vsub.s32 0, %v2344
        %v2346 = vrot.slane %v2312, %v2345
        %v2347 = vlaneseq
        %v2348 = vshrl.u32 %v2347, 7
        %v2349 = vsub.s32 0, %v2348
        %v2350 = vrot.slane %v2313, %v2349
        %v2351 = vlaneseq
        %v2352 = vshrl.u32 %v2351, 7
        %v2353 = vsub.s32 0, %v2352
        %v2354 = vrot.slane %v2314, %v2353
        %v2355 = vlaneseq
        %v2356 = vshrl.u32 %v2355, 7
        %v2357 = vsub.s32 0, %v2356
        %v2358 = vrot.slane %v2315, %v2357
        %v2359 = vlaneseq
        %v2360 = vshrl.u32 %v2359, 7
        %v2361 = vsub.s32 0, %v2360
        %v2362 = vrot.slane %v2316, %v2361
        %v2363 = vlaneseq
        %v2364 = vshrl.u32 %v2363, 7
        %v2365 = vsub.s32 0, %v2364
        %v2366 = vrot.slane %v2317, %v2365
        %v2367 = vlaneseq
        %v2368 = vshrl.u32 %v2367, 7
        %v2369 = vsub.s32 0, %v2368
        %v2370 = vrot.slane %v2318, %v2369
        %v2371 = vlaneseq
        %v2372 = vshrl.u32 %v2371, 7
        %v2373 = vsub.s32 0, %v2372
        %v2374 = vrot.slane %v2319, %v2373
        %v2375 = vlaneseq
        %v2376 = vshrl.u32 %v2375, 7
        %v2377 = vsub.s32 0, %v2376
        %v2378 = vrot.slane %v2320, %v2377
        %v2379 = vlaneseq
        %v2380 = vshrl.u32 %v2379, 7
        %v2381 = vsub.s32 0, %v2380
        %v2382 = vrot.slane %v2321, %v2381
        %v2383 = vlaneseq
        %v2384 = vshrl.u32 %v2383, 7
        %v2385 = vsub.s32 0, %v2384
        %v2386 = vrot.slane %v2322, %v2385
        %v2387 = vmul.f32 %v1731, %v2326
        %v2388 = vmul.f32 %v1732, %v2330
        %v2389 = vmul.f32 %v1733, %v2334
        %v2390 = vmul.f32 %v1734, %v2338
        %v2391 = vmul.f32 %v1735, %v2342
        %v2392 = vmul.f32 %v1736, %v2346
        %v2393 = vmul.f32 %v1737, %v2350
        %v2394 = vmul.f32 %v1738, %v2354
        %v2395 = vmul.f32 %v1739, %v2358
        %v2396 = vmul.f32 %v1740, %v2362
        %v2397 = vmul.f32 %v1741, %v2366
        %v2398 = vmul.f32 %v1742, %v2370
        %v2399 = vmul.f32 %v1743, %v2374
        %v2400 = vmul.f32 %v1744, %v2378
        %v2401 = vmul.f32 %v1745, %v2382
        %v2402 = vmul.f32 %v1746, %v2386
        %v2403 = vmul.f32 %v1747, %v2326
        %v2404 = vmul.f32 %v1748, %v2330
        %v2405 = vmul.f32 %v1749, %v2334
        %v2406 = vmul.f32 %v1750, %v2338
        %v2407 = vmul.f32 %v1751, %v2342
        %v2408 = vmul.f32 %v1752, %v2346
        %v2409 = vmul.f32 %v1753, %v2350
        %v2410 = vmul.f32 %v1754, %v2354
        %v2411 = vmul.f32 %v1755, %v2358
        %v2412 = vmul.f32 %v1756, %v2362
        %v2413 = vmul.f32 %v1757, %v2366
        %v2414 = vmul.f32 %v1758, %v2370
        %v2415 = vmul.f32 %v1759, %v2374
        %v2416 = vmul.f32 %v1760, %v2378
        %v2417 = vmul.f32 %v1761, %v2382
        %v2418 = vmul.f32 %v1762, %v2386
        %v2419 = vmul.f32 %v1763, %v2326
        %v2420 = vmul.f32 %v1764, %v2330
        %v2421 = vmul.f32 %v1765, %v2334
        %v2422 = vmul.f32 %v1766, %v2338
        %v2423 = vmul.f32 %v1767, %v2342
        %v2424 = vmul.f32 %v1768, %v2346
        %v2425 = vmul.f32 %v1769, %v2350
        %v2426 = vmul.f32 %v1770, %v2354
        %v2427 = vmul.f32 %v1771, %v2358
        %v2428 = vmul.f32 %v1772, %v2362
        %v2429 = vmul.f32 %v1773, %v2366
        %v2430 = vmul.f32 %v1774, %v2370
        %v2431 = vmul.f32 %v1775, %v2374
        %v2432 = vmul.f32 %v1776, %v2378
        %v2433 = vmul.f32 %v1777, %v2382
        %v2434 = vmul.f32 %v1778, %v2386
        %v2435 = vmul.f32 %v1779, %v2326
        %v2436 = vmul.f32 %v1780, %v2330
        %v2437 = vmul.f32 %v1781, %v2334
        %v2438 = vmul.f32 %v1782, %v2338
        %v2439 = vmul.f32 %v1783, %v2342
        %v2440 = vmul.f32 %v1784, %v2346
        %v2441 = vmul.f32 %v1785, %v2350
        %v2442 = vmul.f32 %v1786, %v2354
        %v2443 = vmul.f32 %v1787, %v2358
        %v2444 = vmul.f32 %v1788, %v2362
        %v2445 = vmul.f32 %v1789, %v2366
        %v2446 = vmul.f32 %v1790, %v2370
        %v2447 = vmul.f32 %v1791, %v2374
        %v2448 = vmul.f32 %v1792, %v2378
        %v2449 = vmul.f32 %v1793, %v2382
        %v2450 = vmul.f32 %v1794, %v2386
        %v2451 = vmul.f32 %v2387, 0.5
        %v2452 = vmul.f32 %v2388, 0.5
        %v2453 = vmul.f32 %v2389, 0.5
        %v2454 = vmul.f32 %v2390, 0.5
        %v2455 = vmul.f32 %v2391, 0.5
        %v2456 = vmul.f32 %v2392, 0.5
        %v2457 = vmul.f32 %v2393, 0.5
        %v2458 = vmul.f32 %v2394, 0.5
        %v2459 = vmul.f32 %v2395, 0.5
        %v2460 = vmul.f32 %v2396, 0.5
        %v2461 = vmul.f32 %v2397, 0.5
        %v2462 = vmul.f32 %v2398, 0.5
        %v2463 = vmul.f32 %v2399, 0.5
        %v2464 = vmul.f32 %v2400, 0.5
        %v2465 = vmul.f32 %v2401, 0.5
        %v2466 = vmul.f32 %v2402, 0.5
        %v2467 = vmul.f32 %v2403, 0.5
        %v2468 = vmul.f32 %v2404, 0.5
        %v2469 = vmul.f32 %v2405, 0.5
        %v2470 = vmul.f32 %v2406, 0.5
        %v2471 = vmul.f32 %v2407, 0.5
        %v2472 = vmul.f32 %v2408, 0.5
        %v2473 = vmul.f32 %v2409, 0.5
        %v2474 = vmul.f32 %v2410, 0.5
        %v2475 = vmul.f32 %v2411, 0.5
        %v2476 = vmul.f32 %v2412, 0.5
        %v2477 = vmul.f32 %v2413, 0.5
        %v2478 = vmul.f32 %v2414, 0.5
        %v2479 = vmul.f32 %v2415, 0.5
        %v2480 = vmul.f32 %v2416, 0.5
        %v2481 = vmul.f32 %v2417, 0.5
        %v2482 = vmul.f32 %v2418, 0.5
        %v2483 = vmul.f32 %v2419, 0.5
        %v2484 = vmul.f32 %v2420, 0.5
        %v2485 = vmul.f32 %v2421, 0.5
        %v2486 = vmul.f32 %v2422, 0.5
        %v2487 = vmul.f32 %v2423, 0.5
        %v2488 = vmul.f32 %v2424, 0.5
        %v2489 = vmul.f32 %v2425, 0.5
        %v2490 = vmul.f32 %v2426, 0.5
        %v2491 = vmul.f32 %v2427, 0.5
        %v2492 = vmul.f32 %v2428, 0.5
        %v2493 = vmul.f32 %v2429, 0.5
        %v2494 = vmul.f32 %v2430, 0.5
        %v2495 = vmul.f32 %v2431, 0.5
        %v2496 = vmul.f32 %v2432, 0.5
        %v2497 = vmul.f32 %v2433, 0.5
        %v2498 = vmul.f32 %v2434, 0.5
        %v2499 = vmul.f32 %v2435, 0.5
        %v2500 = vmul.f32 %v2436, 0.5
        %v2501 = vmul.f32 %v2437, 0.5
        %v2502 = vmul.f32 %v2438, 0.5
        %v2503 = vmul.f32 %v2439, 0.5
        %v2504 = vmul.f32 %v2440, 0.5
        %v2505 = vmul.f32 %v2441, 0.5
        %v2506 = vmul.f32 %v2442, 0.5
        %v2507 = vmul.f32 %v2443, 0.5
        %v2508 = vmul.f32 %v2444, 0.5
        %v2509 = vmul.f32 %v2445, 0.5
        %v2510 = vmul.f32 %v2446, 0.5
        %v2511 = vmul.f32 %v2447, 0.5
        %v2512 = vmul.f32 %v2448, 0.5
        %v2513 = vmul.f32 %v2449, 0.5
        %v2514 = vmul.f32 %v2450, 0.5
        %v2515 = vld [vmem:[%s4] sm:$0xf]
        %v2516 = vld [vmem:[%s4 + $0x4] sm:$0xf]
        %v2517 = vld [vmem:[%s4 + $0x8] sm:$0xf]
        %v2518 = vld [vmem:[%s4 + $0xc] sm:$0xf]
        %v2519 = vpack.c.bf16 %v2467, %v2451
        %v2520 = vpack.c.bf16 %v2468, %v2452
        %v2521 = vpack.c.bf16 %v2469, %v2453
        %v2522 = vpack.c.bf16 %v2470, %v2454
        %v2523 = vpack.c.bf16 %v2471, %v2455
        %v2524 = vpack.c.bf16 %v2472, %v2456
        %v2525 = vpack.c.bf16 %v2473, %v2457
        %v2526 = vpack.c.bf16 %v2474, %v2458
        %v2527 = vpack.c.bf16 %v2475, %v2459
        %v2528 = vpack.c.bf16 %v2476, %v2460
        %v2529 = vpack.c.bf16 %v2477, %v2461
        %v2530 = vpack.c.bf16 %v2478, %v2462
        %v2531 = vpack.c.bf16 %v2479, %v2463
        %v2532 = vpack.c.bf16 %v2480, %v2464
        %v2533 = vpack.c.bf16 %v2481, %v2465
        %v2534 = vpack.c.bf16 %v2482, %v2466
        %v2535 = vpack.c.bf16 %v2499, %v2483
        %v2536 = vpack.c.bf16 %v2500, %v2484
        %v2537 = vpack.c.bf16 %v2501, %v2485
        %v2538 = vpack.c.bf16 %v2502, %v2486
        %v2539 = vpack.c.bf16 %v2503, %v2487
        %v2540 = vpack.c.bf16 %v2504, %v2488
        %v2541 = vpack.c.bf16 %v2505, %v2489
        %v2542 = vpack.c.bf16 %v2506, %v2490
        %v2543 = vpack.c.bf16 %v2507, %v2491
        %v2544 = vpack.c.bf16 %v2508, %v2492
        %v2545 = vpack.c.bf16 %v2509, %v2493
        %v2546 = vpack.c.bf16 %v2510, %v2494
        %v2547 = vpack.c.bf16 %v2511, %v2495
        %v2548 = vpack.c.bf16 %v2512, %v2496
        %v2549 = vpack.c.bf16 %v2513, %v2497
        %v2550 = vpack.c.bf16 %v2514, %v2498
        %v2555 = vunpack.c.l.b16 %v2515
        %v2556 = vunpack.c.l.b16 %v2516
        %v2557 = vunpack.c.l.b16 %v2517
        %v2558 = vunpack.c.l.b16 %v2518
        %v2559 = vpack.c.b16 %v2556, %v2555
        %v2560 = vpack.c.b16 %v2558, %v2557
        %v2562 = vsel %vm1233, %v2559, 0
        %v2565 = vsel %vm1233, %v2560, 0
        %2567 = vmatprep.subr.bf16.mxu0 %v2520
        %2568 = vmatpush1.bf16.msra.mxu0 %v2519
        %2569 = vmatprep.subr.bf16.mxu0 %v2536
        %2570 = vmatpush1.bf16.msra.mxu0 %v2535
        %2571 = vmatprep.subr.bf16.mxu0 0
        %2572 = vmatpush1.bf16.msra.mxu0 0
        %2573 = vmatprep.subr.bf16.mxu0 0
        %2574 = vmatpush1.bf16.msra.mxu0 0
        %2575 = vmatprep.subr.bf16.mxu0 0
        %2576 = vmatpush1.bf16.msra.mxu0 0
        %2577 = vmatprep.subr.bf16.mxu0 0
        %2578 = vmatpush1.bf16.msra.mxu0 0
        %2579 = vmatprep.subr.bf16.mxu0 0
        %2580 = vmatpush1.bf16.msra.mxu0 0
        %2581 = vmatprep.subr.bf16.mxu0 0
        %2582 = vmatpush1.bf16.msra.mxu0 0
        %2583 = vmatprep.subr.bf16.mxu0 0
        %2584 = vmatpush1.bf16.msra.mxu0 0
        %2585 = vmatprep.subr.bf16.mxu0 0
        %2586 = vmatpush1.bf16.msra.mxu0 0
        %2587 = vmatprep.subr.bf16.mxu0 0
        %2588 = vmatpush1.bf16.msra.mxu0 0
        %2589 = vmatprep.subr.bf16.mxu0 0
        %2590 = vmatpush1.bf16.msra.mxu0 0
        %2591 = vmatprep.subr.bf16.mxu0 0
        %2592 = vmatpush1.bf16.msra.mxu0 0
        %2593 = vmatprep.subr.bf16.mxu0 0
        %2594 = vmatpush1.bf16.msra.mxu0 0
        %2595 = vmatprep.subr.bf16.mxu0 0
        %2596 = vmatpush1.bf16.msra.mxu0 0
        %2597 = vmatprep.subr.bf16.mxu0 0
        %2598 = vmatpush1.bf16.msra.mxu0 0
        %2599 = vmatprep.mubr.bf16.mxu0 0
        %2600 = vmatmul.mubr.bf16.gmra.mrb[0].mxu0 %v2562
        %v2601 = vpop.f32.mrb[0].mxu0
        %v2602 = vadd.f32 0.0, %v2601
        %v2603 = vpop.f32.mrb[0].mxu0
        %v2604 = vadd.f32 0.0, %v2603
        %v2605 = vpop.f32.mrb[0].mxu0
        %v2606 = vadd.f32 0.0, %v2605
        %v2607 = vpop.f32.mrb[0].mxu0
        %v2608 = vadd.f32 0.0, %v2607
        %2609 = vmatprep.mubr.bf16.mxu0 0
        %2610 = vmatmul.mubr.bf16.gmra.mrb[0].mxu0 %v2565
        %v2611 = vpop.f32.mrb[0].mxu0
        %v2612 = vadd.f32 0.0, %v2611
        %v2613 = vpop.f32.mrb[0].mxu0
        %v2614 = vadd.f32 0.0, %v2613
        %v2615 = vpop.f32.mrb[0].mxu0
        %v2616 = vadd.f32 0.0, %v2615
        %v2617 = vpop.f32.mrb[0].mxu0
        %v2618 = vadd.f32 0.0, %v2617
        %2619 = vdwg.mxu0
        %2620 = vmatprep.subr.bf16.mxu0 %v2522
        %2621 = vmatpush1.bf16.msra.mxu0 %v2521
        %2622 = vmatprep.subr.bf16.mxu0 %v2538
        %2623 = vmatpush1.bf16.msra.mxu0 %v2537
        %2624 = vmatprep.subr.bf16.mxu0 0
        %2625 = vmatpush1.bf16.msra.mxu0 0
        %2626 = vmatprep.subr.bf16.mxu0 0
        %2627 = vmatpush1.bf16.msra.mxu0 0
        %2628 = vmatprep.subr.bf16.mxu0 0
        %2629 = vmatpush1.bf16.msra.mxu0 0
        %2630 = vmatprep.subr.bf16.mxu0 0
        %2631 = vmatpush1.bf16.msra.mxu0 0
        %2632 = vmatprep.subr.bf16.mxu0 0
        %2633 = vmatpush1.bf16.msra.mxu0 0
        %2634 = vmatprep.subr.bf16.mxu0 0
        %2635 = vmatpush1.bf16.msra.mxu0 0
        %2636 = vmatprep.subr.bf16.mxu0 0
        %2637 = vmatpush1.bf16.msra.mxu0 0
        %2638 = vmatprep.subr.bf16.mxu0 0
        %2639 = vmatpush1.bf16.msra.mxu0 0
        %2640 = vmatprep.subr.bf16.mxu0 0
        %2641 = vmatpush1.bf16.msra.mxu0 0
        %2642 = vmatprep.subr.bf16.mxu0 0
        %2643 = vmatpush1.bf16.msra.mxu0 0
        %2644 = vmatprep.subr.bf16.mxu0 0
        %2645 = vmatpush1.bf16.msra.mxu0 0
        %2646 = vmatprep.subr.bf16.mxu0 0
        %2647 = vmatpush1.bf16.msra.mxu0 0
        %2648 = vmatprep.subr.bf16.mxu0 0
        %2649 = vmatpush1.bf16.msra.mxu0 0
        %2650 = vmatprep.subr.bf16.mxu0 0
        %2651 = vmatpush1.bf16.msra.mxu0 0
        %2652 = vmatprep.mubr.bf16.mxu0 0
        %2653 = vmatmul.mubr.bf16.gmra.mrb[0].mxu0 %v2562
        %v2654 = vpop.f32.mrb[0].mxu0
        %v2655 = vadd.f32 0.0, %v2654
        %v2656 = vpop.f32.mrb[0].mxu0
        %v2657 = vadd.f32 0.0, %v2656
        %v2658 = vpop.f32.mrb[0].mxu0
        %v2659 = vadd.f32 0.0, %v2658
        %v2660 = vpop.f32.mrb[0].mxu0
        %v2661 = vadd.f32 0.0, %v2660
        %2662 = vmatprep.mubr.bf16.mxu0 0
        %2663 = vmatmul.mubr.bf16.gmra.mrb[0].mxu0 %v2565
        %v2664 = vpop.f32.mrb[0].mxu0
        %v2665 = vadd.f32 0.0, %v2664
        %v2666 = vpop.f32.mrb[0].mxu0
        %v2667 = vadd.f32 0.0, %v2666
        %v2668 = vpop.f32.mrb[0].mxu0
        %v2669 = vadd.f32 0.0, %v2668
        %v2670 = vpop.f32.mrb[0].mxu0
        %v2671 = vadd.f32 0.0, %v2670
        %2672 = vdwg.mxu0
        %2673 = vmatprep.subr.bf16.mxu0 %v2524
        %2674 = vmatpush1.bf16.msra.mxu0 %v2523
        %2675 = vmatprep.subr.bf16.mxu0 %v2540
        %2676 = vmatpush1.bf16.msra.mxu0 %v2539
        %2677 = vmatprep.subr.bf16.mxu0 0
        %2678 = vmatpush1.bf16.msra.mxu0 0
        %2679 = vmatprep.subr.bf16.mxu0 0
        %2680 = vmatpush1.bf16.msra.mxu0 0
        %2681 = vmatprep.subr.bf16.mxu0 0
        %2682 = vmatpush1.bf16.msra.mxu0 0
        %2683 = vmatprep.subr.bf16.mxu0 0
        %2684 = vmatpush1.bf16.msra.mxu0 0
        %2685 = vmatprep.subr.bf16.mxu0 0
        %2686 = vmatpush1.bf16.msra.mxu0 0
        %2687 = vmatprep.subr.bf16.mxu0 0
        %2688 = vmatpush1.bf16.msra.mxu0 0
        %2689 = vmatprep.subr.bf16.mxu0 0
        %2690 = vmatpush1.bf16.msra.mxu0 0
        %2691 = vmatprep.subr.bf16.mxu0 0
        %2692 = vmatpush1.bf16.msra.mxu0 0
        %2693 = vmatprep.subr.bf16.mxu0 0
        %2694 = vmatpush1.bf16.msra.mxu0 0
        %2695 = vmatprep.subr.bf16.mxu0 0
        %2696 = vmatpush1.bf16.msra.mxu0 0
        %2697 = vmatprep.subr.bf16.mxu0 0
        %2698 = vmatpush1.bf16.msra.mxu0 0
        %2699 = vmatprep.subr.bf16.mxu0 0
        %2700 = vmatpush1.bf16.msra.mxu0 0
        %2701 = vmatprep.subr.bf16.mxu0 0
        %2702 = vmatpush1.bf16.msra.mxu0 0
        %2703 = vmatprep.subr.bf16.mxu0 0
        %2704 = vmatpush1.bf16.msra.mxu0 0
        %2705 = vmatprep.mubr.bf16.mxu0 0
        %2706 = vmatmul.mubr.bf16.gmra.mrb[0].mxu0 %v2562
        %v2707 = vpop.f32.mrb[0].mxu0
        %v2708 = vadd.f32 0.0, %v2707
        %v2709 = vpop.f32.mrb[0].mxu0
        %v2710 = vadd.f32 0.0, %v2709
        %v2711 = vpop.f32.mrb[0].mxu0
        %v2712 = vadd.f32 0.0, %v2711
        %v2713 = vpop.f32.mrb[0].mxu0
        %v2714 = vadd.f32 0.0, %v2713
        %2715 = vmatprep.mubr.bf16.mxu0 0
        %2716 = vmatmul.mubr.bf16.gmra.mrb[0].mxu0 %v2565
        %v2717 = vpop.f32.mrb[0].mxu0
        %v2718 = vadd.f32 0.0, %v2717
        %v2719 = vpop.f32.mrb[0].mxu0
        %v2720 = vadd.f32 0.0, %v2719
        %v2721 = vpop.f32.mrb[0].mxu0
        %v2722 = vadd.f32 0.0, %v2721
        %v2723 = vpop.f32.mrb[0].mxu0
        %v2724 = vadd.f32 0.0, %v2723
        %2725 = vdwg.mxu0
        %2726 = vmatprep.subr.bf16.mxu0 %v2526
        %2727 = vmatpush1.bf16.msra.mxu0 %v2525
        %2728 = vmatprep.subr.bf16.mxu0 %v2542
        %2729 = vmatpush1.bf16.msra.mxu0 %v2541
        %2730 = vmatprep.subr.bf16.mxu0 0
        %2731 = vmatpush1.bf16.msra.mxu0 0
        %2732 = vmatprep.subr.bf16.mxu0 0
        %2733 = vmatpush1.bf16.msra.mxu0 0
        %2734 = vmatprep.subr.bf16.mxu0 0
        %2735 = vmatpush1.bf16.msra.mxu0 0
        %2736 = vmatprep.subr.bf16.mxu0 0
        %2737 = vmatpush1.bf16.msra.mxu0 0
        %2738 = vmatprep.subr.bf16.mxu0 0
        %2739 = vmatpush1.bf16.msra.mxu0 0
        %2740 = vmatprep.subr.bf16.mxu0 0
        %2741 = vmatpush1.bf16.msra.mxu0 0
        %2742 = vmatprep.subr.bf16.mxu0 0
        %2743 = vmatpush1.bf16.msra.mxu0 0
        %2744 = vmatprep.subr.bf16.mxu0 0
        %2745 = vmatpush1.bf16.msra.mxu0 0
        %2746 = vmatprep.subr.bf16.mxu0 0
        %2747 = vmatpush1.bf16.msra.mxu0 0
        %2748 = vmatprep.subr.bf16.mxu0 0
        %2749 = vmatpush1.bf16.msra.mxu0 0
        %2750 = vmatprep.subr.bf16.mxu0 0
        %2751 = vmatpush1.bf16.msra.mxu0 0
        %2752 = vmatprep.subr.bf16.mxu0 0
        %2753 = vmatpush1.bf16.msra.mxu0 0
        %2754 = vmatprep.subr.bf16.mxu0 0
        %2755 = vmatpush1.bf16.msra.mxu0 0
        %2756 = vmatprep.subr.bf16.mxu0 0
        %2757 = vmatpush1.bf16.msra.mxu0 0
        %2758 = vmatprep.mubr.bf16.mxu0 0
        %2759 = vmatmul.mubr.bf16.gmra.mrb[0].mxu0 %v2562
        %v2760 = vpop.f32.mrb[0].mxu0
        %v2761 = vadd.f32 0.0, %v2760
        %v2762 = vpop.f32.mrb[0].mxu0
        %v2763 = vadd.f32 0.0, %v2762
        %v2764 = vpop.f32.mrb[0].mxu0
        %v2765 = vadd.f32 0.0, %v2764
        %v2766 = vpop.f32.mrb[0].mxu0
        %v2767 = vadd.f32 0.0, %v2766
        %2768 = vmatprep.mubr.bf16.mxu0 0
        %2769 = vmatmul.mubr.bf16.gmra.mrb[0].mxu0 %v2565
        %v2770 = vpop.f32.mrb[0].mxu0
        %v2771 = vadd.f32 0.0, %v2770
        %v2772 = vpop.f32.mrb[0].mxu0
        %v2773 = vadd.f32 0.0, %v2772
        %v2774 = vpop.f32.mrb[0].mxu0
        %v2775 = vadd.f32 0.0, %v2774
        %v2776 = vpop.f32.mrb[0].mxu0
        %v2777 = vadd.f32 0.0, %v2776
        %2778 = vdwg.mxu0
        %2779 = vmatprep.subr.bf16.mxu0 %v2528
        %2780 = vmatpush1.bf16.msra.mxu0 %v2527
        %2781 = vmatprep.subr.bf16.mxu0 %v2544
        %2782 = vmatpush1.bf16.msra.mxu0 %v2543
        %2783 = vmatprep.subr.bf16.mxu0 0
        %2784 = vmatpush1.bf16.msra.mxu0 0
        %2785 = vmatprep.subr.bf16.mxu0 0
        %2786 = vmatpush1.bf16.msra.mxu0 0
        %2787 = vmatprep.subr.bf16.mxu0 0
        %2788 = vmatpush1.bf16.msra.mxu0 0
        %2789 = vmatprep.subr.bf16.mxu0 0
        %2790 = vmatpush1.bf16.msra.mxu0 0
        %2791 = vmatprep.subr.bf16.mxu0 0
        %2792 = vmatpush1.bf16.msra.mxu0 0
        %2793 = vmatprep.subr.bf16.mxu0 0
        %2794 = vmatpush1.bf16.msra.mxu0 0
        %2795 = vmatprep.subr.bf16.mxu0 0
        %2796 = vmatpush1.bf16.msra.mxu0 0
        %2797 = vmatprep.subr.bf16.mxu0 0
        %2798 = vmatpush1.bf16.msra.mxu0 0
        %2799 = vmatprep.subr.bf16.mxu0 0
        %2800 = vmatpush1.bf16.msra.mxu0 0
        %2801 = vmatprep.subr.bf16.mxu0 0
        %2802 = vmatpush1.bf16.msra.mxu0 0
        %2803 = vmatprep.subr.bf16.mxu0 0
        %2804 = vmatpush1.bf16.msra.mxu0 0
        %2805 = vmatprep.subr.bf16.mxu0 0
        %2806 = vmatpush1.bf16.msra.mxu0 0
        %2807 = vmatprep.subr.bf16.mxu0 0
        %2808 = vmatpush1.bf16.msra.mxu0 0
        %2809 = vmatprep.subr.bf16.mxu0 0
        %2810 = vmatpush1.bf16.msra.mxu0 0
        %2811 = vmatprep.mubr.bf16.mxu0 0
        %2812 = vmatmul.mubr.bf16.gmra.mrb[0].mxu0 %v2562
        %v2813 = vpop.f32.mrb[0].mxu0
        %v2814 = vadd.f32 0.0, %v2813
        %v2815 = vpop.f32.mrb[0].mxu0
        %v2816 = vadd.f32 0.0, %v2815
        %v2817 = vpop.f32.mrb[0].mxu0
        %v2818 = vadd.f32 0.0, %v2817
        %v2819 = vpop.f32.mrb[0].mxu0
        %v2820 = vadd.f32 0.0, %v2819
        %2821 = vmatprep.mubr.bf16.mxu0 0
        %2822 = vmatmul.mubr.bf16.gmra.mrb[0].mxu0 %v2565
        %v2823 = vpop.f32.mrb[0].mxu0
        %v2824 = vadd.f32 0.0, %v2823
        %v2825 = vpop.f32.mrb[0].mxu0
        %v2826 = vadd.f32 0.0, %v2825
        %v2827 = vpop.f32.mrb[0].mxu0
        %v2828 = vadd.f32 0.0, %v2827
        %v2829 = vpop.f32.mrb[0].mxu0
        %v2830 = vadd.f32 0.0, %v2829
        %2831 = vdwg.mxu0
        %2832 = vmatprep.subr.bf16.mxu0 %v2530
        %2833 = vmatpush1.bf16.msra.mxu0 %v2529
        %2834 = vmatprep.subr.bf16.mxu0 %v2546
        %2835 = vmatpush1.bf16.msra.mxu0 %v2545
        %2836 = vmatprep.subr.bf16.mxu0 0
        %2837 = vmatpush1.bf16.msra.mxu0 0
        %2838 = vmatprep.subr.bf16.mxu0 0
        %2839 = vmatpush1.bf16.msra.mxu0 0
        %2840 = vmatprep.subr.bf16.mxu0 0
        %2841 = vmatpush1.bf16.msra.mxu0 0
        %2842 = vmatprep.subr.bf16.mxu0 0
        %2843 = vmatpush1.bf16.msra.mxu0 0
        %2844 = vmatprep.subr.bf16.mxu0 0
        %2845 = vmatpush1.bf16.msra.mxu0 0
        %2846 = vmatprep.subr.bf16.mxu0 0
        %2847 = vmatpush1.bf16.msra.mxu0 0
        %2848 = vmatprep.subr.bf16.mxu0 0
        %2849 = vmatpush1.bf16.msra.mxu0 0
        %2850 = vmatprep.subr.bf16.mxu0 0
        %2851 = vmatpush1.bf16.msra.mxu0 0
        %2852 = vmatprep.subr.bf16.mxu0 0
        %2853 = vmatpush1.bf16.msra.mxu0 0
        %2854 = vmatprep.subr.bf16.mxu0 0
        %2855 = vmatpush1.bf16.msra.mxu0 0
        %2856 = vmatprep.subr.bf16.mxu0 0
        %2857 = vmatpush1.bf16.msra.mxu0 0
        %2858 = vmatprep.subr.bf16.mxu0 0
        %2859 = vmatpush1.bf16.msra.mxu0 0
        %2860 = vmatprep.subr.bf16.mxu0 0
        %2861 = vmatpush1.bf16.msra.mxu0 0
        %2862 = vmatprep.subr.bf16.mxu0 0
        %2863 = vmatpush1.bf16.msra.mxu0 0
        %2864 = vmatprep.mubr.bf16.mxu0 0
        %2865 = vmatmul.mubr.bf16.gmra.mrb[0].mxu0 %v2562
        %v2866 = vpop.f32.mrb[0].mxu0
        %v2867 = vadd.f32 0.0, %v2866
        %v2868 = vpop.f32.mrb[0].mxu0
        %v2869 = vadd.f32 0.0, %v2868
        %v2870 = vpop.f32.mrb[0].mxu0
        %v2871 = vadd.f32 0.0, %v2870
        %v2872 = vpop.f32.mrb[0].mxu0
        %v2873 = vadd.f32 0.0, %v2872
        %2874 = vmatprep.mubr.bf16.mxu0 0
        %2875 = vmatmul.mubr.bf16.gmra.mrb[0].mxu0 %v2565
        %v2876 = vpop.f32.mrb[0].mxu0
        %v2877 = vadd.f32 0.0, %v2876
        %v2878 = vpop.f32.mrb[0].mxu0
        %v2879 = vadd.f32 0.0, %v2878
        %v2880 = vpop.f32.mrb[0].mxu0
        %v2881 = vadd.f32 0.0, %v2880
        %v2882 = vpop.f32.mrb[0].mxu0
        %v2883 = vadd.f32 0.0, %v2882
        %2884 = vdwg.mxu0
        %2885 = vmatprep.subr.bf16.mxu0 %v2532
        %2886 = vmatpush1.bf16.msra.mxu0 %v2531
        %2887 = vmatprep.subr.bf16.mxu0 %v2548
        %2888 = vmatpush1.bf16.msra.mxu0 %v2547
        %2889 = vmatprep.subr.bf16.mxu0 0
        %2890 = vmatpush1.bf16.msra.mxu0 0
        %2891 = vmatprep.subr.bf16.mxu0 0
        %2892 = vmatpush1.bf16.msra.mxu0 0
        %2893 = vmatprep.subr.bf16.mxu0 0
        %2894 = vmatpush1.bf16.msra.mxu0 0
        %2895 = vmatprep.subr.bf16.mxu0 0
        %2896 = vmatpush1.bf16.msra.mxu0 0
        %2897 = vmatprep.subr.bf16.mxu0 0
        %2898 = vmatpush1.bf16.msra.mxu0 0
        %2899 = vmatprep.subr.bf16.mxu0 0
        %2900 = vmatpush1.bf16.msra.mxu0 0
        %2901 = vmatprep.subr.bf16.mxu0 0
        %2902 = vmatpush1.bf16.msra.mxu0 0
        %2903 = vmatprep.subr.bf16.mxu0 0
        %2904 = vmatpush1.bf16.msra.mxu0 0
        %2905 = vmatprep.subr.bf16.mxu0 0
        %2906 = vmatpush1.bf16.msra.mxu0 0
        %2907 = vmatprep.subr.bf16.mxu0 0
        %2908 = vmatpush1.bf16.msra.mxu0 0
        %2909 = vmatprep.subr.bf16.mxu0 0
        %2910 = vmatpush1.bf16.msra.mxu0 0
        %2911 = vmatprep.subr.bf16.mxu0 0
        %2912 = vmatpush1.bf16.msra.mxu0 0
        %2913 = vmatprep.subr.bf16.mxu0 0
        %2914 = vmatpush1.bf16.msra.mxu0 0
        %2915 = vmatprep.subr.bf16.mxu0 0
        %2916 = vmatpush1.bf16.msra.mxu0 0
        %2917 = vmatprep.mubr.bf16.mxu0 0
        %2918 = vmatmul.mubr.bf16.gmra.mrb[0].mxu0 %v2562
        %v2919 = vpop.f32.mrb[0].mxu0
        %v2920 = vadd.f32 0.0, %v2919
        %v2921 = vpop.f32.mrb[0].mxu0
        %v2922 = vadd.f32 0.0, %v2921
        %v2923 = vpop.f32.mrb[0].mxu0
        %v2924 = vadd.f32 0.0, %v2923
        %v2925 = vpop.f32.mrb[0].mxu0
        %v2926 = vadd.f32 0.0, %v2925
        %2927 = vmatprep.mubr.bf16.mxu0 0
        %2928 = vmatmul.mubr.bf16.gmra.mrb[0].mxu0 %v2565
        %v2929 = vpop.f32.mrb[0].mxu0
        %v2930 = vadd.f32 0.0, %v2929
        %v2931 = vpop.f32.mrb[0].mxu0
        %v2932 = vadd.f32 0.0, %v2931
        %v2933 = vpop.f32.mrb[0].mxu0
        %v2934 = vadd.f32 0.0, %v2933
        %v2935 = vpop.f32.mrb[0].mxu0
        %v2936 = vadd.f32 0.0, %v2935
        %2937 = vdwg.mxu0
        %2938 = vmatprep.subr.bf16.mxu0 %v2534
        %2939 = vmatpush1.bf16.msra.mxu0 %v2533
        %2940 = vmatprep.subr.bf16.mxu0 %v2550
        %2941 = vmatpush1.bf16.msra.mxu0 %v2549
        %2942 = vmatprep.subr.bf16.mxu0 0
        %2943 = vmatpush1.bf16.msra.mxu0 0
        %2944 = vmatprep.subr.bf16.mxu0 0
        %2945 = vmatpush1.bf16.msra.mxu0 0
        %2946 = vmatprep.subr.bf16.mxu0 0
        %2947 = vmatpush1.bf16.msra.mxu0 0
        %2948 = vmatprep.subr.bf16.mxu0 0
        %2949 = vmatpush1.bf16.msra.mxu0 0
        %2950 = vmatprep.subr.bf16.mxu0 0
        %2951 = vmatpush1.bf16.msra.mxu0 0
        %2952 = vmatprep.subr.bf16.mxu0 0
        %2953 = vmatpush1.bf16.msra.mxu0 0
        %2954 = vmatprep.subr.bf16.mxu0 0
        %2955 = vmatpush1.bf16.msra.mxu0 0
        %2956 = vmatprep.subr.bf16.mxu0 0
        %2957 = vmatpush1.bf16.msra.mxu0 0
        %2958 = vmatprep.subr.bf16.mxu0 0
        %2959 = vmatpush1.bf16.msra.mxu0 0
        %2960 = vmatprep.subr.bf16.mxu0 0
        %2961 = vmatpush1.bf16.msra.mxu0 0
        %2962 = vmatprep.subr.bf16.mxu0 0
        %2963 = vmatpush1.bf16.msra.mxu0 0
        %2964 = vmatprep.subr.bf16.mxu0 0
        %2965 = vmatpush1.bf16.msra.mxu0 0
        %2966 = vmatprep.subr.bf16.mxu0 0
        %2967 = vmatpush1.bf16.msra.mxu0 0
        %2968 = vmatprep.subr.bf16.mxu0 0
        %2969 = vmatpush1.bf16.msra.mxu0 0
        %2970 = vmatprep.mubr.bf16.mxu0 0
        %2971 = vmatmul.mubr.bf16.gmra.mrb[0].mxu0 %v2562
        %v2972 = vpop.f32.mrb[0].mxu0
        %v2973 = vadd.f32 0.0, %v2972
        %v2974 = vpop.f32.mrb[0].mxu0
        %v2975 = vadd.f32 0.0, %v2974
        %v2976 = vpop.f32.mrb[0].mxu0
        %v2977 = vadd.f32 0.0, %v2976
        %v2978 = vpop.f32.mrb[0].mxu0
        %v2979 = vadd.f32 0.0, %v2978
        %2980 = vmatprep.mubr.bf16.mxu0 0
        %2981 = vmatmul.mubr.bf16.gmra.mrb[0].mxu0 %v2565
        %v2982 = vpop.f32.mrb[0].mxu0
        %v2983 = vadd.f32 0.0, %v2982
        %v2984 = vpop.f32.mrb[0].mxu0
        %v2985 = vadd.f32 0.0, %v2984
        %v2986 = vpop.f32.mrb[0].mxu0
        %v2987 = vadd.f32 0.0, %v2986
        %v2988 = vpop.f32.mrb[0].mxu0
        %v2989 = vadd.f32 0.0, %v2988
        %2990 = vdwg.mxu0
        %v2991 = vadd.f32 %v1282, %v2602
        %v2992 = vadd.f32 %v1284, %v2604
        %v2993 = vadd.f32 %v1343, %v2655
        %v2994 = vadd.f32 %v1345, %v2657
        %v2995 = vadd.f32 %v1404, %v2708
        %v2996 = vadd.f32 %v1406, %v2710
        %v2997 = vadd.f32 %v1465, %v2761
        %v2998 = vadd.f32 %v1467, %v2763
        %v2999 = vadd.f32 %v1526, %v2814
        %v3000 = vadd.f32 %v1528, %v2816
        %v3001 = vadd.f32 %v1587, %v2867
        %v3002 = vadd.f32 %v1589, %v2869
        %v3003 = vadd.f32 %v1648, %v2920
        %v3004 = vadd.f32 %v1650, %v2922
        %v3005 = vadd.f32 %v1709, %v2973
        %v3006 = vadd.f32 %v1711, %v2975
        %v3007 = vadd.f32 %v1288, %v2606
        %v3008 = vadd.f32 %v1290, %v2608
        %v3009 = vadd.f32 %v1349, %v2659
        %v3010 = vadd.f32 %v1351, %v2661
        %v3011 = vadd.f32 %v1410, %v2712
        %v3012 = vadd.f32 %v1412, %v2714
        %v3013 = vadd.f32 %v1471, %v2765
        %v3014 = vadd.f32 %v1473, %v2767
        %v3015 = vadd.f32 %v1532, %v2818
        %v3016 = vadd.f32 %v1534, %v2820
        %v3017 = vadd.f32 %v1593, %v2871
        %v3018 = vadd.f32 %v1595, %v2873
        %v3019 = vadd.f32 %v1654, %v2924
        %v3020 = vadd.f32 %v1656, %v2926
        %v3021 = vadd.f32 %v1715, %v2977
        %v3022 = vadd.f32 %v1717, %v2979
        %v3023 = vadd.f32 %v1292, %v2612
        %v3024 = vadd.f32 %v1294, %v2614
        %v3025 = vadd.f32 %v1353, %v2665
        %v3026 = vadd.f32 %v1355, %v2667
        %v3027 = vadd.f32 %v1414, %v2718
        %v3028 = vadd.f32 %v1416, %v2720
        %v3029 = vadd.f32 %v1475, %v2771
        %v3030 = vadd.f32 %v1477, %v2773
        %v3031 = vadd.f32 %v1536, %v2824
        %v3032 = vadd.f32 %v1538, %v2826
        %v3033 = vadd.f32 %v1597, %v2877
        %v3034 = vadd.f32 %v1599, %v2879
        %v3035 = vadd.f32 %v1658, %v2930
        %v3036 = vadd.f32 %v1660, %v2932
        %v3037 = vadd.f32 %v1719, %v2983
        %v3038 = vadd.f32 %v1721, %v2985
        %v3039 = vadd.f32 %v1298, %v2616
        %v3040 = vadd.f32 %v1300, %v2618
        %v3041 = vadd.f32 %v1359, %v2669
        %v3042 = vadd.f32 %v1361, %v2671
        %v3043 = vadd.f32 %v1420, %v2722
        %v3044 = vadd.f32 %v1422, %v2724
        %v3045 = vadd.f32 %v1481, %v2775
        %v3046 = vadd.f32 %v1483, %v2777
        %v3047 = vadd.f32 %v1542, %v2828
        %v3048 = vadd.f32 %v1544, %v2830
        %v3049 = vadd.f32 %v1603, %v2881
        %v3050 = vadd.f32 %v1605, %v2883
        %v3051 = vadd.f32 %v1664, %v2934
        %v3052 = vadd.f32 %v1666, %v2936
        %v3053 = vadd.f32 %v1725, %v2987
        %v3054 = vadd.f32 %v1727, %v2989
        %v3055 = vmax.f32 %v2991, 0.0
        %v3056 = vmax.f32 %v2992, 0.0
        %v3057 = vmax.f32 %v2993, 0.0
        %v3058 = vmax.f32 %v2994, 0.0
        %v3059 = vmax.f32 %v2995, 0.0
        %v3060 = vmax.f32 %v2996, 0.0
        %v3061 = vmax.f32 %v2997, 0.0
        %v3062 = vmax.f32 %v2998, 0.0
        %v3063 = vmax.f32 %v2999, 0.0
        %v3064 = vmax.f32 %v3000, 0.0
        %v3065 = vmax.f32 %v3001, 0.0
        %v3066 = vmax.f32 %v3002, 0.0
        %v3067 = vmax.f32 %v3003, 0.0
        %v3068 = vmax.f32 %v3004, 0.0
        %v3069 = vmax.f32 %v3005, 0.0
        %v3070 = vmax.f32 %v3006, 0.0
        %v3071 = vmax.f32 %v3007, 0.0
        %v3072 = vmax.f32 %v3008, 0.0
        %v3073 = vmax.f32 %v3009, 0.0
        %v3074 = vmax.f32 %v3010, 0.0
        %v3075 = vmax.f32 %v3011, 0.0
        %v3076 = vmax.f32 %v3012, 0.0
        %v3077 = vmax.f32 %v3013, 0.0
        %v3078 = vmax.f32 %v3014, 0.0
        %v3079 = vmax.f32 %v3015, 0.0
        %v3080 = vmax.f32 %v3016, 0.0
        %v3081 = vmax.f32 %v3017, 0.0
        %v3082 = vmax.f32 %v3018, 0.0
        %v3083 = vmax.f32 %v3019, 0.0
        %v3084 = vmax.f32 %v3020, 0.0
        %v3085 = vmax.f32 %v3021, 0.0
        %v3086 = vmax.f32 %v3022, 0.0
        %v3087 = vmax.f32 %v3023, 0.0
        %v3088 = vmax.f32 %v3024, 0.0
        %v3089 = vmax.f32 %v3025, 0.0
        %v3090 = vmax.f32 %v3026, 0.0
        %v3091 = vmax.f32 %v3027, 0.0
        %v3092 = vmax.f32 %v3028, 0.0
        %v3093 = vmax.f32 %v3029, 0.0
        %v3094 = vmax.f32 %v3030, 0.0
        %v3095 = vmax.f32 %v3031, 0.0
        %v3096 = vmax.f32 %v3032, 0.0
        %v3097 = vmax.f32 %v3033, 0.0
        %v3098 = vmax.f32 %v3034, 0.0
        %v3099 = vmax.f32 %v3035, 0.0
        %v3100 = vmax.f32 %v3036, 0.0
        %v3101 = vmax.f32 %v3037, 0.0
        %v3102 = vmax.f32 %v3038, 0.0
        %v3103 = vmax.f32 %v3039, 0.0
        %v3104 = vmax.f32 %v3040, 0.0
        %v3105 = vmax.f32 %v3041, 0.0
        %v3106 = vmax.f32 %v3042, 0.0
        %v3107 = vmax.f32 %v3043, 0.0
        %v3108 = vmax.f32 %v3044, 0.0
        %v3109 = vmax.f32 %v3045, 0.0
        %v3110 = vmax.f32 %v3046, 0.0
        %v3111 = vmax.f32 %v3047, 0.0
        %v3112 = vmax.f32 %v3048, 0.0
        %v3113 = vmax.f32 %v3049, 0.0
        %v3114 = vmax.f32 %v3050, 0.0
        %v3115 = vmax.f32 %v3051, 0.0
        %v3116 = vmax.f32 %v3052, 0.0
        %v3117 = vmax.f32 %v3053, 0.0
        %v3118 = vmax.f32 %v3054, 0.0
        %v3119 = vpack.c.bf16 %v3071, %v3055
        %v3120 = vpack.c.bf16 %v3072, %v3056
        %v3121 = vpack.c.bf16 %v3073, %v3057
        %v3122 = vpack.c.bf16 %v3074, %v3058
        %v3123 = vpack.c.bf16 %v3075, %v3059
        %v3124 = vpack.c.bf16 %v3076, %v3060
        %v3125 = vpack.c.bf16 %v3077, %v3061
        %v3126 = vpack.c.bf16 %v3078, %v3062
        %v3127 = vpack.c.bf16 %v3079, %v3063
        %v3128 = vpack.c.bf16 %v3080, %v3064
        %v3129 = vpack.c.bf16 %v3081, %v3065
        %v3130 = vpack.c.bf16 %v3082, %v3066
        %v3131 = vpack.c.bf16 %v3083, %v3067
        %v3132 = vpack.c.bf16 %v3084, %v3068
        %v3133 = vpack.c.bf16 %v3085, %v3069
        %v3134 = vpack.c.bf16 %v3086, %v3070
        %v3135 = vpack.c.bf16 %v3103, %v3087
        %v3136 = vpack.c.bf16 %v3104, %v3088
        %v3137 = vpack.c.bf16 %v3105, %v3089
        %v3138 = vpack.c.bf16 %v3106, %v3090
        %v3139 = vpack.c.bf16 %v3107, %v3091
        %v3140 = vpack.c.bf16 %v3108, %v3092
        %v3141 = vpack.c.bf16 %v3109, %v3093
        %v3142 = vpack.c.bf16 %v3110, %v3094
        %v3143 = vpack.c.bf16 %v3111, %v3095
        %v3144 = vpack.c.bf16 %v3112, %v3096
        %v3145 = vpack.c.bf16 %v3113, %v3097
        %v3146 = vpack.c.bf16 %v3114, %v3098
        %v3147 = vpack.c.bf16 %v3115, %v3099
        %v3148 = vpack.c.bf16 %v3116, %v3100
        %v3149 = vpack.c.bf16 %v3117, %v3101
        %v3150 = vpack.c.bf16 %v3118, %v3102
        %v3183 = vunpack.c.l.b16 %v3119
        %v3184 = vunpack.c.l.b16 %v3120
        %v3185 = vunpack.c.l.b16 %v3121
        %v3186 = vunpack.c.l.b16 %v3122
        %v3187 = vunpack.c.l.b16 %v3123
        %v3188 = vunpack.c.l.b16 %v3124
        %v3189 = vunpack.c.l.b16 %v3125
        %v3190 = vunpack.c.l.b16 %v3126
        %v3191 = vunpack.c.l.b16 %v3127
        %v3192 = vunpack.c.l.b16 %v3128
        %v3193 = vunpack.c.l.b16 %v3129
        %v3194 = vunpack.c.l.b16 %v3130
        %v3195 = vunpack.c.l.b16 %v3131
        %v3196 = vunpack.c.l.b16 %v3132
        %v3197 = vunpack.c.l.b16 %v3133
        %v3198 = vunpack.c.l.b16 %v3134
        %v3199 = vunpack.c.h.b16 %v3119
        %v3200 = vunpack.c.h.b16 %v3120
        %v3201 = vunpack.c.h.b16 %v3121
        %v3202 = vunpack.c.h.b16 %v3122
        %v3203 = vunpack.c.h.b16 %v3123
        %v3204 = vunpack.c.h.b16 %v3124
        %v3205 = vunpack.c.h.b16 %v3125
        %v3206 = vunpack.c.h.b16 %v3126
        %v3207 = vunpack.c.h.b16 %v3127
        %v3208 = vunpack.c.h.b16 %v3128
        %v3209 = vunpack.c.h.b16 %v3129
        %v3210 = vunpack.c.h.b16 %v3130
        %v3211 = vunpack.c.h.b16 %v3131
        %v3212 = vunpack.c.h.b16 %v3132
        %v3213 = vunpack.c.h.b16 %v3133
        %v3214 = vunpack.c.h.b16 %v3134
        %v3215 = vunpack.c.l.b16 %v3135
        %v3216 = vunpack.c.l.b16 %v3136
        %v3217 = vunpack.c.l.b16 %v3137
        %v3218 = vunpack.c.l.b16 %v3138
        %v3219 = vunpack.c.l.b16 %v3139
        %v3220 = vunpack.c.l.b16 %v3140
        %v3221 = vunpack.c.l.b16 %v3141
        %v3222 = vunpack.c.l.b16 %v3142
        %v3223 = vunpack.c.l.b16 %v3143
        %v3224 = vunpack.c.l.b16 %v3144
        %v3225 = vunpack.c.l.b16 %v3145
        %v3226 = vunpack.c.l.b16 %v3146
        %v3227 = vunpack.c.l.b16 %v3147
        %v3228 = vunpack.c.l.b16 %v3148
        %v3229 = vunpack.c.l.b16 %v3149
        %v3230 = vunpack.c.l.b16 %v3150
        %v3231 = vunpack.c.h.b16 %v3135
        %v3232 = vunpack.c.h.b16 %v3136
        %v3233 = vunpack.c.h.b16 %v3137
        %v3234 = vunpack.c.h.b16 %v3138
        %v3235 = vunpack.c.h.b16 %v3139
        %v3236 = vunpack.c.h.b16 %v3140
        %v3237 = vunpack.c.h.b16 %v3141
        %v3238 = vunpack.c.h.b16 %v3142
        %v3239 = vunpack.c.h.b16 %v3143
        %v3240 = vunpack.c.h.b16 %v3144
        %v3241 = vunpack.c.h.b16 %v3145
        %v3242 = vunpack.c.h.b16 %v3146
        %v3243 = vunpack.c.h.b16 %v3147
        %v3244 = vunpack.c.h.b16 %v3148
        %v3245 = vunpack.c.h.b16 %v3149
        %v3246 = vunpack.c.h.b16 %v3150
        %v3247 = vpack.c.b16 %v3184, %v3183
        %v3248 = vpack.c.b16 %v3186, %v3185
        %v3249 = vpack.c.b16 %v3188, %v3187
        %v3250 = vpack.c.b16 %v3190, %v3189
        %v3251 = vpack.c.b16 %v3192, %v3191
        %v3252 = vpack.c.b16 %v3194, %v3193
        %v3253 = vpack.c.b16 %v3196, %v3195
        %v3254 = vpack.c.b16 %v3198, %v3197
        %v3255 = vpack.c.b16 %v3200, %v3199
        %v3256 = vpack.c.b16 %v3202, %v3201
        %v3257 = vpack.c.b16 %v3204, %v3203
        %v3258 = vpack.c.b16 %v3206, %v3205
        %v3259 = vpack.c.b16 %v3208, %v3207
        %v3260 = vpack.c.b16 %v3210, %v3209
        %v3261 = vpack.c.b16 %v3212, %v3211
        %v3262 = vpack.c.b16 %v3214, %v3213
        %v3263 = vpack.c.b16 %v3216, %v3215
        %v3264 = vpack.c.b16 %v3218, %v3217
        %v3265 = vpack.c.b16 %v3220, %v3219
        %v3266 = vpack.c.b16 %v3222, %v3221
        %v3267 = vpack.c.b16 %v3224, %v3223
        %v3268 = vpack.c.b16 %v3226, %v3225
        %v3269 = vpack.c.b16 %v3228, %v3227
        %v3270 = vpack.c.b16 %v3230, %v3229
        %v3271 = vpack.c.b16 %v3232, %v3231
        %v3272 = vpack.c.b16 %v3234, %v3233
        %v3273 = vpack.c.b16 %v3236, %v3235
        %v3274 = vpack.c.b16 %v3238, %v3237
        %v3275 = vpack.c.b16 %v3240, %v3239
        %v3276 = vpack.c.b16 %v3242, %v3241
        %v3277 = vpack.c.b16 %v3244, %v3243
        %v3278 = vpack.c.b16 %v3246, %v3245
        %3311 = vst [vmem:[%s331] sm:$0xff] %v3247
        %3312 = vst [vmem:[%s331 + $0x8] sm:$0xff] %v3248
        %3313 = vst [vmem:[%s331 + $0x10] sm:$0xff] %v3249
        %3314 = vst [vmem:[%s331 + $0x18] sm:$0xff] %v3250
        %3315 = vst [vmem:[%s331 + $0x20] sm:$0xff] %v3251
        %3316 = vst [vmem:[%s331 + $0x28] sm:$0xff] %v3252
        %3317 = vst [vmem:[%s331 + $0x30] sm:$0xff] %v3253
        %3318 = vst [vmem:[%s331 + $0x38] sm:$0xff] %v3254
        %3319 = vst [vmem:[%s331 + $0x40] sm:$0xff] %v3255
        %3320 = vst [vmem:[%s331 + $0x48] sm:$0xff] %v3256
        %3321 = vst [vmem:[%s331 + $0x50] sm:$0xff] %v3257
        %3322 = vst [vmem:[%s331 + $0x58] sm:$0xff] %v3258
        %3323 = vst [vmem:[%s331 + $0x60] sm:$0xff] %v3259
        %3324 = vst [vmem:[%s331 + $0x68] sm:$0xff] %v3260
        %3325 = vst [vmem:[%s331 + $0x70] sm:$0xff] %v3261
        %3326 = vst [vmem:[%s331 + $0x78] sm:$0xff] %v3262
        %3327 = vst [vmem:[%s331 + $0x80] sm:$0xff] %v3263
        %3328 = vst [vmem:[%s331 + $0x88] sm:$0xff] %v3264
        %3329 = vst [vmem:[%s331 + $0x90] sm:$0xff] %v3265
        %3330 = vst [vmem:[%s331 + $0x98] sm:$0xff] %v3266
        %3331 = vst [vmem:[%s331 + $0xa0] sm:$0xff] %v3267
        %3332 = vst [vmem:[%s331 + $0xa8] sm:$0xff] %v3268
        %3333 = vst [vmem:[%s331 + $0xb0] sm:$0xff] %v3269
        %3334 = vst [vmem:[%s331 + $0xb8] sm:$0xff] %v3270
        %3335 = vst [vmem:[%s331 + $0xc0] sm:$0xff] %v3271
        %3336 = vst [vmem:[%s331 + $0xc8] sm:$0xff] %v3272
        %3337 = vst [vmem:[%s331 + $0xd0] sm:$0xff] %v3273
        %3338 = vst [vmem:[%s331 + $0xd8] sm:$0xff] %v3274
        %3339 = vst [vmem:[%s331 + $0xe0] sm:$0xff] %v3275
        %3340 = vst [vmem:[%s331 + $0xe8] sm:$0xff] %v3276
        %3341 = vst [vmem:[%s331 + $0xf0] sm:$0xff] %v3277
        %3342 = vst [vmem:[%s331 + $0xf8] sm:$0xff] %v3278
        %s3343 = sand.u32 %s188, 1
        %s3344 = scalar_lea.sflag [#allocation4], %s3343
        %s3345 = sand.u32 %s188, 1
        %s3346 = smul.addr %s3345, 256
        %s3347 = scalar_lea.vmem [#allocation7], %s3346
        // Predicated region
        $region53: #{tpu_custom_call.1} parent=43 // pred_check
          %p3348 = pneg %p198
        $region54: #{tpu_custom_call.1} parent=43 // pred_check_branch
          %3350 = sbr.rel (%p3348) target = $region56
        $region55: #{tpu_custom_call.1} parent=43 // pred_region
          %s3351 = smul.u32 16, %s31
          %s3353 = ssub.s32 4096, 4096
          %3354 = vsyncadd %s3344, %s3353
          %s3355 = smul.addr %s30, 64
          %s3356 = sadd.s32 %s3351, %s3355
          %s3357 = smul.addr %s3356, 64
          %s3358 = scalar_lea.hbm %s6, %s3357
          %s3359 = sshll.u32 %s3347, 4
          %s3360 = int_to_ptr.vmem [resolvable:$true] %s3359
          %3365 = dma.vmem_to_hbm [thread:$0]  %s3360, 4096, %s3358, %s3344, 1024, 1024, 64
        $region56: #{tpu_custom_call.1} parent=43 // pred_fallthru
          _
      $region44: #{tpu_custom_call.1} parent=5 // pred_fallthru
        _
      %p3366 = scmp.le.s32.totalorder 2, %s21
      // Predicated region
      $region57: #{tpu_custom_call.1} parent=5 // pred_check
        %p3367 = pneg %p3366
      $region58: #{tpu_custom_call.1} parent=5 // pred_check_branch
        %3369 = sbr.rel (%p3367) target = $region60
      $region59: #{tpu_custom_call.1} parent=5 // pred_region
        %s3370 = ssub.s32 %s21, 2
        // Predicated region
        $region61: #{tpu_custom_call.1} parent=59 // pred_check
          %p3371 = pneg %p204
        $region62: #{tpu_custom_call.1} parent=59 // pred_check_branch
          %3373 = sbr.rel (%p3371) target = $region64
        $region63: #{tpu_custom_call.1} parent=59 // pred_region
          %s3374 = sand.u32 %s189, 1
          %s3375 = scalar_lea.sflag [#allocation4], %s3374
          %s3376 = sand.u32 %s189, 1
          %s3377 = smul.addr %s3376, 256
          %s3378 = scalar_lea.vmem [#allocation7], %s3377
          %3379 = dma.done %s3375, 4096
        $region64: #{tpu_custom_call.1} parent=59 // pred_fallthru
          _
      $region60: #{tpu_custom_call.1} parent=5 // pred_fallthru
        _
    $region6: #{tpu_custom_call.1} parent=1 // loop_footer
      %s25 = sadd.s32 1, %s21
    $region7: #{tpu_custom_call.1} parent=1 // loop_footer_branch
      %20 = sbr.rel target = $region3
    $region8: #{tpu_custom_call.1} parent=1 // loop_exit
      _
    %3380 = vsyncpa [#allocation3], 1
    %s3381 = scalar_lea.sflag [#allocation3], 1
    %3382 = vsyncpa %s3381, 1
    %3383 = vsyncpa [#allocation6], 1
    %s3384 = scalar_lea.sflag [#allocation6], 1
    %3385 = vsyncpa %s3384, 1
    %3386 = vsyncpa [#allocation4], 1
    %s3387 = scalar_lea.sflag [#allocation4], 1
    %3388 = vsyncpa %s3387, 1

</llo_original>
